<compile_context>
chip_gen: v6e
topology: v6e:2x2x1
jax: 0.10.0
libtpu: 0.0.40
codegen_flags: <defaults>
</compile_context>

<pallas_src>
import functools

import jax
import jax.numpy as jnp
from jax import lax
from jax.experimental import pallas as pl
from jax.experimental.pallas import tpu as pltpu


# ------------------------------ fused kernel ------------------------------- #

def _dqn_fused_kernel(
        obs_ref, phase_ref, cols_ref,
        obs_w_ref, obs_b_ref,
        w_ih_ref, b_ih_ref, w_hh_ref, b_hh_ref,
        conv_w_ref, conv_b_ref, fc_w_ref, fc_b_ref,
        phase_w_ref, phase_b_ref,
        hid_wr_ref, hid_wm_ref, hid_wp_ref, hid_b_ref,
        out_w_ref, out_b_ref,
        out_ref,
        *, batch, seq_len, hidden, conv_cout):
    dot = functools.partial(jnp.dot, preferred_element_type=jnp.float32)

    # ---- obs MLP + GRU input-gate pre-activations (batched over all steps) ----
    # obs_ref rows are time-major: row t*batch + b.
    obs_emb = jnp.maximum(dot(obs_ref[...], obs_w_ref[...]) + obs_b_ref[...], 0.0)
    b_ih = b_ih_ref[...]                               # hoisted bias load
    xr = dot(obs_emb, w_ih_ref[0]) + b_ih[0:1, :]      # [seq*B, H]
    xz = dot(obs_emb, w_ih_ref[1]) + b_ih[1:2, :]
    xn = dot(obs_emb, w_ih_ref[2]) + b_ih[2:3, :]

    # ---- GRU recurrence: statically unrolled, per-gate [H,H] weights ----------
    w_hr = w_hh_ref[0]
    w_hz = w_hh_ref[1]
    w_hn = w_hh_ref[2]
    b_hh = b_hh_ref[...]
    b_hr, b_hz, b_hn = b_hh[0:1, :], b_hh[1:2, :], b_hh[2:3, :]
    h = jnp.zeros((batch, hidden), jnp.float32)
    for t in range(seq_len):                           # static unroll
        lo = t * batch                                 # contiguous sublane rows
        r = jax.nn.sigmoid(xr[lo:lo + batch, :] + dot(h, w_hr) + b_hr)
        z = jax.nn.sigmoid(xz[lo:lo + batch, :] + dot(h, w_hz) + b_hz)
        n = jnp.tanh(xn[lo:lo + batch, :] + r * (dot(h, w_hn) + b_hn))
        h = (1.0 - z) * n + z * h
    obs_rnn = h                                        # [B, H]

    # ---- phase MLP -------------------------------------------------------------
    phase_emb = jnp.maximum(
        dot(phase_ref[...], phase_w_ref[...]) + phase_b_ref[...], 0.0)

    # ---- CNNBase: 3x3 conv as matmul over patch columns + ReLU, then FC + ReLU --
    conv_w = conv_w_ref[...]                           # [Cout, C*9]
    conv_b = conv_b_ref[...]                           # [Cout, 1]
    conv_outs = [
        jnp.maximum(dot(conv_w, cols_ref[b]) + conv_b, 0.0)       # [Cout, H*W]
        for b in range(batch)
    ]
    # flatten(NCHW) @ W_fc expressed as a sum of per-output-channel matmuls so no
    # in-kernel reshape/relayout is needed (fc_w_ref is [Cout, H*W, hidden]).
    map_pre = jnp.zeros((batch, hidden), jnp.float32)
    for c in range(conv_cout):
        rows = jnp.concatenate([co[c:c + 1, :] for co in conv_outs], axis=0)  # [B, HW]
        map_pre = map_pre + dot(rows, fc_w_ref[c])
    map_emb = jnp.maximum(map_pre + fc_b_ref[...], 0.0)

    # ---- concat + hidden MLP + output head --------------------------------------
    # concat([obs_rnn, map_emb, phase_emb]) @ W_hid done as three block matmuls.
    hid_pre = (dot(obs_rnn, hid_wr_ref[...]) + dot(map_emb, hid_wm_ref[...])
               + dot(phase_emb, hid_wp_ref[...]) + hid_b_ref[...])
    hidden_state = jnp.maximum(hid_pre, 0.0)
    # Single narrow (action_space-wide) masked store at the very end.
    out_ref[...] = dot(hidden_state, out_w_ref[...]) + out_b_ref[...]


# ------------------------------- parameters -------------------------------- #

def init_params(key, hidden_size, obs_length, phase_shape, map_shape,
                action_space, conv_channels=8):
    """Parameters are created directly in the kernel layout.

    Mapping from PyTorch layout (apply ONCE at checkpoint load if porting weights):
      obs_w      = torch.obs_input.weight.T               ; obs_b   = bias[None]
      phase_w    = torch.phase_input.weight.T             ; phase_b = bias[None]
      conv_w     = torch.conv.weight.reshape(Cout, C*9)   ; conv_b  = bias[:, None]
      map_fc_w   = torch.map_fc.weight.T.reshape(Cout, H*W, hidden)  (NCHW flatten)
      w_ih[g]    = torch.GRU.weight_ih_l0[g*H:(g+1)*H].T  (g in r,z,n); b_ih[g] likewise
      w_hh[g]    = torch.GRU.weight_hh_l0[g*H:(g+1)*H].T  ; b_hh[g] likewise
      hid_w_rnn / hid_w_map / hid_w_phase = column blocks [0:H / H:2H / 2H:] of
                   torch.hidden.weight, each transposed   ; hid_b = bias[None]
      out_w      = torch.out.weight.T                     ; out_b  = bias[None]
    """
    C, Hm, Wm = map_shape
    HW = Hm * Wm
    ks = iter(jax.random.split(key, 18))

    def uni(shape, fan_in):
        lim = 1.0 / (fan_in ** 0.5)
        return jax.random.uniform(next(ks), shape, jnp.float32, -lim, lim)

    p = {}
    # TODO(synk): MLP / CNNBase class definitions were not provided with the
    # module; shapes below follow the assumptions documented at the top.
    p["obs_w"] = uni((obs_length, hidden_size), obs_length)
    p["obs_b"] = uni((1, hidden_size), obs_length)
    p["phase_w"] = uni((phase_shape, phase_shape), phase_shape)
    p["phase_b"] = uni((1, phase_shape), phase_shape)
    p["conv_w"] = uni((conv_channels, C * 9), C * 9)
    p["conv_b"] = uni((conv_channels, 1), C * 9)
    p["map_fc_w"] = uni((conv_channels, HW, hidden_size), conv_channels * HW)
    p["map_fc_b"] = uni((1, hidden_size), conv_channels * HW)
    p["w_ih"] = uni((3, hidden_size, hidden_size), hidden_size)   # gate order r,z,n
    p["b_ih"] = uni((3, hidden_size), hidden_size)
    p["w_hh"] = uni((3, hidden_size, hidden_size), hidden_size)
    p["b_hh"] = uni((3, hidden_size), hidden_size)
    fan = 2 * hidden_size + phase_shape
    p["hid_w_rnn"] = uni((hidden_size, hidden_size), fan)
    p["hid_w_map"] = uni((hidden_size, hidden_size), fan)
    p["hid_w_phase"] = uni((phase_shape, hidden_size), fan)
    p["hid_b"] = uni((1, hidden_size), fan)
    p["out_w"] = uni((hidden_size, action_space), hidden_size)
    p["out_b"] = uni((1, action_space), hidden_size)
    return p


# --------------------------------- forward --------------------------------- #

def dqn_seq_net_forward(params, obs, phase, obs_map, edges=None, edges_feature=None):
    """obs: [B, seq, obs_len], phase: [B, P], obs_map: NCHW [B, C, H, W]."""
    del edges, edges_feature  # unused by the PyTorch forward
    B, seq_len, obs_len = obs.shape
    _, C, Hm, Wm = obs_map.shape
    H = params["obs_b"].shape[1]
    Cout = params["conv_b"].shape[0]
    A = params["out_b"].shape[1]

    obs = obs.astype(jnp.float32)
    phase = phase.astype(jnp.float32)
    obs_map = obs_map.astype(jnp.float32)

    # Time-major rows (row t*B + b) so each GRU step consumes a contiguous
    # sublane block.  Tiny (B*seq*obs_len floats).
    obs_tm = jnp.transpose(obs, (1, 0, 2)).reshape(seq_len * B, obs_len)

    # 3x3 same-padding patch tensor [B, C*9, H*W], patch index k = c*9 + kh*3 + kw
    # (matches conv_w = weight.reshape(Cout, C*9)).  Pad + 9 slices + stack only.
    # TODO(synk): patch extraction stays in XLA; doing it in-kernel would need a
    # sublane<->lane relayout that costs more than it saves at this size.
    xp = jnp.pad(obs_map, ((0, 0), (0, 0), (1, 1), (1, 1)))
    patches = [xp[:, :, i:i + Hm, j:j + Wm] for i in range(3) for j in range(3)]
    cols = jnp.stack(patches, axis=2).reshape(B, C * 9, Hm * Wm)

    kernel = functools.partial(_dqn_fused_kernel, batch=B, seq_len=seq_len,
                               hidden=H, conv_cout=Cout)
    vmem = pl.BlockSpec(memory_space=pltpu.MemorySpace.VMEM)
    args = (obs_tm, phase, cols,
            params["obs_w"], params["obs_b"],
            params["w_ih"], params["b_ih"], params["w_hh"], params["b_hh"],
            params["conv_w"], params["conv_b"],
            params["map_fc_w"], params["map_fc_b"],
            params["phase_w"], params["phase_b"],
            params["hid_w_rnn"], params["hid_w_map"], params["hid_w_phase"],
            params["hid_b"],
            params["out_w"], params["out_b"])
    out = pl.pallas_call(
        kernel,
        out_shape=jax.ShapeDtypeStruct((B, A), jnp.float32),
        in_specs=[vmem] * len(args),
        out_specs=vmem,
    )(*args)
    return out, None


# --------------------------- pure-JAX reference ----------------------------- #

def _reference_forward(params, obs, phase, obs_map):
    B, S, L = obs.shape
    H = params["obs_b"].shape[1]
    Cout = params["conv_b"].shape[0]
    C = obs_map.shape[1]

    obs_emb = jax.nn.relu(obs.reshape(B * S, L) @ params["obs_w"]
                          + params["obs_b"]).reshape(B, S, H)
    h = jnp.zeros((B, H), jnp.float32)
    for t in range(S):
        x = obs_emb[:, t]
        r = jax.nn.sigmoid(x @ params["w_ih"][0] + params["b_ih"][0]
                           + h @ params["w_hh"][0] + params["b_hh"][0])
        z = jax.nn.sigmoid(x @ params["w_ih"][1] + params["b_ih"][1]
                           + h @ params["w_hh"][1] + params["b_hh"][1])
        n = jnp.tanh(x @ params["w_ih"][2] + params["b_ih"][2]
                     + r * (h @ params["w_hh"][2] + params["b_hh"][2]))
        h = (1.0 - z) * n + z * h

    phase_emb = jax.nn.relu(phase @ params["phase_w"] + params["phase_b"])

    w4 = params["conv_w"].reshape(Cout, C, 3, 3)
    conv = lax.conv_general_dilated(obs_map, w4, (1, 1), ((1, 1), (1, 1)),
                                    dimension_numbers=("NCHW", "OIHW", "NCHW"))
    conv = jax.nn.relu(conv + params["conv_b"].reshape(1, Cout, 1, 1))
    Bm, _, Hm, Wm = conv.shape
    flat = conv.reshape(Bm, Cout * Hm * Wm)                 # NCHW flatten
    fc_w = params["map_fc_w"].reshape(Cout * Hm * Wm, -1)
    map_emb = jax.nn.relu(flat @ fc_w + params["map_fc_b"])

    hid = jax.nn.relu(h @ params["hid_w_rnn"] + map_emb @ params["hid_w_map"]
                      + phase_emb @ params["hid_w_phase"] + params["hid_b"])
    return hid @ params["out_w"] + params["out_b"]


if __name__ == "__main__":
    hidden_size, obs_length, phase_shape = 32, 16, 8
    map_shape = (4, 8, 16)        # (C, H, W) for obs_map
    action_space = 4
    batch, seq_len = 2, 8

    key = jax.random.PRNGKey(0)
    kp, ko, kph, km = jax.random.split(key, 4)
    params = init_params(kp, hidden_size, obs_length, phase_shape,
                         map_shape, action_space)

    obs = jax.random.normal(ko, (batch, seq_len, obs_length), jnp.float32)
    phase = jax.random.normal(kph, (batch, phase_shape), jnp.float32)
    obs_map = jax.random.normal(km, (batch,) + map_shape, jnp.float32)

    out, _ = jax.jit(dqn_seq_net_forward)(params, obs, phase, obs_map)
    out = jax.block_until_ready(out)
    assert out.shape == (batch, action_space) and out.dtype == jnp.float32

    ref = _reference_forward(params, obs, phase, obs_map)
    assert jnp.allclose(out, ref, rtol=2e-2, atol=2e-2), (
        "max abs diff vs reference: %f" % float(jnp.max(jnp.abs(out - ref))))
    print("KERNEL_OK")
</pallas_src>

<mosaic_0001>
module attributes {stable_mosaic.version = 11 : i64} {
  func.func @_dqn_fused_kernel(%arg0: memref<16x16xf32, #tpu.memory_space<vmem>>, %arg1: memref<2x8xf32, #tpu.memory_space<vmem>>, %arg2: memref<2x36x128xf32, #tpu.memory_space<vmem>>, %arg3: memref<16x32xf32, #tpu.memory_space<vmem>>, %arg4: memref<1x32xf32, #tpu.memory_space<vmem>>, %arg5: memref<3x32x32xf32, #tpu.memory_space<vmem>>, %arg6: memref<3x32xf32, #tpu.memory_space<vmem>>, %arg7: memref<3x32x32xf32, #tpu.memory_space<vmem>>, %arg8: memref<3x32xf32, #tpu.memory_space<vmem>>, %arg9: memref<8x36xf32, #tpu.memory_space<vmem>>, %arg10: memref<8x1xf32, #tpu.memory_space<vmem>>, %arg11: memref<8x128x32xf32, #tpu.memory_space<vmem>>, %arg12: memref<1x32xf32, #tpu.memory_space<vmem>>, %arg13: memref<8x8xf32, #tpu.memory_space<vmem>>, %arg14: memref<1x8xf32, #tpu.memory_space<vmem>>, %arg15: memref<32x32xf32, #tpu.memory_space<vmem>>, %arg16: memref<32x32xf32, #tpu.memory_space<vmem>>, %arg17: memref<8x32xf32, #tpu.memory_space<vmem>>, %arg18: memref<1x32xf32, #tpu.memory_space<vmem>>, %arg19: memref<32x4xf32, #tpu.memory_space<vmem>>, %arg20: memref<1x4xf32, #tpu.memory_space<vmem>>, %arg21: memref<2x4xf32, #tpu.memory_space<vmem>>) attributes {dimension_semantics = [], scalar_prefetch = 0 : i64, scratch_operands = 0 : i64, tpu.core_type = #tpu.core_type<tc>} {
    %c0 = arith.constant 0 : index
    %c0_0 = arith.constant 0 : index
    %0 = vector.load %arg0[%c0, %c0_0] : memref<16x16xf32, #tpu.memory_space<vmem>>, vector<16x16xf32>
    %c0_1 = arith.constant 0 : index
    %c0_2 = arith.constant 0 : index
    %1 = vector.load %arg3[%c0_1, %c0_2] : memref<16x32xf32, #tpu.memory_space<vmem>>, vector<16x32xf32>
    %cst = arith.constant dense<0.000000e+00> : vector<16x32xf32>
    %2 = tpu.matmul %0, %1, %cst {dimension_numbers = #tpu.dot_dimension_numbers<[1], [0], [0], [1], [0, 0, 1, 1], [], []>} : vector<16x16xf32>, vector<16x32xf32>, vector<16x32xf32> -> vector<16x32xf32>
    %c0_3 = arith.constant 0 : index
    %c0_4 = arith.constant 0 : index
    %3 = vector.load %arg4[%c0_3, %c0_4] : memref<1x32xf32, #tpu.memory_space<vmem>>, vector<1x32xf32>
    %4 = vector.broadcast %3 : vector<1x32xf32> to vector<16x32xf32>
    %5 = arith.addf %2, %4 : vector<16x32xf32>
    %cst_5 = arith.constant 0.000000e+00 : f32
    %6 = vector.broadcast %cst_5 : f32 to vector<16x32xf32>
    %7 = arith.maximumf %5, %6 : vector<16x32xf32>
    %c0_6 = arith.constant 0 : index
    %c0_7 = arith.constant 0 : index
    %8 = vector.load %arg6[%c0_6, %c0_7] : memref<3x32xf32, #tpu.memory_space<vmem>>, vector<3x32xf32>
    %c0_8 = arith.constant 0 : index
    %c0_9 = arith.constant 0 : index
    %c0_10 = arith.constant 0 : index
    %9 = vector.load %arg5[%c0_8, %c0_9, %c0_10] : memref<3x32x32xf32, #tpu.memory_space<vmem>>, vector<1x32x32xf32>
    %10 = vector.shape_cast %9 : vector<1x32x32xf32> to vector<32x32xf32>
    %cst_11 = arith.constant dense<0.000000e+00> : vector<16x32xf32>
    %11 = tpu.matmul %7, %10, %cst_11 {dimension_numbers = #tpu.dot_dimension_numbers<[1], [0], [0], [1], [0, 0, 1, 1], [], []>} : vector<16x32xf32>, vector<32x32xf32>, vector<16x32xf32> -> vector<16x32xf32>
    %12 = vector.extract_strided_slice %8 {offsets = [0, 0], sizes = [1, 32], strides = [1, 1]} : vector<3x32xf32> to vector<1x32xf32>
    %13 = vector.broadcast %12 : vector<1x32xf32> to vector<16x32xf32>
    %14 = arith.addf %11, %13 : vector<16x32xf32>
    %c1 = arith.constant 1 : index
    %c0_12 = arith.constant 0 : index
    %c0_13 = arith.constant 0 : index
    %15 = vector.load %arg5[%c1, %c0_12, %c0_13] : memref<3x32x32xf32, #tpu.memory_space<vmem>>, vector<1x32x32xf32>
    %16 = vector.shape_cast %15 : vector<1x32x32xf32> to vector<32x32xf32>
    %cst_14 = arith.constant dense<0.000000e+00> : vector<16x32xf32>
    %17 = tpu.matmul %7, %16, %cst_14 {dimension_numbers = #tpu.dot_dimension_numbers<[1], [0], [0], [1], [0, 0, 1, 1], [], []>} : vector<16x32xf32>, vector<32x32xf32>, vector<16x32xf32> -> vector<16x32xf32>
    %18 = vector.extract_strided_slice %8 {offsets = [1, 0], sizes = [1, 32], strides = [1, 1]} : vector<3x32xf32> to vector<1x32xf32>
    %19 = vector.broadcast %18 : vector<1x32xf32> to vector<16x32xf32>
    %20 = arith.addf %17, %19 : vector<16x32xf32>
    %c2 = arith.constant 2 : index
    %c0_15 = arith.constant 0 : index
    %c0_16 = arith.constant 0 : index
    %21 = vector.load %arg5[%c2, %c0_15, %c0_16] : memref<3x32x32xf32, #tpu.memory_space<vmem>>, vector<1x32x32xf32>
    %22 = vector.shape_cast %21 : vector<1x32x32xf32> to vector<32x32xf32>
    %cst_17 = arith.constant dense<0.000000e+00> : vector<16x32xf32>
    %23 = tpu.matmul %7, %22, %cst_17 {dimension_numbers = #tpu.dot_dimension_numbers<[1], [0], [0], [1], [0, 0, 1, 1], [], []>} : vector<16x32xf32>, vector<32x32xf32>, vector<16x32xf32> -> vector<16x32xf32>
    %24 = vector.extract_strided_slice %8 {offsets = [2, 0], sizes = [1, 32], strides = [1, 1]} : vector<3x32xf32> to vector<1x32xf32>
    %25 = vector.broadcast %24 : vector<1x32xf32> to vector<16x32xf32>
    %26 = arith.addf %23, %25 : vector<16x32xf32>
    %c0_18 = arith.constant 0 : index
    %c0_19 = arith.constant 0 : index
    %c0_20 = arith.constant 0 : index
    %27 = vector.load %arg7[%c0_18, %c0_19, %c0_20] : memref<3x32x32xf32, #tpu.memory_space<vmem>>, vector<1x32x32xf32>
    %28 = vector.shape_cast %27 : vector<1x32x32xf32> to vector<32x32xf32>
    %c1_21 = arith.constant 1 : index
    %c0_22 = arith.constant 0 : index
    %c0_23 = arith.constant 0 : index
    %29 = vector.load %arg7[%c1_21, %c0_22, %c0_23] : memref<3x32x32xf32, #tpu.memory_space<vmem>>, vector<1x32x32xf32>
    %30 = vector.shape_cast %29 : vector<1x32x32xf32> to vector<32x32xf32>
    %c2_24 = arith.constant 2 : index
    %c0_25 = arith.constant 0 : index
    %c0_26 = arith.constant 0 : index
    %31 = vector.load %arg7[%c2_24, %c0_25, %c0_26] : memref<3x32x32xf32, #tpu.memory_space<vmem>>, vector<1x32x32xf32>
    %32 = vector.shape_cast %31 : vector<1x32x32xf32> to vector<32x32xf32>
    %c0_27 = arith.constant 0 : index
    %c0_28 = arith.constant 0 : index
    %33 = vector.load %arg8[%c0_27, %c0_28] : memref<3x32xf32, #tpu.memory_space<vmem>>, vector<3x32xf32>
    %34 = vector.extract_strided_slice %33 {offsets = [0, 0], sizes = [1, 32], strides = [1, 1]} : vector<3x32xf32> to vector<1x32xf32>
    %35 = vector.extract_strided_slice %33 {offsets = [1, 0], sizes = [1, 32], strides = [1, 1]} : vector<3x32xf32> to vector<1x32xf32>
    %36 = vector.extract_strided_slice %33 {offsets = [2, 0], sizes = [1, 32], strides = [1, 1]} : vector<3x32xf32> to vector<1x32xf32>
    %cst_29 = arith.constant 0.000000e+00 : f32
    %37 = vector.broadcast %cst_29 : f32 to vector<2x32xf32>
    %38 = vector.extract_strided_slice %14 {offsets = [0, 0], sizes = [2, 32], strides = [1, 1]} : vector<16x32xf32> to vector<2x32xf32>
    %cst_30 = arith.constant dense<0.000000e+00> : vector<2x32xf32>
    %39 = tpu.matmul %37, %28, %cst_30 {dimension_numbers = #tpu.dot_dimension_numbers<[1], [0], [0], [1], [0, 0, 1, 1], [], []>} : vector<2x32xf32>, vector<32x32xf32>, vector<2x32xf32> -> vector<2x32xf32>
    %40 = arith.addf %38, %39 : vector<2x32xf32>
    %41 = vector.broadcast %34 : vector<1x32xf32> to vector<2x32xf32>
    %42 = arith.addf %40, %41 : vector<2x32xf32>
    %43 = arith.negf %42 : vector<2x32xf32>
    %44 = math.exp %43 : vector<2x32xf32>
    %cst_31 = arith.constant 1.000000e+00 : f32
    %45 = vector.broadcast %cst_31 : f32 to vector<2x32xf32>
    %46 = arith.addf %45, %44 : vector<2x32xf32>
    %47 = arith.divf %45, %46 : vector<2x32xf32>
    %48 = vector.extract_strided_slice %20 {offsets = [0, 0], sizes = [2, 32], strides = [1, 1]} : vector<16x32xf32> to vector<2x32xf32>
    %cst_32 = arith.constant dense<0.000000e+00> : vector<2x32xf32>
    %49 = tpu.matmul %37, %30, %cst_32 {dimension_numbers = #tpu.dot_dimension_numbers<[1], [0], [0], [1], [0, 0, 1, 1], [], []>} : vector<2x32xf32>, vector<32x32xf32>, vector<2x32xf32> -> vector<2x32xf32>
    %50 = arith.addf %48, %49 : vector<2x32xf32>
    %51 = vector.broadcast %35 : vector<1x32xf32> to vector<2x32xf32>
    %52 = arith.addf %50, %51 : vector<2x32xf32>
    %53 = arith.negf %52 : vector<2x32xf32>
    %54 = math.exp %53 : vector<2x32xf32>
    %cst_33 = arith.constant 1.000000e+00 : f32
    %55 = vector.broadcast %cst_33 : f32 to vector<2x32xf32>
    %56 = arith.addf %55, %54 : vector<2x32xf32>
    %57 = arith.divf %55, %56 : vector<2x32xf32>
    %58 = vector.extract_strided_slice %26 {offsets = [0, 0], sizes = [2, 32], strides = [1, 1]} : vector<16x32xf32> to vector<2x32xf32>
    %cst_34 = arith.constant dense<0.000000e+00> : vector<2x32xf32>
    %59 = tpu.matmul %37, %32, %cst_34 {dimension_numbers = #tpu.dot_dimension_numbers<[1], [0], [0], [1], [0, 0, 1, 1], [], []>} : vector<2x32xf32>, vector<32x32xf32>, vector<2x32xf32> -> vector<2x32xf32>
    %60 = vector.broadcast %36 : vector<1x32xf32> to vector<2x32xf32>
    %61 = arith.addf %59, %60 : vector<2x32xf32>
    %62 = arith.mulf %47, %61 : vector<2x32xf32>
    %63 = arith.addf %58, %62 : vector<2x32xf32>
    %64 = math.tanh %63 : vector<2x32xf32>
    %cst_35 = arith.constant 1.000000e+00 : f32
    %65 = vector.broadcast %cst_35 : f32 to vector<2x32xf32>
    %66 = arith.subf %65, %57 : vector<2x32xf32>
    %67 = arith.mulf %66, %64 : vector<2x32xf32>
    %68 = arith.mulf %57, %37 : vector<2x32xf32>
    %69 = arith.addf %67, %68 : vector<2x32xf32>
    %70 = vector.extract_strided_slice %14 {offsets = [2, 0], sizes = [2, 32], strides = [1, 1]} : vector<16x32xf32> to vector<2x32xf32>
    %cst_36 = arith.constant dense<0.000000e+00> : vector<2x32xf32>
    %71 = tpu.matmul %69, %28, %cst_36 {dimension_numbers = #tpu.dot_dimension_numbers<[1], [0], [0], [1], [0, 0, 1, 1], [], []>} : vector<2x32xf32>, vector<32x32xf32>, vector<2x32xf32> -> vector<2x32xf32>
    %72 = arith.addf %70, %71 : vector<2x32xf32>
    %73 = vector.broadcast %34 : vector<1x32xf32> to vector<2x32xf32>
    %74 = arith.addf %72, %73 : vector<2x32xf32>
    %75 = arith.negf %74 : vector<2x32xf32>
    %76 = math.exp %75 : vector<2x32xf32>
    %cst_37 = arith.constant 1.000000e+00 : f32
    %77 = vector.broadcast %cst_37 : f32 to vector<2x32xf32>
    %78 = arith.addf %77, %76 : vector<2x32xf32>
    %79 = arith.divf %77, %78 : vector<2x32xf32>
    %80 = vector.extract_strided_slice %20 {offsets = [2, 0], sizes = [2, 32], strides = [1, 1]} : vector<16x32xf32> to vector<2x32xf32>
    %cst_38 = arith.constant dense<0.000000e+00> : vector<2x32xf32>
    %81 = tpu.matmul %69, %30, %cst_38 {dimension_numbers = #tpu.dot_dimension_numbers<[1], [0], [0], [1], [0, 0, 1, 1], [], []>} : vector<2x32xf32>, vector<32x32xf32>, vector<2x32xf32> -> vector<2x32xf32>
    %82 = arith.addf %80, %81 : vector<2x32xf32>
    %83 = vector.broadcast %35 : vector<1x32xf32> to vector<2x32xf32>
    %84 = arith.addf %82, %83 : vector<2x32xf32>
    %85 = arith.negf %84 : vector<2x32xf32>
    %86 = math.exp %85 : vector<2x32xf32>
    %cst_39 = arith.constant 1.000000e+00 : f32
    %87 = vector.broadcast %cst_39 : f32 to vector<2x32xf32>
    %88 = arith.addf %87, %86 : vector<2x32xf32>
    %89 = arith.divf %87, %88 : vector<2x32xf32>
    %90 = vector.extract_strided_slice %26 {offsets = [2, 0], sizes = [2, 32], strides = [1, 1]} : vector<16x32xf32> to vector<2x32xf32>
    %cst_40 = arith.constant dense<0.000000e+00> : vector<2x32xf32>
    %91 = tpu.matmul %69, %32, %cst_40 {dimension_numbers = #tpu.dot_dimension_numbers<[1], [0], [0], [1], [0, 0, 1, 1], [], []>} : vector<2x32xf32>, vector<32x32xf32>, vector<2x32xf32> -> vector<2x32xf32>
    %92 = vector.broadcast %36 : vector<1x32xf32> to vector<2x32xf32>
    %93 = arith.addf %91, %92 : vector<2x32xf32>
    %94 = arith.mulf %79, %93 : vector<2x32xf32>
    %95 = arith.addf %90, %94 : vector<2x32xf32>
    %96 = math.tanh %95 : vector<2x32xf32>
    %cst_41 = arith.constant 1.000000e+00 : f32
    %97 = vector.broadcast %cst_41 : f32 to vector<2x32xf32>
    %98 = arith.subf %97, %89 : vector<2x32xf32>
    %99 = arith.mulf %98, %96 : vector<2x32xf32>
    %100 = arith.mulf %89, %69 : vector<2x32xf32>
    %101 = arith.addf %99, %100 : vector<2x32xf32>
    %102 = vector.extract_strided_slice %14 {offsets = [4, 0], sizes = [2, 32], strides = [1, 1]} : vector<16x32xf32> to vector<2x32xf32>
    %cst_42 = arith.constant dense<0.000000e+00> : vector<2x32xf32>
    %103 = tpu.matmul %101, %28, %cst_42 {dimension_numbers = #tpu.dot_dimension_numbers<[1], [0], [0], [1], [0, 0, 1, 1], [], []>} : vector<2x32xf32>, vector<32x32xf32>, vector<2x32xf32> -> vector<2x32xf32>
    %104 = arith.addf %102, %103 : vector<2x32xf32>
    %105 = vector.broadcast %34 : vector<1x32xf32> to vector<2x32xf32>
    %106 = arith.addf %104, %105 : vector<2x32xf32>
    %107 = arith.negf %106 : vector<2x32xf32>
    %108 = math.exp %107 : vector<2x32xf32>
    %cst_43 = arith.constant 1.000000e+00 : f32
    %109 = vector.broadcast %cst_43 : f32 to vector<2x32xf32>
    %110 = arith.addf %109, %108 : vector<2x32xf32>
    %111 = arith.divf %109, %110 : vector<2x32xf32>
    %112 = vector.extract_strided_slice %20 {offsets = [4, 0], sizes = [2, 32], strides = [1, 1]} : vector<16x32xf32> to vector<2x32xf32>
    %cst_44 = arith.constant dense<0.000000e+00> : vector<2x32xf32>
    %113 = tpu.matmul %101, %30, %cst_44 {dimension_numbers = #tpu.dot_dimension_numbers<[1], [0], [0], [1], [0, 0, 1, 1], [], []>} : vector<2x32xf32>, vector<32x32xf32>, vector<2x32xf32> -> vector<2x32xf32>
    %114 = arith.addf %112, %113 : vector<2x32xf32>
    %115 = vector.broadcast %35 : vector<1x32xf32> to vector<2x32xf32>
    %116 = arith.addf %114, %115 : vector<2x32xf32>
    %117 = arith.negf %116 : vector<2x32xf32>
    %118 = math.exp %117 : vector<2x32xf32>
    %cst_45 = arith.constant 1.000000e+00 : f32
    %119 = vector.broadcast %cst_45 : f32 to vector<2x32xf32>
    %120 = arith.addf %119, %118 : vector<2x32xf32>
    %121 = arith.divf %119, %120 : vector<2x32xf32>
    %122 = vector.extract_strided_slice %26 {offsets = [4, 0], sizes = [2, 32], strides = [1, 1]} : vector<16x32xf32> to vector<2x32xf32>
    %cst_46 = arith.constant dense<0.000000e+00> : vector<2x32xf32>
    %123 = tpu.matmul %101, %32, %cst_46 {dimension_numbers = #tpu.dot_dimension_numbers<[1], [0], [0], [1], [0, 0, 1, 1], [], []>} : vector<2x32xf32>, vector<32x32xf32>, vector<2x32xf32> -> vector<2x32xf32>
    %124 = vector.broadcast %36 : vector<1x32xf32> to vector<2x32xf32>
    %125 = arith.addf %123, %124 : vector<2x32xf32>
    %126 = arith.mulf %111, %125 : vector<2x32xf32>
    %127 = arith.addf %122, %126 : vector<2x32xf32>
    %128 = math.tanh %127 : vector<2x32xf32>
    %cst_47 = arith.constant 1.000000e+00 : f32
    %129 = vector.broadcast %cst_47 : f32 to vector<2x32xf32>
    %130 = arith.subf %129, %121 : vector<2x32xf32>
    %131 = arith.mulf %130, %128 : vector<2x32xf32>
    %132 = arith.mulf %121, %101 : vector<2x32xf32>
    %133 = arith.addf %131, %132 : vector<2x32xf32>
    %134 = vector.extract_strided_slice %14 {offsets = [6, 0], sizes = [2, 32], strides = [1, 1]} : vector<16x32xf32> to vector<2x32xf32>
    %cst_48 = arith.constant dense<0.000000e+00> : vector<2x32xf32>
    %135 = tpu.matmul %133, %28, %cst_48 {dimension_numbers = #tpu.dot_dimension_numbers<[1], [0], [0], [1], [0, 0, 1, 1], [], []>} : vector<2x32xf32>, vector<32x32xf32>, vector<2x32xf32> -> vector<2x32xf32>
    %136 = arith.addf %134, %135 : vector<2x32xf32>
    %137 = vector.broadcast %34 : vector<1x32xf32> to vector<2x32xf32>
    %138 = arith.addf %136, %137 : vector<2x32xf32>
    %139 = arith.negf %138 : vector<2x32xf32>
    %140 = math.exp %139 : vector<2x32xf32>
    %cst_49 = arith.constant 1.000000e+00 : f32
    %141 = vector.broadcast %cst_49 : f32 to vector<2x32xf32>
    %142 = arith.addf %141, %140 : vector<2x32xf32>
    %143 = arith.divf %141, %142 : vector<2x32xf32>
    %144 = vector.extract_strided_slice %20 {offsets = [6, 0], sizes = [2, 32], strides = [1, 1]} : vector<16x32xf32> to vector<2x32xf32>
    %cst_50 = arith.constant dense<0.000000e+00> : vector<2x32xf32>
    %145 = tpu.matmul %133, %30, %cst_50 {dimension_numbers = #tpu.dot_dimension_numbers<[1], [0], [0], [1], [0, 0, 1, 1], [], []>} : vector<2x32xf32>, vector<32x32xf32>, vector<2x32xf32> -> vector<2x32xf32>
    %146 = arith.addf %144, %145 : vector<2x32xf32>
    %147 = vector.broadcast %35 : vector<1x32xf32> to vector<2x32xf32>
    %148 = arith.addf %146, %147 : vector<2x32xf32>
    %149 = arith.negf %148 : vector<2x32xf32>
    %150 = math.exp %149 : vector<2x32xf32>
    %cst_51 = arith.constant 1.000000e+00 : f32
    %151 = vector.broadcast %cst_51 : f32 to vector<2x32xf32>
    %152 = arith.addf %151, %150 : vector<2x32xf32>
    %153 = arith.divf %151, %152 : vector<2x32xf32>
    %154 = vector.extract_strided_slice %26 {offsets = [6, 0], sizes = [2, 32], strides = [1, 1]} : vector<16x32xf32> to vector<2x32xf32>
    %cst_52 = arith.constant dense<0.000000e+00> : vector<2x32xf32>
    %155 = tpu.matmul %133, %32, %cst_52 {dimension_numbers = #tpu.dot_dimension_numbers<[1], [0], [0], [1], [0, 0, 1, 1], [], []>} : vector<2x32xf32>, vector<32x32xf32>, vector<2x32xf32> -> vector<2x32xf32>
    %156 = vector.broadcast %36 : vector<1x32xf32> to vector<2x32xf32>
    %157 = arith.addf %155, %156 : vector<2x32xf32>
    %158 = arith.mulf %143, %157 : vector<2x32xf32>
    %159 = arith.addf %154, %158 : vector<2x32xf32>
    %160 = math.tanh %159 : vector<2x32xf32>
    %cst_53 = arith.constant 1.000000e+00 : f32
    %161 = vector.broadcast %cst_53 : f32 to vector<2x32xf32>
    %162 = arith.subf %161, %153 : vector<2x32xf32>
    %163 = arith.mulf %162, %160 : vector<2x32xf32>
    %164 = arith.mulf %153, %133 : vector<2x32xf32>
    %165 = arith.addf %163, %164 : vector<2x32xf32>
    %166 = vector.extract_strided_slice %14 {offsets = [8, 0], sizes = [2, 32], strides = [1, 1]} : vector<16x32xf32> to vector<2x32xf32>
    %cst_54 = arith.constant dense<0.000000e+00> : vector<2x32xf32>
    %167 = tpu.matmul %165, %28, %cst_54 {dimension_numbers = #tpu.dot_dimension_numbers<[1], [0], [0], [1], [0, 0, 1, 1], [], []>} : vector<2x32xf32>, vector<32x32xf32>, vector<2x32xf32> -> vector<2x32xf32>
    %168 = arith.addf %166, %167 : vector<2x32xf32>
    %169 = vector.broadcast %34 : vector<1x32xf32> to vector<2x32xf32>
    %170 = arith.addf %168, %169 : vector<2x32xf32>
    %171 = arith.negf %170 : vector<2x32xf32>
    %172 = math.exp %171 : vector<2x32xf32>
    %cst_55 = arith.constant 1.000000e+00 : f32
    %173 = vector.broadcast %cst_55 : f32 to vector<2x32xf32>
    %174 = arith.addf %173, %172 : vector<2x32xf32>
    %175 = arith.divf %173, %174 : vector<2x32xf32>
    %176 = vector.extract_strided_slice %20 {offsets = [8, 0], sizes = [2, 32], strides = [1, 1]} : vector<16x32xf32> to vector<2x32xf32>
    %cst_56 = arith.constant dense<0.000000e+00> : vector<2x32xf32>
    %177 = tpu.matmul %165, %30, %cst_56 {dimension_numbers = #tpu.dot_dimension_numbers<[1], [0], [0], [1], [0, 0, 1, 1], [], []>} : vector<2x32xf32>, vector<32x32xf32>, vector<2x32xf32> -> vector<2x32xf32>
    %178 = arith.addf %176, %177 : vector<2x32xf32>
    %179 = vector.broadcast %35 : vector<1x32xf32> to vector<2x32xf32>
    %180 = arith.addf %178, %179 : vector<2x32xf32>
    %181 = arith.negf %180 : vector<2x32xf32>
    %182 = math.exp %181 : vector<2x32xf32>
    %cst_57 = arith.constant 1.000000e+00 : f32
    %183 = vector.broadcast %cst_57 : f32 to vector<2x32xf32>
    %184 = arith.addf %183, %182 : vector<2x32xf32>
    %185 = arith.divf %183, %184 : vector<2x32xf32>
    %186 = vector.extract_strided_slice %26 {offsets = [8, 0], sizes = [2, 32], strides = [1, 1]} : vector<16x32xf32> to vector<2x32xf32>
    %cst_58 = arith.constant dense<0.000000e+00> : vector<2x32xf32>
    %187 = tpu.matmul %165, %32, %cst_58 {dimension_numbers = #tpu.dot_dimension_numbers<[1], [0], [0], [1], [0, 0, 1, 1], [], []>} : vector<2x32xf32>, vector<32x32xf32>, vector<2x32xf32> -> vector<2x32xf32>
    %188 = vector.broadcast %36 : vector<1x32xf32> to vector<2x32xf32>
    %189 = arith.addf %187, %188 : vector<2x32xf32>
    %190 = arith.mulf %175, %189 : vector<2x32xf32>
    %191 = arith.addf %186, %190 : vector<2x32xf32>
    %192 = math.tanh %191 : vector<2x32xf32>
    %cst_59 = arith.constant 1.000000e+00 : f32
    %193 = vector.broadcast %cst_59 : f32 to vector<2x32xf32>
    %194 = arith.subf %193, %185 : vector<2x32xf32>
    %195 = arith.mulf %194, %192 : vector<2x32xf32>
    %196 = arith.mulf %185, %165 : vector<2x32xf32>
    %197 = arith.addf %195, %196 : vector<2x32xf32>
    %198 = vector.extract_strided_slice %14 {offsets = [10, 0], sizes = [2, 32], strides = [1, 1]} : vector<16x32xf32> to vector<2x32xf32>
    %cst_60 = arith.constant dense<0.000000e+00> : vector<2x32xf32>
    %199 = tpu.matmul %197, %28, %cst_60 {dimension_numbers = #tpu.dot_dimension_numbers<[1], [0], [0], [1], [0, 0, 1, 1], [], []>} : vector<2x32xf32>, vector<32x32xf32>, vector<2x32xf32> -> vector<2x32xf32>
    %200 = arith.addf %198, %199 : vector<2x32xf32>
    %201 = vector.broadcast %34 : vector<1x32xf32> to vector<2x32xf32>
    %202 = arith.addf %200, %201 : vector<2x32xf32>
    %203 = arith.negf %202 : vector<2x32xf32>
    %204 = math.exp %203 : vector<2x32xf32>
    %cst_61 = arith.constant 1.000000e+00 : f32
    %205 = vector.broadcast %cst_61 : f32 to vector<2x32xf32>
    %206 = arith.addf %205, %204 : vector<2x32xf32>
    %207 = arith.divf %205, %206 : vector<2x32xf32>
    %208 = vector.extract_strided_slice %20 {offsets = [10, 0], sizes = [2, 32], strides = [1, 1]} : vector<16x32xf32> to vector<2x32xf32>
    %cst_62 = arith.constant dense<0.000000e+00> : vector<2x32xf32>
    %209 = tpu.matmul %197, %30, %cst_62 {dimension_numbers = #tpu.dot_dimension_numbers<[1], [0], [0], [1], [0, 0, 1, 1], [], []>} : vector<2x32xf32>, vector<32x32xf32>, vector<2x32xf32> -> vector<2x32xf32>
    %210 = arith.addf %208, %209 : vector<2x32xf32>
    %211 = vector.broadcast %35 : vector<1x32xf32> to vector<2x32xf32>
    %212 = arith.addf %210, %211 : vector<2x32xf32>
    %213 = arith.negf %212 : vector<2x32xf32>
    %214 = math.exp %213 : vector<2x32xf32>
    %cst_63 = arith.constant 1.000000e+00 : f32
    %215 = vector.broadcast %cst_63 : f32 to vector<2x32xf32>
    %216 = arith.addf %215, %214 : vector<2x32xf32>
    %217 = arith.divf %215, %216 : vector<2x32xf32>
    %218 = vector.extract_strided_slice %26 {offsets = [10, 0], sizes = [2, 32], strides = [1, 1]} : vector<16x32xf32> to vector<2x32xf32>
    %cst_64 = arith.constant dense<0.000000e+00> : vector<2x32xf32>
    %219 = tpu.matmul %197, %32, %cst_64 {dimension_numbers = #tpu.dot_dimension_numbers<[1], [0], [0], [1], [0, 0, 1, 1], [], []>} : vector<2x32xf32>, vector<32x32xf32>, vector<2x32xf32> -> vector<2x32xf32>
    %220 = vector.broadcast %36 : vector<1x32xf32> to vector<2x32xf32>
    %221 = arith.addf %219, %220 : vector<2x32xf32>
    %222 = arith.mulf %207, %221 : vector<2x32xf32>
    %223 = arith.addf %218, %222 : vector<2x32xf32>
    %224 = math.tanh %223 : vector<2x32xf32>
    %cst_65 = arith.constant 1.000000e+00 : f32
    %225 = vector.broadcast %cst_65 : f32 to vector<2x32xf32>
    %226 = arith.subf %225, %217 : vector<2x32xf32>
    %227 = arith.mulf %226, %224 : vector<2x32xf32>
    %228 = arith.mulf %217, %197 : vector<2x32xf32>
    %229 = arith.addf %227, %228 : vector<2x32xf32>
    %230 = vector.extract_strided_slice %14 {offsets = [12, 0], sizes = [2, 32], strides = [1, 1]} : vector<16x32xf32> to vector<2x32xf32>
    %cst_66 = arith.constant dense<0.000000e+00> : vector<2x32xf32>
    %231 = tpu.matmul %229, %28, %cst_66 {dimension_numbers = #tpu.dot_dimension_numbers<[1], [0], [0], [1], [0, 0, 1, 1], [], []>} : vector<2x32xf32>, vector<32x32xf32>, vector<2x32xf32> -> vector<2x32xf32>
    %232 = arith.addf %230, %231 : vector<2x32xf32>
    %233 = vector.broadcast %34 : vector<1x32xf32> to vector<2x32xf32>
    %234 = arith.addf %232, %233 : vector<2x32xf32>
    %235 = arith.negf %234 : vector<2x32xf32>
    %236 = math.exp %235 : vector<2x32xf32>
    %cst_67 = arith.constant 1.000000e+00 : f32
    %237 = vector.broadcast %cst_67 : f32 to vector<2x32xf32>
    %238 = arith.addf %237, %236 : vector<2x32xf32>
    %239 = arith.divf %237, %238 : vector<2x32xf32>
    %240 = vector.extract_strided_slice %20 {offsets = [12, 0], sizes = [2, 32], strides = [1, 1]} : vector<16x32xf32> to vector<2x32xf32>
    %cst_68 = arith.constant dense<0.000000e+00> : vector<2x32xf32>
    %241 = tpu.matmul %229, %30, %cst_68 {dimension_numbers = #tpu.dot_dimension_numbers<[1], [0], [0], [1], [0, 0, 1, 1], [], []>} : vector<2x32xf32>, vector<32x32xf32>, vector<2x32xf32> -> vector<2x32xf32>
    %242 = arith.addf %240, %241 : vector<2x32xf32>
    %243 = vector.broadcast %35 : vector<1x32xf32> to vector<2x32xf32>
    %244 = arith.addf %242, %243 : vector<2x32xf32>
    %245 = arith.negf %244 : vector<2x32xf32>
    %246 = math.exp %245 : vector<2x32xf32>
    %cst_69 = arith.constant 1.000000e+00 : f32
    %247 = vector.broadcast %cst_69 : f32 to vector<2x32xf32>
    %248 = arith.addf %247, %246 : vector<2x32xf32>
    %249 = arith.divf %247, %248 : vector<2x32xf32>
    %250 = vector.extract_strided_slice %26 {offsets = [12, 0], sizes = [2, 32], strides = [1, 1]} : vector<16x32xf32> to vector<2x32xf32>
    %cst_70 = arith.constant dense<0.000000e+00> : vector<2x32xf32>
    %251 = tpu.matmul %229, %32, %cst_70 {dimension_numbers = #tpu.dot_dimension_numbers<[1], [0], [0], [1], [0, 0, 1, 1], [], []>} : vector<2x32xf32>, vector<32x32xf32>, vector<2x32xf32> -> vector<2x32xf32>
    %252 = vector.broadcast %36 : vector<1x32xf32> to vector<2x32xf32>
    %253 = arith.addf %251, %252 : vector<2x32xf32>
    %254 = arith.mulf %239, %253 : vector<2x32xf32>
    %255 = arith.addf %250, %254 : vector<2x32xf32>
    %256 = math.tanh %255 : vector<2x32xf32>
    %cst_71 = arith.constant 1.000000e+00 : f32
    %257 = vector.broadcast %cst_71 : f32 to vector<2x32xf32>
    %258 = arith.subf %257, %249 : vector<2x32xf32>
    %259 = arith.mulf %258, %256 : vector<2x32xf32>
    %260 = arith.mulf %249, %229 : vector<2x32xf32>
    %261 = arith.addf %259, %260 : vector<2x32xf32>
    %262 = vector.extract_strided_slice %14 {offsets = [14, 0], sizes = [2, 32], strides = [1, 1]} : vector<16x32xf32> to vector<2x32xf32>
    %cst_72 = arith.constant dense<0.000000e+00> : vector<2x32xf32>
    %263 = tpu.matmul %261, %28, %cst_72 {dimension_numbers = #tpu.dot_dimension_numbers<[1], [0], [0], [1], [0, 0, 1, 1], [], []>} : vector<2x32xf32>, vector<32x32xf32>, vector<2x32xf32> -> vector<2x32xf32>
    %264 = arith.addf %262, %263 : vector<2x32xf32>
    %265 = vector.broadcast %34 : vector<1x32xf32> to vector<2x32xf32>
    %266 = arith.addf %264, %265 : vector<2x32xf32>
    %267 = arith.negf %266 : vector<2x32xf32>
    %268 = math.exp %267 : vector<2x32xf32>
    %cst_73 = arith.constant 1.000000e+00 : f32
    %269 = vector.broadcast %cst_73 : f32 to vector<2x32xf32>
    %270 = arith.addf %269, %268 : vector<2x32xf32>
    %271 = arith.divf %269, %270 : vector<2x32xf32>
    %272 = vector.extract_strided_slice %20 {offsets = [14, 0], sizes = [2, 32], strides = [1, 1]} : vector<16x32xf32> to vector<2x32xf32>
    %cst_74 = arith.constant dense<0.000000e+00> : vector<2x32xf32>
    %273 = tpu.matmul %261, %30, %cst_74 {dimension_numbers = #tpu.dot_dimension_numbers<[1], [0], [0], [1], [0, 0, 1, 1], [], []>} : vector<2x32xf32>, vector<32x32xf32>, vector<2x32xf32> -> vector<2x32xf32>
    %274 = arith.addf %272, %273 : vector<2x32xf32>
    %275 = vector.broadcast %35 : vector<1x32xf32> to vector<2x32xf32>
    %276 = arith.addf %274, %275 : vector<2x32xf32>
    %277 = arith.negf %276 : vector<2x32xf32>
    %278 = math.exp %277 : vector<2x32xf32>
    %cst_75 = arith.constant 1.000000e+00 : f32
    %279 = vector.broadcast %cst_75 : f32 to vector<2x32xf32>
    %280 = arith.addf %279, %278 : vector<2x32xf32>
    %281 = arith.divf %279, %280 : vector<2x32xf32>
    %282 = vector.extract_strided_slice %26 {offsets = [14, 0], sizes = [2, 32], strides = [1, 1]} : vector<16x32xf32> to vector<2x32xf32>
    %cst_76 = arith.constant dense<0.000000e+00> : vector<2x32xf32>
    %283 = tpu.matmul %261, %32, %cst_76 {dimension_numbers = #tpu.dot_dimension_numbers<[1], [0], [0], [1], [0, 0, 1, 1], [], []>} : vector<2x32xf32>, vector<32x32xf32>, vector<2x32xf32> -> vector<2x32xf32>
    %284 = vector.broadcast %36 : vector<1x32xf32> to vector<2x32xf32>
    %285 = arith.addf %283, %284 : vector<2x32xf32>
    %286 = arith.mulf %271, %285 : vector<2x32xf32>
    %287 = arith.addf %282, %286 : vector<2x32xf32>
    %288 = math.tanh %287 : vector<2x32xf32>
    %cst_77 = arith.constant 1.000000e+00 : f32
    %289 = vector.broadcast %cst_77 : f32 to vector<2x32xf32>
    %290 = arith.subf %289, %281 : vector<2x32xf32>
    %291 = arith.mulf %290, %288 : vector<2x32xf32>
    %292 = arith.mulf %281, %261 : vector<2x32xf32>
    %293 = arith.addf %291, %292 : vector<2x32xf32>
    %c0_78 = arith.constant 0 : index
    %c0_79 = arith.constant 0 : index
    %294 = vector.load %arg1[%c0_78, %c0_79] : memref<2x8xf32, #tpu.memory_space<vmem>>, vector<2x8xf32>
    %c0_80 = arith.constant 0 : index
    %c0_81 = arith.constant 0 : index
    %295 = vector.load %arg13[%c0_80, %c0_81] : memref<8x8xf32, #tpu.memory_space<vmem>>, vector<8x8xf32>
    %cst_82 = arith.constant dense<0.000000e+00> : vector<2x8xf32>
    %296 = tpu.matmul %294, %295, %cst_82 {dimension_numbers = #tpu.dot_dimension_numbers<[1], [0], [0], [1], [0, 0, 1, 1], [], []>} : vector<2x8xf32>, vector<8x8xf32>, vector<2x8xf32> -> vector<2x8xf32>
    %c0_83 = arith.constant 0 : index
    %c0_84 = arith.constant 0 : index
    %297 = vector.load %arg14[%c0_83, %c0_84] : memref<1x8xf32, #tpu.memory_space<vmem>>, vector<1x8xf32>
    %298 = vector.broadcast %297 : vector<1x8xf32> to vector<2x8xf32>
    %299 = arith.addf %296, %298 : vector<2x8xf32>
    %cst_85 = arith.constant 0.000000e+00 : f32
    %300 = vector.broadcast %cst_85 : f32 to vector<2x8xf32>
    %301 = arith.maximumf %299, %300 : vector<2x8xf32>
    %c0_86 = arith.constant 0 : index
    %c0_87 = arith.constant 0 : index
    %302 = vector.load %arg9[%c0_86, %c0_87] : memref<8x36xf32, #tpu.memory_space<vmem>>, vector<8x36xf32>
    %c0_88 = arith.constant 0 : index
    %c0_89 = arith.constant 0 : index
    %303 = vector.load %arg10[%c0_88, %c0_89] : memref<8x1xf32, #tpu.memory_space<vmem>>, vector<8x1xf32>
    %c0_90 = arith.constant 0 : index
    %c0_91 = arith.constant 0 : index
    %c0_92 = arith.constant 0 : index
    %304 = vector.load %arg2[%c0_90, %c0_91, %c0_92] : memref<2x36x128xf32, #tpu.memory_space<vmem>>, vector<1x36x128xf32>
    %305 = vector.shape_cast %304 : vector<1x36x128xf32> to vector<36x128xf32>
    %cst_93 = arith.constant dense<0.000000e+00> : vector<8x128xf32>
    %306 = tpu.matmul %302, %305, %cst_93 {dimension_numbers = #tpu.dot_dimension_numbers<[1], [0], [0], [1], [0, 0, 1, 1], [], []>} : vector<8x36xf32>, vector<36x128xf32>, vector<8x128xf32> -> vector<8x128xf32>
    %307 = vector.broadcast %303 : vector<8x1xf32> to vector<8x128xf32>
    %308 = arith.addf %306, %307 : vector<8x128xf32>
    %cst_94 = arith.constant 0.000000e+00 : f32
    %309 = vector.broadcast %cst_94 : f32 to vector<8x128xf32>
    %310 = arith.maximumf %308, %309 : vector<8x128xf32>
    %c1_95 = arith.constant 1 : index
    %c0_96 = arith.constant 0 : index
    %c0_97 = arith.constant 0 : index
    %311 = vector.load %arg2[%c1_95, %c0_96, %c0_97] : memref<2x36x128xf32, #tpu.memory_space<vmem>>, vector<1x36x128xf32>
    %312 = vector.shape_cast %311 : vector<1x36x128xf32> to vector<36x128xf32>
    %cst_98 = arith.constant dense<0.000000e+00> : vector<8x128xf32>
    %313 = tpu.matmul %302, %312, %cst_98 {dimension_numbers = #tpu.dot_dimension_numbers<[1], [0], [0], [1], [0, 0, 1, 1], [], []>} : vector<8x36xf32>, vector<36x128xf32>, vector<8x128xf32> -> vector<8x128xf32>
    %314 = vector.broadcast %303 : vector<8x1xf32> to vector<8x128xf32>
    %315 = arith.addf %313, %314 : vector<8x128xf32>
    %cst_99 = arith.constant 0.000000e+00 : f32
    %316 = vector.broadcast %cst_99 : f32 to vector<8x128xf32>
    %317 = arith.maximumf %315, %316 : vector<8x128xf32>
    %cst_100 = arith.constant 0.000000e+00 : f32
    %318 = vector.broadcast %cst_100 : f32 to vector<2x32xf32>
    %319 = vector.extract_strided_slice %310 {offsets = [0, 0], sizes = [1, 128], strides = [1, 1]} : vector<8x128xf32> to vector<1x128xf32>
    %320 = vector.extract_strided_slice %317 {offsets = [0, 0], sizes = [1, 128], strides = [1, 1]} : vector<8x128xf32> to vector<1x128xf32>
    %321 = tpu.concatenate %319, %320 in 0 : vector<1x128xf32>, vector<1x128xf32> -> vector<2x128xf32>
    %c0_101 = arith.constant 0 : index
    %c0_102 = arith.constant 0 : index
    %c0_103 = arith.constant 0 : index
    %322 = vector.load %arg11[%c0_101, %c0_102, %c0_103] : memref<8x128x32xf32, #tpu.memory_space<vmem>>, vector<1x128x32xf32>
    %323 = vector.shape_cast %322 : vector<1x128x32xf32> to vector<128x32xf32>
    %cst_104 = arith.constant dense<0.000000e+00> : vector<2x32xf32>
    %324 = tpu.matmul %321, %323, %cst_104 {dimension_numbers = #tpu.dot_dimension_numbers<[1], [0], [0], [1], [0, 0, 1, 1], [], []>} : vector<2x128xf32>, vector<128x32xf32>, vector<2x32xf32> -> vector<2x32xf32>
    %325 = arith.addf %318, %324 : vector<2x32xf32>
    %326 = vector.extract_strided_slice %310 {offsets = [1, 0], sizes = [1, 128], strides = [1, 1]} : vector<8x128xf32> to vector<1x128xf32>
    %327 = vector.extract_strided_slice %317 {offsets = [1, 0], sizes = [1, 128], strides = [1, 1]} : vector<8x128xf32> to vector<1x128xf32>
    %328 = tpu.concatenate %326, %327 in 0 : vector<1x128xf32>, vector<1x128xf32> -> vector<2x128xf32>
    %c1_105 = arith.constant 1 : index
    %c0_106 = arith.constant 0 : index
    %c0_107 = arith.constant 0 : index
    %329 = vector.load %arg11[%c1_105, %c0_106, %c0_107] : memref<8x128x32xf32, #tpu.memory_space<vmem>>, vector<1x128x32xf32>
    %330 = vector.shape_cast %329 : vector<1x128x32xf32> to vector<128x32xf32>
    %cst_108 = arith.constant dense<0.000000e+00> : vector<2x32xf32>
    %331 = tpu.matmul %328, %330, %cst_108 {dimension_numbers = #tpu.dot_dimension_numbers<[1], [0], [0], [1], [0, 0, 1, 1], [], []>} : vector<2x128xf32>, vector<128x32xf32>, vector<2x32xf32> -> vector<2x32xf32>
    %332 = arith.addf %325, %331 : vector<2x32xf32>
    %333 = vector.extract_strided_slice %310 {offsets = [2, 0], sizes = [1, 128], strides = [1, 1]} : vector<8x128xf32> to vector<1x128xf32>
    %334 = vector.extract_strided_slice %317 {offsets = [2, 0], sizes = [1, 128], strides = [1, 1]} : vector<8x128xf32> to vector<1x128xf32>
    %335 = tpu.concatenate %333, %334 in 0 : vector<1x128xf32>, vector<1x128xf32> -> vector<2x128xf32>
    %c2_109 = arith.constant 2 : index
    %c0_110 = arith.constant 0 : index
    %c0_111 = arith.constant 0 : index
    %336 = vector.load %arg11[%c2_109, %c0_110, %c0_111] : memref<8x128x32xf32, #tpu.memory_space<vmem>>, vector<1x128x32xf32>
    %337 = vector.shape_cast %336 : vector<1x128x32xf32> to vector<128x32xf32>
    %cst_112 = arith.constant dense<0.000000e+00> : vector<2x32xf32>
    %338 = tpu.matmul %335, %337, %cst_112 {dimension_numbers = #tpu.dot_dimension_numbers<[1], [0], [0], [1], [0, 0, 1, 1], [], []>} : vector<2x128xf32>, vector<128x32xf32>, vector<2x32xf32> -> vector<2x32xf32>
    %339 = arith.addf %332, %338 : vector<2x32xf32>
    %340 = vector.extract_strided_slice %310 {offsets = [3, 0], sizes = [1, 128], strides = [1, 1]} : vector<8x128xf32> to vector<1x128xf32>
    %341 = vector.extract_strided_slice %317 {offsets = [3, 0], sizes = [1, 128], strides = [1, 1]} : vector<8x128xf32> to vector<1x128xf32>
    %342 = tpu.concatenate %340, %341 in 0 : vector<1x128xf32>, vector<1x128xf32> -> vector<2x128xf32>
    %c3 = arith.constant 3 : index
    %c0_113 = arith.constant 0 : index
    %c0_114 = arith.constant 0 : index
    %343 = vector.load %arg11[%c3, %c0_113, %c0_114] : memref<8x128x32xf32, #tpu.memory_space<vmem>>, vector<1x128x32xf32>
    %344 = vector.shape_cast %343 : vector<1x128x32xf32> to vector<128x32xf32>
    %cst_115 = arith.constant dense<0.000000e+00> : vector<2x32xf32>
    %345 = tpu.matmul %342, %344, %cst_115 {dimension_numbers = #tpu.dot_dimension_numbers<[1], [0], [0], [1], [0, 0, 1, 1], [], []>} : vector<2x128xf32>, vector<128x32xf32>, vector<2x32xf32> -> vector<2x32xf32>
    %346 = arith.addf %339, %345 : vector<2x32xf32>
    %347 = vector.extract_strided_slice %310 {offsets = [4, 0], sizes = [1, 128], strides = [1, 1]} : vector<8x128xf32> to vector<1x128xf32>
    %348 = vector.extract_strided_slice %317 {offsets = [4, 0], sizes = [1, 128], strides = [1, 1]} : vector<8x128xf32> to vector<1x128xf32>
    %349 = tpu.concatenate %347, %348 in 0 : vector<1x128xf32>, vector<1x128xf32> -> vector<2x128xf32>
    %c4 = arith.constant 4 : index
    %c0_116 = arith.constant 0 : index
    %c0_117 = arith.constant 0 : index
    %350 = vector.load %arg11[%c4, %c0_116, %c0_117] : memref<8x128x32xf32, #tpu.memory_space<vmem>>, vector<1x128x32xf32>
    %351 = vector.shape_cast %350 : vector<1x128x32xf32> to vector<128x32xf32>
    %cst_118 = arith.constant dense<0.000000e+00> : vector<2x32xf32>
    %352 = tpu.matmul %349, %351, %cst_118 {dimension_numbers = #tpu.dot_dimension_numbers<[1], [0], [0], [1], [0, 0, 1, 1], [], []>} : vector<2x128xf32>, vector<128x32xf32>, vector<2x32xf32> -> vector<2x32xf32>
    %353 = arith.addf %346, %352 : vector<2x32xf32>
    %354 = vector.extract_strided_slice %310 {offsets = [5, 0], sizes = [1, 128], strides = [1, 1]} : vector<8x128xf32> to vector<1x128xf32>
    %355 = vector.extract_strided_slice %317 {offsets = [5, 0], sizes = [1, 128], strides = [1, 1]} : vector<8x128xf32> to vector<1x128xf32>
    %356 = tpu.concatenate %354, %355 in 0 : vector<1x128xf32>, vector<1x128xf32> -> vector<2x128xf32>
    %c5 = arith.constant 5 : index
    %c0_119 = arith.constant 0 : index
    %c0_120 = arith.constant 0 : index
    %357 = vector.load %arg11[%c5, %c0_119, %c0_120] : memref<8x128x32xf32, #tpu.memory_space<vmem>>, vector<1x128x32xf32>
    %358 = vector.shape_cast %357 : vector<1x128x32xf32> to vector<128x32xf32>
    %cst_121 = arith.constant dense<0.000000e+00> : vector<2x32xf32>
    %359 = tpu.matmul %356, %358, %cst_121 {dimension_numbers = #tpu.dot_dimension_numbers<[1], [0], [0], [1], [0, 0, 1, 1], [], []>} : vector<2x128xf32>, vector<128x32xf32>, vector<2x32xf32> -> vector<2x32xf32>
    %360 = arith.addf %353, %359 : vector<2x32xf32>
    %361 = vector.extract_strided_slice %310 {offsets = [6, 0], sizes = [1, 128], strides = [1, 1]} : vector<8x128xf32> to vector<1x128xf32>
    %362 = vector.extract_strided_slice %317 {offsets = [6, 0], sizes = [1, 128], strides = [1, 1]} : vector<8x128xf32> to vector<1x128xf32>
    %363 = tpu.concatenate %361, %362 in 0 : vector<1x128xf32>, vector<1x128xf32> -> vector<2x128xf32>
    %c6 = arith.constant 6 : index
    %c0_122 = arith.constant 0 : index
    %c0_123 = arith.constant 0 : index
    %364 = vector.load %arg11[%c6, %c0_122, %c0_123] : memref<8x128x32xf32, #tpu.memory_space<vmem>>, vector<1x128x32xf32>
    %365 = vector.shape_cast %364 : vector<1x128x32xf32> to vector<128x32xf32>
    %cst_124 = arith.constant dense<0.000000e+00> : vector<2x32xf32>
    %366 = tpu.matmul %363, %365, %cst_124 {dimension_numbers = #tpu.dot_dimension_numbers<[1], [0], [0], [1], [0, 0, 1, 1], [], []>} : vector<2x128xf32>, vector<128x32xf32>, vector<2x32xf32> -> vector<2x32xf32>
    %367 = arith.addf %360, %366 : vector<2x32xf32>
    %368 = vector.extract_strided_slice %310 {offsets = [7, 0], sizes = [1, 128], strides = [1, 1]} : vector<8x128xf32> to vector<1x128xf32>
    %369 = vector.extract_strided_slice %317 {offsets = [7, 0], sizes = [1, 128], strides = [1, 1]} : vector<8x128xf32> to vector<1x128xf32>
    %370 = tpu.concatenate %368, %369 in 0 : vector<1x128xf32>, vector<1x128xf32> -> vector<2x128xf32>
    %c7 = arith.constant 7 : index
    %c0_125 = arith.constant 0 : index
    %c0_126 = arith.constant 0 : index
    %371 = vector.load %arg11[%c7, %c0_125, %c0_126] : memref<8x128x32xf32, #tpu.memory_space<vmem>>, vector<1x128x32xf32>
    %372 = vector.shape_cast %371 : vector<1x128x32xf32> to vector<128x32xf32>
    %cst_127 = arith.constant dense<0.000000e+00> : vector<2x32xf32>
    %373 = tpu.matmul %370, %372, %cst_127 {dimension_numbers = #tpu.dot_dimension_numbers<[1], [0], [0], [1], [0, 0, 1, 1], [], []>} : vector<2x128xf32>, vector<128x32xf32>, vector<2x32xf32> -> vector<2x32xf32>
    %374 = arith.addf %367, %373 : vector<2x32xf32>
    %c0_128 = arith.constant 0 : index
    %c0_129 = arith.constant 0 : index
    %375 = vector.load %arg12[%c0_128, %c0_129] : memref<1x32xf32, #tpu.memory_space<vmem>>, vector<1x32xf32>
    %376 = vector.broadcast %375 : vector<1x32xf32> to vector<2x32xf32>
    %377 = arith.addf %374, %376 : vector<2x32xf32>
    %cst_130 = arith.constant 0.000000e+00 : f32
    %378 = vector.broadcast %cst_130 : f32 to vector<2x32xf32>
    %379 = arith.maximumf %377, %378 : vector<2x32xf32>
    %c0_131 = arith.constant 0 : index
    %c0_132 = arith.constant 0 : index
    %380 = vector.load %arg15[%c0_131, %c0_132] : memref<32x32xf32, #tpu.memory_space<vmem>>, vector<32x32xf32>
    %cst_133 = arith.constant dense<0.000000e+00> : vector<2x32xf32>
    %381 = tpu.matmul %293, %380, %cst_133 {dimension_numbers = #tpu.dot_dimension_numbers<[1], [0], [0], [1], [0, 0, 1, 1], [], []>} : vector<2x32xf32>, vector<32x32xf32>, vector<2x32xf32> -> vector<2x32xf32>
    %c0_134 = arith.constant 0 : index
    %c0_135 = arith.constant 0 : index
    %382 = vector.load %arg16[%c0_134, %c0_135] : memref<32x32xf32, #tpu.memory_space<vmem>>, vector<32x32xf32>
    %cst_136 = arith.constant dense<0.000000e+00> : vector<2x32xf32>
    %383 = tpu.matmul %379, %382, %cst_136 {dimension_numbers = #tpu.dot_dimension_numbers<[1], [0], [0], [1], [0, 0, 1, 1], [], []>} : vector<2x32xf32>, vector<32x32xf32>, vector<2x32xf32> -> vector<2x32xf32>
    %384 = arith.addf %381, %383 : vector<2x32xf32>
    %c0_137 = arith.constant 0 : index
    %c0_138 = arith.constant 0 : index
    %385 = vector.load %arg17[%c0_137, %c0_138] : memref<8x32xf32, #tpu.memory_space<vmem>>, vector<8x32xf32>
    %cst_139 = arith.constant dense<0.000000e+00> : vector<2x32xf32>
    %386 = tpu.matmul %301, %385, %cst_139 {dimension_numbers = #tpu.dot_dimension_numbers<[1], [0], [0], [1], [0, 0, 1, 1], [], []>} : vector<2x8xf32>, vector<8x32xf32>, vector<2x32xf32> -> vector<2x32xf32>
    %387 = arith.addf %384, %386 : vector<2x32xf32>
    %c0_140 = arith.constant 0 : index
    %c0_141 = arith.constant 0 : index
    %388 = vector.load %arg18[%c0_140, %c0_141] : memref<1x32xf32, #tpu.memory_space<vmem>>, vector<1x32xf32>
    %389 = vector.broadcast %388 : vector<1x32xf32> to vector<2x32xf32>
    %390 = arith.addf %387, %389 : vector<2x32xf32>
    %cst_142 = arith.constant 0.000000e+00 : f32
    %391 = vector.broadcast %cst_142 : f32 to vector<2x32xf32>
    %392 = arith.maximumf %390, %391 : vector<2x32xf32>
    %c0_143 = arith.constant 0 : index
    %c0_144 = arith.constant 0 : index
    %393 = vector.load %arg19[%c0_143, %c0_144] : memref<32x4xf32, #tpu.memory_space<vmem>>, vector<32x4xf32>
    %cst_145 = arith.constant dense<0.000000e+00> : vector<2x4xf32>
    %394 = tpu.matmul %392, %393, %cst_145 {dimension_numbers = #tpu.dot_dimension_numbers<[1], [0], [0], [1], [0, 0, 1, 1], [], []>} : vector<2x32xf32>, vector<32x4xf32>, vector<2x4xf32> -> vector<2x4xf32>
    %c0_146 = arith.constant 0 : index
    %c0_147 = arith.constant 0 : index
    %395 = vector.load %arg20[%c0_146, %c0_147] : memref<1x4xf32, #tpu.memory_space<vmem>>, vector<1x4xf32>
    %396 = vector.broadcast %395 : vector<1x4xf32> to vector<2x4xf32>
    %397 = arith.addf %394, %396 : vector<2x4xf32>
    %c0_148 = arith.constant 0 : index
    %c0_149 = arith.constant 0 : index
    %398 = vector.load %arg21[%c0_148, %c0_149] : memref<2x4xf32, #tpu.memory_space<vmem>>, vector<2x4xf32>
    tpu.vector_store %arg21[%c0_148, %c0_149], %397 {strides = array<i32>} : memref<2x4xf32, #tpu.memory_space<vmem>>, vector<2x4xf32>,
    return
  }
}

</mosaic_0001>

<llo_original>
// kernel: dqn_seq_net_forward.1
$region0: #{dqn_seq_net_forward.1}
  #allocation0 [shape = 'u32[]', space=smem, size = 0x4, offset = 0x4, fixed_abs, tag = 'smem constant byte address 0x4 - core index']
  #allocation1 [shape = 'u32[144,128]{1,0:T(1,128)}', space=vmem, size = 0x12000, scoped, tag = 'internal scratch']
  %s0 = inlined_call_operand.vmem [shape: f32[16,16], index: 0, kind: input, shape index: {}]
  %s1 = inlined_call_operand.vmem [shape: f32[2,8], index: 1, kind: input, shape index: {}]
  %s2 = inlined_call_operand.vmem [shape: f32[2,36,128], index: 2, kind: input, shape index: {}]
  %s3 = inlined_call_operand.vmem [shape: f32[16,32], index: 3, kind: input, shape index: {}]
  %s4 = inlined_call_operand.vmem [shape: f32[1,32], index: 4, kind: input, shape index: {}]
  %s5 = inlined_call_operand.vmem [shape: f32[3,32,32], index: 5, kind: input, shape index: {}]
  %s6 = inlined_call_operand.vmem [shape: f32[3,32], index: 6, kind: input, shape index: {}]
  %s7 = inlined_call_operand.vmem [shape: f32[3,32,32], index: 7, kind: input, shape index: {}]
  %s8 = inlined_call_operand.vmem [shape: f32[3,32], index: 8, kind: input, shape index: {}]
  %s9 = inlined_call_operand.vmem [shape: f32[8,36], index: 9, kind: input, shape index: {}]
  %s10 = inlined_call_operand.vmem [shape: f32[8,1], index: 10, kind: input, shape index: {}]
  %s11 = inlined_call_operand.vmem [shape: f32[8,128,32], index: 11, kind: input, shape index: {}]
  %s12 = inlined_call_operand.vmem [shape: f32[1,32], index: 12, kind: input, shape index: {}]
  %s13 = inlined_call_operand.vmem [shape: f32[8,8], index: 13, kind: input, shape index: {}]
  %s14 = inlined_call_operand.vmem [shape: f32[1,8], index: 14, kind: input, shape index: {}]
  %s15 = inlined_call_operand.vmem [shape: f32[32,32], index: 15, kind: input, shape index: {}]
  %s16 = inlined_call_operand.vmem [shape: f32[32,32], index: 16, kind: input, shape index: {}]
  %s17 = inlined_call_operand.vmem [shape: f32[8,32], index: 17, kind: input, shape index: {}]
  %s18 = inlined_call_operand.vmem [shape: f32[1,32], index: 18, kind: input, shape index: {}]
  %s19 = inlined_call_operand.vmem [shape: f32[32,4], index: 19, kind: input, shape index: {}]
  %s20 = inlined_call_operand.vmem [shape: f32[1,4], index: 20, kind: input, shape index: {}]
  %s21 = inlined_call_operand.hbm [shape: f32[2,4], index: 21, kind: output, shape index: {}]
  %s22 = sld [smem:[#allocation0]]
  $region94: #{dqn_seq_net_forward.1} parent=0
    _
  %s24 = ssub.s32 1, %s22
  %s25 = scalar_select 0, %s24, %s22
  $region1: #{dqn_seq_net_forward.1} parent=0
    #allocation2 [shape = 'u8[1024]{0}', space=vmem, size = 0x400, scoped, tag = 'output window, operand 0, single buffered']
    #allocation3 [shape = 's32[1]{0}', space=sflag, size = 0x4, scoped, tag = 'scoped memory for dqn_seq_net_forward.1']
    %26 = vsyncpa [#allocation3], 0
    // Predicated region
    $region2: #{dqn_seq_net_forward.1} parent=1 // pred_check
      _
    $region3: #{dqn_seq_net_forward.1} parent=1 // pred_check_branch
      %28 = sbr.rel (0) target = $region5
    $region4: #{dqn_seq_net_forward.1} parent=1 // pred_region
      _
    $region5: #{dqn_seq_net_forward.1} parent=1 // pred_fallthru
      _
    // Predicated region
    $region6: #{dqn_seq_net_forward.1} parent=1 // pred_check
      _
    $region7: #{dqn_seq_net_forward.1} parent=1 // pred_check_branch
      %30 = sbr.rel (0) target = $region9
    $region8: #{dqn_seq_net_forward.1} parent=1 // pred_region
      _
    $region9: #{dqn_seq_net_forward.1} parent=1 // pred_fallthru
      _
    // Predicated region
    $region10: #{dqn_seq_net_forward.1} parent=1 // pred_check
      _
    $region11: #{dqn_seq_net_forward.1} parent=1 // pred_check_branch
      %32 = sbr.rel (0) target = $region13
    $region12: #{dqn_seq_net_forward.1} parent=1 // pred_region
      _
    $region13: #{dqn_seq_net_forward.1} parent=1 // pred_fallthru
      _
    // Predicated region
    $region14: #{dqn_seq_net_forward.1} parent=1 // pred_check
      _
    $region15: #{dqn_seq_net_forward.1} parent=1 // pred_check_branch
      %34 = sbr.rel (0) target = $region17
    $region16: #{dqn_seq_net_forward.1} parent=1 // pred_region
      _
    $region17: #{dqn_seq_net_forward.1} parent=1 // pred_fallthru
      _
    // Predicated region
    $region18: #{dqn_seq_net_forward.1} parent=1 // pred_check
      _
    $region19: #{dqn_seq_net_forward.1} parent=1 // pred_check_branch
      %36 = sbr.rel (0) target = $region21
    $region20: #{dqn_seq_net_forward.1} parent=1 // pred_region
      _
    $region21: #{dqn_seq_net_forward.1} parent=1 // pred_fallthru
      _
    // Predicated region
    $region22: #{dqn_seq_net_forward.1} parent=1 // pred_check
      _
    $region23: #{dqn_seq_net_forward.1} parent=1 // pred_check_branch
      %38 = sbr.rel (0) target = $region25
    $region24: #{dqn_seq_net_forward.1} parent=1 // pred_region
      _
    $region25: #{dqn_seq_net_forward.1} parent=1 // pred_fallthru
      _
    // Predicated region
    $region26: #{dqn_seq_net_forward.1} parent=1 // pred_check
      _
    $region27: #{dqn_seq_net_forward.1} parent=1 // pred_check_branch
      %40 = sbr.rel (0) target = $region29
    $region28: #{dqn_seq_net_forward.1} parent=1 // pred_region
      _
    $region29: #{dqn_seq_net_forward.1} parent=1 // pred_fallthru
      _
    // Predicated region
    $region30: #{dqn_seq_net_forward.1} parent=1 // pred_check
      _
    $region31: #{dqn_seq_net_forward.1} parent=1 // pred_check_branch
      %42 = sbr.rel (0) target = $region33
    $region32: #{dqn_seq_net_forward.1} parent=1 // pred_region
      _
    $region33: #{dqn_seq_net_forward.1} parent=1 // pred_fallthru
      _
    // Predicated region
    $region34: #{dqn_seq_net_forward.1} parent=1 // pred_check
      _
    $region35: #{dqn_seq_net_forward.1} parent=1 // pred_check_branch
      %44 = sbr.rel (0) target = $region37
    $region36: #{dqn_seq_net_forward.1} parent=1 // pred_region
      _
    $region37: #{dqn_seq_net_forward.1} parent=1 // pred_fallthru
      _
    // Predicated region
    $region38: #{dqn_seq_net_forward.1} parent=1 // pred_check
      _
    $region39: #{dqn_seq_net_forward.1} parent=1 // pred_check_branch
      %46 = sbr.rel (0) target = $region41
    $region40: #{dqn_seq_net_forward.1} parent=1 // pred_region
      _
    $region41: #{dqn_seq_net_forward.1} parent=1 // pred_fallthru
      _
    // Predicated region
    $region42: #{dqn_seq_net_forward.1} parent=1 // pred_check
      _
    $region43: #{dqn_seq_net_forward.1} parent=1 // pred_check_branch
      %48 = sbr.rel (0) target = $region45
    $region44: #{dqn_seq_net_forward.1} parent=1 // pred_region
      _
    $region45: #{dqn_seq_net_forward.1} parent=1 // pred_fallthru
      _
    // Predicated region
    $region46: #{dqn_seq_net_forward.1} parent=1 // pred_check
      _
    $region47: #{dqn_seq_net_forward.1} parent=1 // pred_check_branch
      %50 = sbr.rel (0) target = $region49
    $region48: #{dqn_seq_net_forward.1} parent=1 // pred_region
      _
    $region49: #{dqn_seq_net_forward.1} parent=1 // pred_fallthru
      _
    // Predicated region
    $region50: #{dqn_seq_net_forward.1} parent=1 // pred_check
      _
    $region51: #{dqn_seq_net_forward.1} parent=1 // pred_check_branch
      %52 = sbr.rel (0) target = $region53
    $region52: #{dqn_seq_net_forward.1} parent=1 // pred_region
      _
    $region53: #{dqn_seq_net_forward.1} parent=1 // pred_fallthru
      _
    // Predicated region
    $region54: #{dqn_seq_net_forward.1} parent=1 // pred_check
      _
    $region55: #{dqn_seq_net_forward.1} parent=1 // pred_check_branch
      %54 = sbr.rel (0) target = $region57
    $region56: #{dqn_seq_net_forward.1} parent=1 // pred_region
      _
    $region57: #{dqn_seq_net_forward.1} parent=1 // pred_fallthru
      _
    // Predicated region
    $region58: #{dqn_seq_net_forward.1} parent=1 // pred_check
      _
    $region59: #{dqn_seq_net_forward.1} parent=1 // pred_check_branch
      %56 = sbr.rel (0) target = $region61
    $region60: #{dqn_seq_net_forward.1} parent=1 // pred_region
      _
    $region61: #{dqn_seq_net_forward.1} parent=1 // pred_fallthru
      _
    // Predicated region
    $region62: #{dqn_seq_net_forward.1} parent=1 // pred_check
      _
    $region63: #{dqn_seq_net_forward.1} parent=1 // pred_check_branch
      %58 = sbr.rel (0) target = $region65
    $region64: #{dqn_seq_net_forward.1} parent=1 // pred_region
      _
    $region65: #{dqn_seq_net_forward.1} parent=1 // pred_fallthru
      _
    // Predicated region
    $region66: #{dqn_seq_net_forward.1} parent=1 // pred_check
      _
    $region67: #{dqn_seq_net_forward.1} parent=1 // pred_check_branch
      %60 = sbr.rel (0) target = $region69
    $region68: #{dqn_seq_net_forward.1} parent=1 // pred_region
      _
    $region69: #{dqn_seq_net_forward.1} parent=1 // pred_fallthru
      _
    // Predicated region
    $region70: #{dqn_seq_net_forward.1} parent=1 // pred_check
      _
    $region71: #{dqn_seq_net_forward.1} parent=1 // pred_check_branch
      %62 = sbr.rel (0) target = $region73
    $region72: #{dqn_seq_net_forward.1} parent=1 // pred_region
      _
    $region73: #{dqn_seq_net_forward.1} parent=1 // pred_fallthru
      _
    // Predicated region
    $region74: #{dqn_seq_net_forward.1} parent=1 // pred_check
      _
    $region75: #{dqn_seq_net_forward.1} parent=1 // pred_check_branch
      %64 = sbr.rel (0) target = $region77
    $region76: #{dqn_seq_net_forward.1} parent=1 // pred_region
      _
    $region77: #{dqn_seq_net_forward.1} parent=1 // pred_fallthru
      _
    // Predicated region
    $region78: #{dqn_seq_net_forward.1} parent=1 // pred_check
      _
    $region79: #{dqn_seq_net_forward.1} parent=1 // pred_check_branch
      %66 = sbr.rel (0) target = $region81
    $region80: #{dqn_seq_net_forward.1} parent=1 // pred_region
      _
    $region81: #{dqn_seq_net_forward.1} parent=1 // pred_fallthru
      _
    // Predicated region
    $region82: #{dqn_seq_net_forward.1} parent=1 // pred_check
      _
    $region83: #{dqn_seq_net_forward.1} parent=1 // pred_check_branch
      %68 = sbr.rel (0) target = $region85
    $region84: #{dqn_seq_net_forward.1} parent=1 // pred_region
      _
    $region85: #{dqn_seq_net_forward.1} parent=1 // pred_fallthru
      _
    %v69 = vld [vmem:[%s0] sm:$0xff]
    %v70 = vld [vmem:[%s0 + $0x8] sm:$0xff]
    %v71 = vld [vmem:[%s3] sm:$0xff]
    %v72 = vld [vmem:[%s3 + $0x8] sm:$0xff]
    %v73 = vld [vmem:[%s4] sm:$0x1]
    %v75 = vlaneseq
    %v76 = vshrl.u32 %v75, 7
    %v77 = vsub.s32 0, %v76
    %v78 = vrot.slane %v73, %v77
    %vm80 = vcmask 130048
    %v82 = vsel %vm80, %v69, 0
    %v85 = vsel %vm80, %v70, 0
    %87 = vmatprep.subr.mxu0 0.0
    %88 = vmatpush1.msra.mxu0 0.0
    %89 = vmatprep.subr.mxu0 0.0
    %90 = vmatpush1.msra.mxu0 0.0
    %91 = vmatprep.subr.mxu0 0.0
    %92 = vmatpush1.msra.mxu0 0.0
    %93 = vmatprep.subr.mxu0 0.0
    %94 = vmatpush1.msra.mxu0 0.0
    %95 = vmatprep.subr.mxu0 0.0
    %96 = vmatpush1.msra.mxu0 0.0
    %97 = vmatprep.subr.mxu0 0.0
    %98 = vmatpush1.msra.mxu0 0.0
    %99 = vmatprep.subr.mxu0 0.0
    %100 = vmatpush1.msra.mxu0 0.0
    %101 = vmatprep.subr.mxu0 0.0
    %102 = vmatpush1.msra.mxu0 0.0
    %103 = vmatprep.subr.mxu0 0.0
    %104 = vmatpush1.msra.mxu0 0.0
    %105 = vmatprep.subr.mxu0 0.0
    %106 = vmatpush1.msra.mxu0 0.0
    %107 = vmatprep.subr.mxu0 0.0
    %108 = vmatpush1.msra.mxu0 0.0
    %109 = vmatprep.subr.mxu0 0.0
    %110 = vmatpush1.msra.mxu0 0.0
    %111 = vmatprep.subr.mxu0 0.0
    %112 = vmatpush1.msra.mxu0 0.0
    %113 = vmatprep.subr.mxu0 0.0
    %114 = vmatpush1.msra.mxu0 0.0
    %115 = vmatprep.subr.mxu0 0.0
    %116 = vmatpush1.msra.mxu0 %v72
    %117 = vmatprep.subr.mxu0 0.0
    %118 = vmatpush1.msra.mxu0 %v71
    %119 = vmatprep.subr.mxu0 0.0
    %120 = vmatpush2.msra.mxu0 0.0
    %121 = vmatprep.subr.mxu0 0.0
    %122 = vmatpush2.msra.mxu0 0.0
    %123 = vmatprep.subr.mxu0 0.0
    %124 = vmatpush2.msra.mxu0 0.0
    %125 = vmatprep.subr.mxu0 0.0
    %126 = vmatpush2.msra.mxu0 0.0
    %127 = vmatprep.subr.mxu0 0.0
    %128 = vmatpush2.msra.mxu0 0.0
    %129 = vmatprep.subr.mxu0 0.0
    %130 = vmatpush2.msra.mxu0 0.0
    %131 = vmatprep.subr.mxu0 0.0
    %132 = vmatpush2.msra.mxu0 0.0
    %133 = vmatprep.subr.mxu0 0.0
    %134 = vmatpush2.msra.mxu0 0.0
    %135 = vmatprep.subr.mxu0 0.0
    %136 = vmatpush2.msra.mxu0 0.0
    %137 = vmatprep.subr.mxu0 0.0
    %138 = vmatpush2.msra.mxu0 0.0
    %139 = vmatprep.subr.mxu0 0.0
    %140 = vmatpush2.msra.mxu0 0.0
    %141 = vmatprep.subr.mxu0 0.0
    %142 = vmatpush2.msra.mxu0 0.0
    %143 = vmatprep.subr.mxu0 0.0
    %144 = vmatpush2.msra.mxu0 0.0
    %145 = vmatprep.subr.mxu0 0.0
    %146 = vmatpush2.msra.mxu0 0.0
    %147 = vmatprep.subr.mxu0 0.0
    %148 = vmatpush2.msra.mxu0 0.0
    %149 = vmatprep.subr.mxu0 0.0
    %150 = vmatpush2.msra.mxu0 0.0
    %151 = vmatprep.mubr.f32.mxu0 0.0
    %152 = vmatmul.mubr.f32.gmra.mxu0 %v82
    %v153 = vpop.f32.mrf.mxu0
    %v154 = vadd.f32 %v78, %v153
    %v155 = vpop.f32.mrf.mxu0
    %156 = vmatprep.mubr.f32.mxu0 0.0
    %157 = vmatmul.mubr.f32.gmra.mxu0 %v85
    %v158 = vpop.f32.mrf.mxu0
    %v159 = vadd.f32 %v78, %v158
    %v160 = vpop.f32.mrf.mxu0
    %161 = vdwg.mxu0
    %v162 = vmax.f32 %v154, 0.0
    %v163 = vmax.f32 %v159, 0.0
    %v164 = vld [vmem:[%s6] sm:$0x7]
    %v165 = vld [vmem:[%s5] sm:$0xff]
    %v166 = vld [vmem:[%s5 + $0x8] sm:$0xff]
    %v167 = vld [vmem:[%s5 + $0x10] sm:$0xff]
    %v168 = vld [vmem:[%s5 + $0x18] sm:$0xff]
    %v169 = vlaneseq
    %v170 = vshrl.u32 %v169, 7
    %v171 = vsub.s32 0, %v170
    %v172 = vrot.slane %v164, %v171
    %vm173 = vcmask 261120
    %v175 = vsel %vm173, %v162, 0
    %v178 = vsel %vm173, %v163, 0
    %180 = vmatprep.subr.mxu0 0.0
    %181 = vmatpush1.msra.mxu0 0.0
    %182 = vmatprep.subr.mxu0 0.0
    %183 = vmatpush1.msra.mxu0 0.0
    %184 = vmatprep.subr.mxu0 0.0
    %185 = vmatpush1.msra.mxu0 0.0
    %186 = vmatprep.subr.mxu0 0.0
    %187 = vmatpush1.msra.mxu0 0.0
    %188 = vmatprep.subr.mxu0 0.0
    %189 = vmatpush1.msra.mxu0 0.0
    %190 = vmatprep.subr.mxu0 0.0
    %191 = vmatpush1.msra.mxu0 0.0
    %192 = vmatprep.subr.mxu0 0.0
    %193 = vmatpush1.msra.mxu0 0.0
    %194 = vmatprep.subr.mxu0 0.0
    %195 = vmatpush1.msra.mxu0 0.0
    %196 = vmatprep.subr.mxu0 0.0
    %197 = vmatpush1.msra.mxu0 0.0
    %198 = vmatprep.subr.mxu0 0.0
    %199 = vmatpush1.msra.mxu0 0.0
    %200 = vmatprep.subr.mxu0 0.0
    %201 = vmatpush1.msra.mxu0 0.0
    %202 = vmatprep.subr.mxu0 0.0
    %203 = vmatpush1.msra.mxu0 0.0
    %204 = vmatprep.subr.mxu0 0.0
    %205 = vmatpush1.msra.mxu0 %v168
    %206 = vmatprep.subr.mxu0 0.0
    %207 = vmatpush1.msra.mxu0 %v167
    %208 = vmatprep.subr.mxu0 0.0
    %209 = vmatpush1.msra.mxu0 %v166
    %210 = vmatprep.subr.mxu0 0.0
    %211 = vmatpush1.msra.mxu0 %v165
    %212 = vmatprep.subr.mxu0 0.0
    %213 = vmatpush2.msra.mxu0 0.0
    %214 = vmatprep.subr.mxu0 0.0
    %215 = vmatpush2.msra.mxu0 0.0
    %216 = vmatprep.subr.mxu0 0.0
    %217 = vmatpush2.msra.mxu0 0.0
    %218 = vmatprep.subr.mxu0 0.0
    %219 = vmatpush2.msra.mxu0 0.0
    %220 = vmatprep.subr.mxu0 0.0
    %221 = vmatpush2.msra.mxu0 0.0
    %222 = vmatprep.subr.mxu0 0.0
    %223 = vmatpush2.msra.mxu0 0.0
    %224 = vmatprep.subr.mxu0 0.0
    %225 = vmatpush2.msra.mxu0 0.0
    %226 = vmatprep.subr.mxu0 0.0
    %227 = vmatpush2.msra.mxu0 0.0
    %228 = vmatprep.subr.mxu0 0.0
    %229 = vmatpush2.msra.mxu0 0.0
    %230 = vmatprep.subr.mxu0 0.0
    %231 = vmatpush2.msra.mxu0 0.0
    %232 = vmatprep.subr.mxu0 0.0
    %233 = vmatpush2.msra.mxu0 0.0
    %234 = vmatprep.subr.mxu0 0.0
    %235 = vmatpush2.msra.mxu0 0.0
    %236 = vmatprep.subr.mxu0 0.0
    %237 = vmatpush2.msra.mxu0 0.0
    %238 = vmatprep.subr.mxu0 0.0
    %239 = vmatpush2.msra.mxu0 0.0
    %240 = vmatprep.subr.mxu0 0.0
    %241 = vmatpush2.msra.mxu0 0.0
    %242 = vmatprep.subr.mxu0 0.0
    %243 = vmatpush2.msra.mxu0 0.0
    %244 = vmatprep.mubr.f32.mxu0 0.0
    %245 = vmatmul.mubr.f32.gmra.mxu0 %v175
    %v246 = vpop.f32.mrf.mxu0
    %v247 = vadd.f32 %v172, %v246
    %v248 = vpop.f32.mrf.mxu0
    %249 = vmatprep.mubr.f32.mxu0 0.0
    %250 = vmatmul.mubr.f32.gmra.mxu0 %v178
    %v251 = vpop.f32.mrf.mxu0
    %v252 = vadd.f32 %v172, %v251
    %v253 = vpop.f32.mrf.mxu0
    %254 = vdwg.mxu0
    %s255 = scalar_lea.vmem %s5, 32
    %v256 = vld [vmem:[%s255] sm:$0xff]
    %v257 = vld [vmem:[%s255 + $0x8] sm:$0xff]
    %v258 = vld [vmem:[%s255 + $0x10] sm:$0xff]
    %v259 = vld [vmem:[%s255 + $0x18] sm:$0xff]
    %v260 = vlaneseq
    %v261 = vshrl.u32 %v260, 7
    %v262 = vsub.s32 1, %v261
    %v263 = vrot.slane %v164, %v262
    %264 = vmatprep.subr.mxu0 0.0
    %265 = vmatpush1.msra.mxu0 0.0
    %266 = vmatprep.subr.mxu0 0.0
    %267 = vmatpush1.msra.mxu0 0.0
    %268 = vmatprep.subr.mxu0 0.0
    %269 = vmatpush1.msra.mxu0 0.0
    %270 = vmatprep.subr.mxu0 0.0
    %271 = vmatpush1.msra.mxu0 0.0
    %272 = vmatprep.subr.mxu0 0.0
    %273 = vmatpush1.msra.mxu0 0.0
    %274 = vmatprep.subr.mxu0 0.0
    %275 = vmatpush1.msra.mxu0 0.0
    %276 = vmatprep.subr.mxu0 0.0
    %277 = vmatpush1.msra.mxu0 0.0
    %278 = vmatprep.subr.mxu0 0.0
    %279 = vmatpush1.msra.mxu0 0.0
    %280 = vmatprep.subr.mxu0 0.0
    %281 = vmatpush1.msra.mxu0 0.0
    %282 = vmatprep.subr.mxu0 0.0
    %283 = vmatpush1.msra.mxu0 0.0
    %284 = vmatprep.subr.mxu0 0.0
    %285 = vmatpush1.msra.mxu0 0.0
    %286 = vmatprep.subr.mxu0 0.0
    %287 = vmatpush1.msra.mxu0 0.0
    %288 = vmatprep.subr.mxu0 0.0
    %289 = vmatpush1.msra.mxu0 %v259
    %290 = vmatprep.subr.mxu0 0.0
    %291 = vmatpush1.msra.mxu0 %v258
    %292 = vmatprep.subr.mxu0 0.0
    %293 = vmatpush1.msra.mxu0 %v257
    %294 = vmatprep.subr.mxu0 0.0
    %295 = vmatpush1.msra.mxu0 %v256
    %296 = vmatprep.subr.mxu0 0.0
    %297 = vmatpush2.msra.mxu0 0.0
    %298 = vmatprep.subr.mxu0 0.0
    %299 = vmatpush2.msra.mxu0 0.0
    %300 = vmatprep.subr.mxu0 0.0
    %301 = vmatpush2.msra.mxu0 0.0
    %302 = vmatprep.subr.mxu0 0.0
    %303 = vmatpush2.msra.mxu0 0.0
    %304 = vmatprep.subr.mxu0 0.0
    %305 = vmatpush2.msra.mxu0 0.0
    %306 = vmatprep.subr.mxu0 0.0
    %307 = vmatpush2.msra.mxu0 0.0
    %308 = vmatprep.subr.mxu0 0.0
    %309 = vmatpush2.msra.mxu0 0.0
    %310 = vmatprep.subr.mxu0 0.0
    %311 = vmatpush2.msra.mxu0 0.0
    %312 = vmatprep.subr.mxu0 0.0
    %313 = vmatpush2.msra.mxu0 0.0
    %314 = vmatprep.subr.mxu0 0.0
    %315 = vmatpush2.msra.mxu0 0.0
    %316 = vmatprep.subr.mxu0 0.0
    %317 = vmatpush2.msra.mxu0 0.0
    %318 = vmatprep.subr.mxu0 0.0
    %319 = vmatpush2.msra.mxu0 0.0
    %320 = vmatprep.subr.mxu0 0.0
    %321 = vmatpush2.msra.mxu0 0.0
    %322 = vmatprep.subr.mxu0 0.0
    %323 = vmatpush2.msra.mxu0 0.0
    %324 = vmatprep.subr.mxu0 0.0
    %325 = vmatpush2.msra.mxu0 0.0
    %326 = vmatprep.subr.mxu0 0.0
    %327 = vmatpush2.msra.mxu0 0.0
    %328 = vmatprep.mubr.f32.mxu0 0.0
    %329 = vmatmul.mubr.f32.gmra.mxu0 %v175
    %v330 = vpop.f32.mrf.mxu0
    %v331 = vadd.f32 %v263, %v330
    %v332 = vpop.f32.mrf.mxu0
    %333 = vmatprep.mubr.f32.mxu0 0.0
    %334 = vmatmul.mubr.f32.gmra.mxu0 %v178
    %v335 = vpop.f32.mrf.mxu0
    %v336 = vadd.f32 %v263, %v335
    %v337 = vpop.f32.mrf.mxu0
    %338 = vdwg.mxu0
    %s339 = scalar_lea.vmem %s5, 64
    %v340 = vld [vmem:[%s339] sm:$0xff]
    %v341 = vld [vmem:[%s339 + $0x8] sm:$0xff]
    %v342 = vld [vmem:[%s339 + $0x10] sm:$0xff]
    %v343 = vld [vmem:[%s339 + $0x18] sm:$0xff]
    %v344 = vlaneseq
    %v345 = vshrl.u32 %v344, 7
    %v346 = vsub.s32 2, %v345
    %v347 = vrot.slane %v164, %v346
    %348 = vmatprep.subr.mxu0 0.0
    %349 = vmatpush1.msra.mxu0 0.0
    %350 = vmatprep.subr.mxu0 0.0
    %351 = vmatpush1.msra.mxu0 0.0
    %352 = vmatprep.subr.mxu0 0.0
    %353 = vmatpush1.msra.mxu0 0.0
    %354 = vmatprep.subr.mxu0 0.0
    %355 = vmatpush1.msra.mxu0 0.0
    %356 = vmatprep.subr.mxu0 0.0
    %357 = vmatpush1.msra.mxu0 0.0
    %358 = vmatprep.subr.mxu0 0.0
    %359 = vmatpush1.msra.mxu0 0.0
    %360 = vmatprep.subr.mxu0 0.0
    %361 = vmatpush1.msra.mxu0 0.0
    %362 = vmatprep.subr.mxu0 0.0
    %363 = vmatpush1.msra.mxu0 0.0
    %364 = vmatprep.subr.mxu0 0.0
    %365 = vmatpush1.msra.mxu0 0.0
    %366 = vmatprep.subr.mxu0 0.0
    %367 = vmatpush1.msra.mxu0 0.0
    %368 = vmatprep.subr.mxu0 0.0
    %369 = vmatpush1.msra.mxu0 0.0
    %370 = vmatprep.subr.mxu0 0.0
    %371 = vmatpush1.msra.mxu0 0.0
    %372 = vmatprep.subr.mxu0 0.0
    %373 = vmatpush1.msra.mxu0 %v343
    %374 = vmatprep.subr.mxu0 0.0
    %375 = vmatpush1.msra.mxu0 %v342
    %376 = vmatprep.subr.mxu0 0.0
    %377 = vmatpush1.msra.mxu0 %v341
    %378 = vmatprep.subr.mxu0 0.0
    %379 = vmatpush1.msra.mxu0 %v340
    %380 = vmatprep.subr.mxu0 0.0
    %381 = vmatpush2.msra.mxu0 0.0
    %382 = vmatprep.subr.mxu0 0.0
    %383 = vmatpush2.msra.mxu0 0.0
    %384 = vmatprep.subr.mxu0 0.0
    %385 = vmatpush2.msra.mxu0 0.0
    %386 = vmatprep.subr.mxu0 0.0
    %387 = vmatpush2.msra.mxu0 0.0
    %388 = vmatprep.subr.mxu0 0.0
    %389 = vmatpush2.msra.mxu0 0.0
    %390 = vmatprep.subr.mxu0 0.0
    %391 = vmatpush2.msra.mxu0 0.0
    %392 = vmatprep.subr.mxu0 0.0
    %393 = vmatpush2.msra.mxu0 0.0
    %394 = vmatprep.subr.mxu0 0.0
    %395 = vmatpush2.msra.mxu0 0.0
    %396 = vmatprep.subr.mxu0 0.0
    %397 = vmatpush2.msra.mxu0 0.0
    %398 = vmatprep.subr.mxu0 0.0
    %399 = vmatpush2.msra.mxu0 0.0
    %400 = vmatprep.subr.mxu0 0.0
    %401 = vmatpush2.msra.mxu0 0.0
    %402 = vmatprep.subr.mxu0 0.0
    %403 = vmatpush2.msra.mxu0 0.0
    %404 = vmatprep.subr.mxu0 0.0
    %405 = vmatpush2.msra.mxu0 0.0
    %406 = vmatprep.subr.mxu0 0.0
    %407 = vmatpush2.msra.mxu0 0.0
    %408 = vmatprep.subr.mxu0 0.0
    %409 = vmatpush2.msra.mxu0 0.0
    %410 = vmatprep.subr.mxu0 0.0
    %411 = vmatpush2.msra.mxu0 0.0
    %412 = vmatprep.mubr.f32.mxu0 0.0
    %413 = vmatmul.mubr.f32.gmra.mxu0 %v175
    %v414 = vpop.f32.mrf.mxu0
    %v415 = vadd.f32 %v347, %v414
    %v416 = vpop.f32.mrf.mxu0
    %417 = vmatprep.mubr.f32.mxu0 0.0
    %418 = vmatmul.mubr.f32.gmra.mxu0 %v178
    %v419 = vpop.f32.mrf.mxu0
    %v420 = vadd.f32 %v347, %v419
    %v421 = vpop.f32.mrf.mxu0
    %422 = vdwg.mxu0
    %v423 = vld [vmem:[%s7] sm:$0xff]
    %v424 = vld [vmem:[%s7 + $0x8] sm:$0xff]
    %v425 = vld [vmem:[%s7 + $0x10] sm:$0xff]
    %v426 = vld [vmem:[%s7 + $0x18] sm:$0xff]
    %s427 = scalar_lea.vmem %s7, 32
    %v428 = vld [vmem:[%s427] sm:$0xff]
    %v429 = vld [vmem:[%s427 + $0x8] sm:$0xff]
    %v430 = vld [vmem:[%s427 + $0x10] sm:$0xff]
    %v431 = vld [vmem:[%s427 + $0x18] sm:$0xff]
    %s432 = scalar_lea.vmem %s7, 64
    %v433 = vld [vmem:[%s432] sm:$0xff]
    %v434 = vld [vmem:[%s432 + $0x8] sm:$0xff]
    %v435 = vld [vmem:[%s432 + $0x10] sm:$0xff]
    %v436 = vld [vmem:[%s432 + $0x18] sm:$0xff]
    %v437 = vld [vmem:[%s8] sm:$0x7]
    %v439 = vsel %vm173, 0.0, 0
    %441 = vmatprep.subr.mxu0 0.0
    %442 = vmatpush1.msra.mxu0 0.0
    %443 = vmatprep.subr.mxu0 0.0
    %444 = vmatpush1.msra.mxu0 0.0
    %445 = vmatprep.subr.mxu0 0.0
    %446 = vmatpush1.msra.mxu0 0.0
    %447 = vmatprep.subr.mxu0 0.0
    %448 = vmatpush1.msra.mxu0 0.0
    %449 = vmatprep.subr.mxu0 0.0
    %450 = vmatpush1.msra.mxu0 0.0
    %451 = vmatprep.subr.mxu0 0.0
    %452 = vmatpush1.msra.mxu0 0.0
    %453 = vmatprep.subr.mxu0 0.0
    %454 = vmatpush1.msra.mxu0 0.0
    %455 = vmatprep.subr.mxu0 0.0
    %456 = vmatpush1.msra.mxu0 0.0
    %457 = vmatprep.subr.mxu0 0.0
    %458 = vmatpush1.msra.mxu0 0.0
    %459 = vmatprep.subr.mxu0 0.0
    %460 = vmatpush1.msra.mxu0 0.0
    %461 = vmatprep.subr.mxu0 0.0
    %462 = vmatpush1.msra.mxu0 0.0
    %463 = vmatprep.subr.mxu0 0.0
    %464 = vmatpush1.msra.mxu0 0.0
    %465 = vmatprep.subr.mxu0 0.0
    %466 = vmatpush1.msra.mxu0 %v426
    %467 = vmatprep.subr.mxu0 0.0
    %468 = vmatpush1.msra.mxu0 %v425
    %469 = vmatprep.subr.mxu0 0.0
    %470 = vmatpush1.msra.mxu0 %v424
    %471 = vmatprep.subr.mxu0 0.0
    %472 = vmatpush1.msra.mxu0 %v423
    %473 = vmatprep.subr.mxu0 0.0
    %474 = vmatpush2.msra.mxu0 0.0
    %475 = vmatprep.subr.mxu0 0.0
    %476 = vmatpush2.msra.mxu0 0.0
    %477 = vmatprep.subr.mxu0 0.0
    %478 = vmatpush2.msra.mxu0 0.0
    %479 = vmatprep.subr.mxu0 0.0
    %480 = vmatpush2.msra.mxu0 0.0
    %481 = vmatprep.subr.mxu0 0.0
    %482 = vmatpush2.msra.mxu0 0.0
    %483 = vmatprep.subr.mxu0 0.0
    %484 = vmatpush2.msra.mxu0 0.0
    %485 = vmatprep.subr.mxu0 0.0
    %486 = vmatpush2.msra.mxu0 0.0
    %487 = vmatprep.subr.mxu0 0.0
    %488 = vmatpush2.msra.mxu0 0.0
    %489 = vmatprep.subr.mxu0 0.0
    %490 = vmatpush2.msra.mxu0 0.0
    %491 = vmatprep.subr.mxu0 0.0
    %492 = vmatpush2.msra.mxu0 0.0
    %493 = vmatprep.subr.mxu0 0.0
    %494 = vmatpush2.msra.mxu0 0.0
    %495 = vmatprep.subr.mxu0 0.0
    %496 = vmatpush2.msra.mxu0 0.0
    %497 = vmatprep.subr.mxu0 0.0
    %498 = vmatpush2.msra.mxu0 0.0
    %499 = vmatprep.subr.mxu0 0.0
    %500 = vmatpush2.msra.mxu0 0.0
    %501 = vmatprep.subr.mxu0 0.0
    %502 = vmatpush2.msra.mxu0 0.0
    %503 = vmatprep.subr.mxu0 0.0
    %504 = vmatpush2.msra.mxu0 0.0
    %505 = vmatprep.mubr.f32.mxu0 0.0
    %506 = vmatmul.mubr.f32.gmra.mxu0 %v439
    %v507 = vpop.f32.mrf.mxu0
    %v508 = vadd.f32 0.0, %v507
    %v509 = vpop.f32.mrf.mxu0
    %510 = vdwg.mxu0
    %v511 = vadd.f32 %v247, %v508
    %v512 = vlaneseq
    %v513 = vshrl.u32 %v512, 7
    %v514 = vsub.s32 0, %v513
    %v515 = vrot.slane %v437, %v514
    %v516 = vadd.f32 %v511, %v515
    %v517 = vxor.u32 %v516, 2147483648
    %v518 = vmul.f32 %v517, 1.442695
    %v519 = vpow.pop %v518
    %v520 = vadd.f32 %v519, 1.0
    %v521 = vrcp.pop %v520
    %v522 = vmul.f32 1.0, %v521
    %523 = vmatprep.subr.mxu0 0.0
    %524 = vmatpush1.msra.mxu0 0.0
    %525 = vmatprep.subr.mxu0 0.0
    %526 = vmatpush1.msra.mxu0 0.0
    %527 = vmatprep.subr.mxu0 0.0
    %528 = vmatpush1.msra.mxu0 0.0
    %529 = vmatprep.subr.mxu0 0.0
    %530 = vmatpush1.msra.mxu0 0.0
    %531 = vmatprep.subr.mxu0 0.0
    %532 = vmatpush1.msra.mxu0 0.0
    %533 = vmatprep.subr.mxu0 0.0
    %534 = vmatpush1.msra.mxu0 0.0
    %535 = vmatprep.subr.mxu0 0.0
    %536 = vmatpush1.msra.mxu0 0.0
    %537 = vmatprep.subr.mxu0 0.0
    %538 = vmatpush1.msra.mxu0 0.0
    %539 = vmatprep.subr.mxu0 0.0
    %540 = vmatpush1.msra.mxu0 0.0
    %541 = vmatprep.subr.mxu0 0.0
    %542 = vmatpush1.msra.mxu0 0.0
    %543 = vmatprep.subr.mxu0 0.0
    %544 = vmatpush1.msra.mxu0 0.0
    %545 = vmatprep.subr.mxu0 0.0
    %546 = vmatpush1.msra.mxu0 0.0
    %547 = vmatprep.subr.mxu0 0.0
    %548 = vmatpush1.msra.mxu0 %v431
    %549 = vmatprep.subr.mxu0 0.0
    %550 = vmatpush1.msra.mxu0 %v430
    %551 = vmatprep.subr.mxu0 0.0
    %552 = vmatpush1.msra.mxu0 %v429
    %553 = vmatprep.subr.mxu0 0.0
    %554 = vmatpush1.msra.mxu0 %v428
    %555 = vmatprep.subr.mxu0 0.0
    %556 = vmatpush2.msra.mxu0 0.0
    %557 = vmatprep.subr.mxu0 0.0
    %558 = vmatpush2.msra.mxu0 0.0
    %559 = vmatprep.subr.mxu0 0.0
    %560 = vmatpush2.msra.mxu0 0.0
    %561 = vmatprep.subr.mxu0 0.0
    %562 = vmatpush2.msra.mxu0 0.0
    %563 = vmatprep.subr.mxu0 0.0
    %564 = vmatpush2.msra.mxu0 0.0
    %565 = vmatprep.subr.mxu0 0.0
    %566 = vmatpush2.msra.mxu0 0.0
    %567 = vmatprep.subr.mxu0 0.0
    %568 = vmatpush2.msra.mxu0 0.0
    %569 = vmatprep.subr.mxu0 0.0
    %570 = vmatpush2.msra.mxu0 0.0
    %571 = vmatprep.subr.mxu0 0.0
    %572 = vmatpush2.msra.mxu0 0.0
    %573 = vmatprep.subr.mxu0 0.0
    %574 = vmatpush2.msra.mxu0 0.0
    %575 = vmatprep.subr.mxu0 0.0
    %576 = vmatpush2.msra.mxu0 0.0
    %577 = vmatprep.subr.mxu0 0.0
    %578 = vmatpush2.msra.mxu0 0.0
    %579 = vmatprep.subr.mxu0 0.0
    %580 = vmatpush2.msra.mxu0 0.0
    %581 = vmatprep.subr.mxu0 0.0
    %582 = vmatpush2.msra.mxu0 0.0
    %583 = vmatprep.subr.mxu0 0.0
    %584 = vmatpush2.msra.mxu0 0.0
    %585 = vmatprep.subr.mxu0 0.0
    %586 = vmatpush2.msra.mxu0 0.0
    %587 = vmatprep.mubr.f32.mxu0 0.0
    %588 = vmatmul.mubr.f32.gmra.mxu0 %v439
    %v589 = vpop.f32.mrf.mxu0
    %v590 = vadd.f32 0.0, %v589
    %v591 = vpop.f32.mrf.mxu0
    %592 = vdwg.mxu0
    %v593 = vadd.f32 %v331, %v590
    %v594 = vlaneseq
    %v595 = vshrl.u32 %v594, 7
    %v596 = vsub.s32 1, %v595
    %v597 = vrot.slane %v437, %v596
    %v598 = vadd.f32 %v593, %v597
    %v599 = vxor.u32 %v598, 2147483648
    %v600 = vmul.f32 %v599, 1.442695
    %v601 = vpow.pop %v600
    %v602 = vadd.f32 %v601, 1.0
    %v603 = vrcp.pop %v602
    %v604 = vmul.f32 1.0, %v603
    %v605 = vlaneseq
    %v606 = vshrl.u32 %v605, 7
    %v607 = vsub.s32 2, %v606
    %v608 = vrot.slane %v437, %v607
    %609 = vmatprep.subr.mxu0 0.0
    %610 = vmatpush1.msra.mxu0 0.0
    %611 = vmatprep.subr.mxu0 0.0
    %612 = vmatpush1.msra.mxu0 0.0
    %613 = vmatprep.subr.mxu0 0.0
    %614 = vmatpush1.msra.mxu0 0.0
    %615 = vmatprep.subr.mxu0 0.0
    %616 = vmatpush1.msra.mxu0 0.0
    %617 = vmatprep.subr.mxu0 0.0
    %618 = vmatpush1.msra.mxu0 0.0
    %619 = vmatprep.subr.mxu0 0.0
    %620 = vmatpush1.msra.mxu0 0.0
    %621 = vmatprep.subr.mxu0 0.0
    %622 = vmatpush1.msra.mxu0 0.0
    %623 = vmatprep.subr.mxu0 0.0
    %624 = vmatpush1.msra.mxu0 0.0
    %625 = vmatprep.subr.mxu0 0.0
    %626 = vmatpush1.msra.mxu0 0.0
    %627 = vmatprep.subr.mxu0 0.0
    %628 = vmatpush1.msra.mxu0 0.0
    %629 = vmatprep.subr.mxu0 0.0
    %630 = vmatpush1.msra.mxu0 0.0
    %631 = vmatprep.subr.mxu0 0.0
    %632 = vmatpush1.msra.mxu0 0.0
    %633 = vmatprep.subr.mxu0 0.0
    %634 = vmatpush1.msra.mxu0 %v436
    %635 = vmatprep.subr.mxu0 0.0
    %636 = vmatpush1.msra.mxu0 %v435
    %637 = vmatprep.subr.mxu0 0.0
    %638 = vmatpush1.msra.mxu0 %v434
    %639 = vmatprep.subr.mxu0 0.0
    %640 = vmatpush1.msra.mxu0 %v433
    %641 = vmatprep.subr.mxu0 0.0
    %642 = vmatpush2.msra.mxu0 0.0
    %643 = vmatprep.subr.mxu0 0.0
    %644 = vmatpush2.msra.mxu0 0.0
    %645 = vmatprep.subr.mxu0 0.0
    %646 = vmatpush2.msra.mxu0 0.0
    %647 = vmatprep.subr.mxu0 0.0
    %648 = vmatpush2.msra.mxu0 0.0
    %649 = vmatprep.subr.mxu0 0.0
    %650 = vmatpush2.msra.mxu0 0.0
    %651 = vmatprep.subr.mxu0 0.0
    %652 = vmatpush2.msra.mxu0 0.0
    %653 = vmatprep.subr.mxu0 0.0
    %654 = vmatpush2.msra.mxu0 0.0
    %655 = vmatprep.subr.mxu0 0.0
    %656 = vmatpush2.msra.mxu0 0.0
    %657 = vmatprep.subr.mxu0 0.0
    %658 = vmatpush2.msra.mxu0 0.0
    %659 = vmatprep.subr.mxu0 0.0
    %660 = vmatpush2.msra.mxu0 0.0
    %661 = vmatprep.subr.mxu0 0.0
    %662 = vmatpush2.msra.mxu0 0.0
    %663 = vmatprep.subr.mxu0 0.0
    %664 = vmatpush2.msra.mxu0 0.0
    %665 = vmatprep.subr.mxu0 0.0
    %666 = vmatpush2.msra.mxu0 0.0
    %667 = vmatprep.subr.mxu0 0.0
    %668 = vmatpush2.msra.mxu0 0.0
    %669 = vmatprep.subr.mxu0 0.0
    %670 = vmatpush2.msra.mxu0 0.0
    %671 = vmatprep.subr.mxu0 0.0
    %672 = vmatpush2.msra.mxu0 0.0
    %673 = vmatprep.mubr.f32.mxu0 0.0
    %674 = vmatmul.mubr.f32.gmra.mxu0 %v439
    %v675 = vpop.f32.mrf.mxu0
    %v676 = vadd.f32 %v608, %v675
    %v677 = vpop.f32.mrf.mxu0
    %678 = vdwg.mxu0
    %v679 = vmul.f32 %v522, %v676
    %v680 = vadd.f32 %v415, %v679
    %v681 = vtanh.pop %v680
    %v682 = vsub.f32 1.0, %v604
    %v683 = vmul.f32 %v682, %v681
    %v684 = vmul.f32 %v604, 0.0
    %v685 = vadd.f32 %v683, %v684
    %v687 = vsel %vm173, %v685, 0
    %689 = vmatprep.subr.mxu0 0.0
    %690 = vmatpush1.msra.mxu0 0.0
    %691 = vmatprep.subr.mxu0 0.0
    %692 = vmatpush1.msra.mxu0 0.0
    %693 = vmatprep.subr.mxu0 0.0
    %694 = vmatpush1.msra.mxu0 0.0
    %695 = vmatprep.subr.mxu0 0.0
    %696 = vmatpush1.msra.mxu0 0.0
    %697 = vmatprep.subr.mxu0 0.0
    %698 = vmatpush1.msra.mxu0 0.0
    %699 = vmatprep.subr.mxu0 0.0
    %700 = vmatpush1.msra.mxu0 0.0
    %701 = vmatprep.subr.mxu0 0.0
    %702 = vmatpush1.msra.mxu0 0.0
    %703 = vmatprep.subr.mxu0 0.0
    %704 = vmatpush1.msra.mxu0 0.0
    %705 = vmatprep.subr.mxu0 0.0
    %706 = vmatpush1.msra.mxu0 0.0
    %707 = vmatprep.subr.mxu0 0.0
    %708 = vmatpush1.msra.mxu0 0.0
    %709 = vmatprep.subr.mxu0 0.0
    %710 = vmatpush1.msra.mxu0 0.0
    %711 = vmatprep.subr.mxu0 0.0
    %712 = vmatpush1.msra.mxu0 0.0
    %713 = vmatprep.subr.mxu0 0.0
    %714 = vmatpush1.msra.mxu0 %v426
    %715 = vmatprep.subr.mxu0 0.0
    %716 = vmatpush1.msra.mxu0 %v425
    %717 = vmatprep.subr.mxu0 0.0
    %718 = vmatpush1.msra.mxu0 %v424
    %719 = vmatprep.subr.mxu0 0.0
    %720 = vmatpush1.msra.mxu0 %v423
    %721 = vmatprep.subr.mxu0 0.0
    %722 = vmatpush2.msra.mxu0 0.0
    %723 = vmatprep.subr.mxu0 0.0
    %724 = vmatpush2.msra.mxu0 0.0
    %725 = vmatprep.subr.mxu0 0.0
    %726 = vmatpush2.msra.mxu0 0.0
    %727 = vmatprep.subr.mxu0 0.0
    %728 = vmatpush2.msra.mxu0 0.0
    %729 = vmatprep.subr.mxu0 0.0
    %730 = vmatpush2.msra.mxu0 0.0
    %731 = vmatprep.subr.mxu0 0.0
    %732 = vmatpush2.msra.mxu0 0.0
    %733 = vmatprep.subr.mxu0 0.0
    %734 = vmatpush2.msra.mxu0 0.0
    %735 = vmatprep.subr.mxu0 0.0
    %736 = vmatpush2.msra.mxu0 0.0
    %737 = vmatprep.subr.mxu0 0.0
    %738 = vmatpush2.msra.mxu0 0.0
    %739 = vmatprep.subr.mxu0 0.0
    %740 = vmatpush2.msra.mxu0 0.0
    %741 = vmatprep.subr.mxu0 0.0
    %742 = vmatpush2.msra.mxu0 0.0
    %743 = vmatprep.subr.mxu0 0.0
    %744 = vmatpush2.msra.mxu0 0.0
    %745 = vmatprep.subr.mxu0 0.0
    %746 = vmatpush2.msra.mxu0 0.0
    %747 = vmatprep.subr.mxu0 0.0
    %748 = vmatpush2.msra.mxu0 0.0
    %749 = vmatprep.subr.mxu0 0.0
    %750 = vmatpush2.msra.mxu0 0.0
    %751 = vmatprep.subr.mxu0 0.0
    %752 = vmatpush2.msra.mxu0 0.0
    %753 = vmatprep.mubr.f32.mxu0 0.0
    %754 = vmatmul.mubr.f32.gmra.mxu0 %v687
    %v755 = vpop.f32.mrf.mxu0
    %v756 = vadd.f32 0.0, %v755
    %v757 = vpop.f32.mrf.mxu0
    %758 = vdwg.mxu0
    %v760 = vrot.slane %v756, 6
    %v762 = vadd.f32 %v247, %v760
    %v763 = vadd.f32 %v762, %v515
    %v764 = vxor.u32 %v763, 2147483648
    %v765 = vmul.f32 %v764, 1.442695
    %v766 = vpow.pop %v765
    %v767 = vadd.f32 %v766, 1.0
    %v768 = vrcp.pop %v767
    %v769 = vmul.f32 1.0, %v768
    %770 = vmatprep.subr.mxu0 0.0
    %771 = vmatpush1.msra.mxu0 0.0
    %772 = vmatprep.subr.mxu0 0.0
    %773 = vmatpush1.msra.mxu0 0.0
    %774 = vmatprep.subr.mxu0 0.0
    %775 = vmatpush1.msra.mxu0 0.0
    %776 = vmatprep.subr.mxu0 0.0
    %777 = vmatpush1.msra.mxu0 0.0
    %778 = vmatprep.subr.mxu0 0.0
    %779 = vmatpush1.msra.mxu0 0.0
    %780 = vmatprep.subr.mxu0 0.0
    %781 = vmatpush1.msra.mxu0 0.0
    %782 = vmatprep.subr.mxu0 0.0
    %783 = vmatpush1.msra.mxu0 0.0
    %784 = vmatprep.subr.mxu0 0.0
    %785 = vmatpush1.msra.mxu0 0.0
    %786 = vmatprep.subr.mxu0 0.0
    %787 = vmatpush1.msra.mxu0 0.0
    %788 = vmatprep.subr.mxu0 0.0
    %789 = vmatpush1.msra.mxu0 0.0
    %790 = vmatprep.subr.mxu0 0.0
    %791 = vmatpush1.msra.mxu0 0.0
    %792 = vmatprep.subr.mxu0 0.0
    %793 = vmatpush1.msra.mxu0 0.0
    %794 = vmatprep.subr.mxu0 0.0
    %795 = vmatpush1.msra.mxu0 %v431
    %796 = vmatprep.subr.mxu0 0.0
    %797 = vmatpush1.msra.mxu0 %v430
    %798 = vmatprep.subr.mxu0 0.0
    %799 = vmatpush1.msra.mxu0 %v429
    %800 = vmatprep.subr.mxu0 0.0
    %801 = vmatpush1.msra.mxu0 %v428
    %802 = vmatprep.subr.mxu0 0.0
    %803 = vmatpush2.msra.mxu0 0.0
    %804 = vmatprep.subr.mxu0 0.0
    %805 = vmatpush2.msra.mxu0 0.0
    %806 = vmatprep.subr.mxu0 0.0
    %807 = vmatpush2.msra.mxu0 0.0
    %808 = vmatprep.subr.mxu0 0.0
    %809 = vmatpush2.msra.mxu0 0.0
    %810 = vmatprep.subr.mxu0 0.0
    %811 = vmatpush2.msra.mxu0 0.0
    %812 = vmatprep.subr.mxu0 0.0
    %813 = vmatpush2.msra.mxu0 0.0
    %814 = vmatprep.subr.mxu0 0.0
    %815 = vmatpush2.msra.mxu0 0.0
    %816 = vmatprep.subr.mxu0 0.0
    %817 = vmatpush2.msra.mxu0 0.0
    %818 = vmatprep.subr.mxu0 0.0
    %819 = vmatpush2.msra.mxu0 0.0
    %820 = vmatprep.subr.mxu0 0.0
    %821 = vmatpush2.msra.mxu0 0.0
    %822 = vmatprep.subr.mxu0 0.0
    %823 = vmatpush2.msra.mxu0 0.0
    %824 = vmatprep.subr.mxu0 0.0
    %825 = vmatpush2.msra.mxu0 0.0
    %826 = vmatprep.subr.mxu0 0.0
    %827 = vmatpush2.msra.mxu0 0.0
    %828 = vmatprep.subr.mxu0 0.0
    %829 = vmatpush2.msra.mxu0 0.0
    %830 = vmatprep.subr.mxu0 0.0
    %831 = vmatpush2.msra.mxu0 0.0
    %832 = vmatprep.subr.mxu0 0.0
    %833 = vmatpush2.msra.mxu0 0.0
    %834 = vmatprep.mubr.f32.mxu0 0.0
    %835 = vmatmul.mubr.f32.gmra.mxu0 %v687
    %v836 = vpop.f32.mrf.mxu0
    %v837 = vadd.f32 0.0, %v836
    %v838 = vpop.f32.mrf.mxu0
    %839 = vdwg.mxu0
    %v841 = vrot.slane %v837, 6
    %v843 = vadd.f32 %v331, %v841
    %v844 = vadd.f32 %v843, %v597
    %v845 = vxor.u32 %v844, 2147483648
    %v846 = vmul.f32 %v845, 1.442695
    %v847 = vpow.pop %v846
    %v848 = vadd.f32 %v847, 1.0
    %v849 = vrcp.pop %v848
    %v850 = vmul.f32 1.0, %v849
    %851 = vmatprep.subr.mxu0 0.0
    %852 = vmatpush1.msra.mxu0 0.0
    %853 = vmatprep.subr.mxu0 0.0
    %854 = vmatpush1.msra.mxu0 0.0
    %855 = vmatprep.subr.mxu0 0.0
    %856 = vmatpush1.msra.mxu0 0.0
    %857 = vmatprep.subr.mxu0 0.0
    %858 = vmatpush1.msra.mxu0 0.0
    %859 = vmatprep.subr.mxu0 0.0
    %860 = vmatpush1.msra.mxu0 0.0
    %861 = vmatprep.subr.mxu0 0.0
    %862 = vmatpush1.msra.mxu0 0.0
    %863 = vmatprep.subr.mxu0 0.0
    %864 = vmatpush1.msra.mxu0 0.0
    %865 = vmatprep.subr.mxu0 0.0
    %866 = vmatpush1.msra.mxu0 0.0
    %867 = vmatprep.subr.mxu0 0.0
    %868 = vmatpush1.msra.mxu0 0.0
    %869 = vmatprep.subr.mxu0 0.0
    %870 = vmatpush1.msra.mxu0 0.0
    %871 = vmatprep.subr.mxu0 0.0
    %872 = vmatpush1.msra.mxu0 0.0
    %873 = vmatprep.subr.mxu0 0.0
    %874 = vmatpush1.msra.mxu0 0.0
    %875 = vmatprep.subr.mxu0 0.0
    %876 = vmatpush1.msra.mxu0 %v436
    %877 = vmatprep.subr.mxu0 0.0
    %878 = vmatpush1.msra.mxu0 %v435
    %879 = vmatprep.subr.mxu0 0.0
    %880 = vmatpush1.msra.mxu0 %v434
    %881 = vmatprep.subr.mxu0 0.0
    %882 = vmatpush1.msra.mxu0 %v433
    %883 = vmatprep.subr.mxu0 0.0
    %884 = vmatpush2.msra.mxu0 0.0
    %885 = vmatprep.subr.mxu0 0.0
    %886 = vmatpush2.msra.mxu0 0.0
    %887 = vmatprep.subr.mxu0 0.0
    %888 = vmatpush2.msra.mxu0 0.0
    %889 = vmatprep.subr.mxu0 0.0
    %890 = vmatpush2.msra.mxu0 0.0
    %891 = vmatprep.subr.mxu0 0.0
    %892 = vmatpush2.msra.mxu0 0.0
    %893 = vmatprep.subr.mxu0 0.0
    %894 = vmatpush2.msra.mxu0 0.0
    %895 = vmatprep.subr.mxu0 0.0
    %896 = vmatpush2.msra.mxu0 0.0
    %897 = vmatprep.subr.mxu0 0.0
    %898 = vmatpush2.msra.mxu0 0.0
    %899 = vmatprep.subr.mxu0 0.0
    %900 = vmatpush2.msra.mxu0 0.0
    %901 = vmatprep.subr.mxu0 0.0
    %902 = vmatpush2.msra.mxu0 0.0
    %903 = vmatprep.subr.mxu0 0.0
    %904 = vmatpush2.msra.mxu0 0.0
    %905 = vmatprep.subr.mxu0 0.0
    %906 = vmatpush2.msra.mxu0 0.0
    %907 = vmatprep.subr.mxu0 0.0
    %908 = vmatpush2.msra.mxu0 0.0
    %909 = vmatprep.subr.mxu0 0.0
    %910 = vmatpush2.msra.mxu0 0.0
    %911 = vmatprep.subr.mxu0 0.0
    %912 = vmatpush2.msra.mxu0 0.0
    %913 = vmatprep.subr.mxu0 0.0
    %914 = vmatpush2.msra.mxu0 0.0
    %915 = vmatprep.mubr.f32.mxu0 0.0
    %916 = vmatmul.mubr.f32.gmra.mxu0 %v687
    %v917 = vpop.f32.mrf.mxu0
    %v918 = vadd.f32 %v608, %v917
    %v919 = vpop.f32.mrf.mxu0
    %920 = vdwg.mxu0
    %v922 = vrot.slane %v918, 6
    %v924 = vmul.f32 %v769, %v922
    %v925 = vadd.f32 %v415, %v924
    %v926 = vtanh.pop %v925
    %v927 = vsub.f32 1.0, %v850
    %v928 = vmul.f32 %v927, %v926
    %v929 = vrot.slane %v685, 6
    %v931 = vmul.f32 %v850, %v929
    %v932 = vadd.f32 %v928, %v931
    %v934 = vrot.slane %v932, 2
    %v935 = vsel %vm173, %v934, 0
    %937 = vmatprep.subr.mxu0 0.0
    %938 = vmatpush1.msra.mxu0 0.0
    %939 = vmatprep.subr.mxu0 0.0
    %940 = vmatpush1.msra.mxu0 0.0
    %941 = vmatprep.subr.mxu0 0.0
    %942 = vmatpush1.msra.mxu0 0.0
    %943 = vmatprep.subr.mxu0 0.0
    %944 = vmatpush1.msra.mxu0 0.0
    %945 = vmatprep.subr.mxu0 0.0
    %946 = vmatpush1.msra.mxu0 0.0
    %947 = vmatprep.subr.mxu0 0.0
    %948 = vmatpush1.msra.mxu0 0.0
    %949 = vmatprep.subr.mxu0 0.0
    %950 = vmatpush1.msra.mxu0 0.0
    %951 = vmatprep.subr.mxu0 0.0
    %952 = vmatpush1.msra.mxu0 0.0
    %953 = vmatprep.subr.mxu0 0.0
    %954 = vmatpush1.msra.mxu0 0.0
    %955 = vmatprep.subr.mxu0 0.0
    %956 = vmatpush1.msra.mxu0 0.0
    %957 = vmatprep.subr.mxu0 0.0
    %958 = vmatpush1.msra.mxu0 0.0
    %959 = vmatprep.subr.mxu0 0.0
    %960 = vmatpush1.msra.mxu0 0.0
    %961 = vmatprep.subr.mxu0 0.0
    %962 = vmatpush1.msra.mxu0 %v426
    %963 = vmatprep.subr.mxu0 0.0
    %964 = vmatpush1.msra.mxu0 %v425
    %965 = vmatprep.subr.mxu0 0.0
    %966 = vmatpush1.msra.mxu0 %v424
    %967 = vmatprep.subr.mxu0 0.0
    %968 = vmatpush1.msra.mxu0 %v423
    %969 = vmatprep.subr.mxu0 0.0
    %970 = vmatpush2.msra.mxu0 0.0
    %971 = vmatprep.subr.mxu0 0.0
    %972 = vmatpush2.msra.mxu0 0.0
    %973 = vmatprep.subr.mxu0 0.0
    %974 = vmatpush2.msra.mxu0 0.0
    %975 = vmatprep.subr.mxu0 0.0
    %976 = vmatpush2.msra.mxu0 0.0
    %977 = vmatprep.subr.mxu0 0.0
    %978 = vmatpush2.msra.mxu0 0.0
    %979 = vmatprep.subr.mxu0 0.0
    %980 = vmatpush2.msra.mxu0 0.0
    %981 = vmatprep.subr.mxu0 0.0
    %982 = vmatpush2.msra.mxu0 0.0
    %983 = vmatprep.subr.mxu0 0.0
    %984 = vmatpush2.msra.mxu0 0.0
    %985 = vmatprep.subr.mxu0 0.0
    %986 = vmatpush2.msra.mxu0 0.0
    %987 = vmatprep.subr.mxu0 0.0
    %988 = vmatpush2.msra.mxu0 0.0
    %989 = vmatprep.subr.mxu0 0.0
    %990 = vmatpush2.msra.mxu0 0.0
    %991 = vmatprep.subr.mxu0 0.0
    %992 = vmatpush2.msra.mxu0 0.0
    %993 = vmatprep.subr.mxu0 0.0
    %994 = vmatpush2.msra.mxu0 0.0
    %995 = vmatprep.subr.mxu0 0.0
    %996 = vmatpush2.msra.mxu0 0.0
    %997 = vmatprep.subr.mxu0 0.0
    %998 = vmatpush2.msra.mxu0 0.0
    %999 = vmatprep.subr.mxu0 0.0
    %1000 = vmatpush2.msra.mxu0 0.0
    %1001 = vmatprep.mubr.f32.mxu0 0.0
    %1002 = vmatmul.mubr.f32.gmra.mxu0 %v935
    %v1003 = vpop.f32.mrf.mxu0
    %v1004 = vadd.f32 0.0, %v1003
    %v1005 = vpop.f32.mrf.mxu0
    %1006 = vdwg.mxu0
    %v1008 = vrot.slane %v1004, 4
    %v1010 = vadd.f32 %v247, %v1008
    %v1011 = vadd.f32 %v1010, %v515
    %v1012 = vxor.u32 %v1011, 2147483648
    %v1013 = vmul.f32 %v1012, 1.442695
    %v1014 = vpow.pop %v1013
    %v1015 = vadd.f32 %v1014, 1.0
    %v1016 = vrcp.pop %v1015
    %v1017 = vmul.f32 1.0, %v1016
    %1018 = vmatprep.subr.mxu0 0.0
    %1019 = vmatpush1.msra.mxu0 0.0
    %1020 = vmatprep.subr.mxu0 0.0
    %1021 = vmatpush1.msra.mxu0 0.0
    %1022 = vmatprep.subr.mxu0 0.0
    %1023 = vmatpush1.msra.mxu0 0.0
    %1024 = vmatprep.subr.mxu0 0.0
    %1025 = vmatpush1.msra.mxu0 0.0
    %1026 = vmatprep.subr.mxu0 0.0
    %1027 = vmatpush1.msra.mxu0 0.0
    %1028 = vmatprep.subr.mxu0 0.0
    %1029 = vmatpush1.msra.mxu0 0.0
    %1030 = vmatprep.subr.mxu0 0.0
    %1031 = vmatpush1.msra.mxu0 0.0
    %1032 = vmatprep.subr.mxu0 0.0
    %1033 = vmatpush1.msra.mxu0 0.0
    %1034 = vmatprep.subr.mxu0 0.0
    %1035 = vmatpush1.msra.mxu0 0.0
    %1036 = vmatprep.subr.mxu0 0.0
    %1037 = vmatpush1.msra.mxu0 0.0
    %1038 = vmatprep.subr.mxu0 0.0
    %1039 = vmatpush1.msra.mxu0 0.0
    %1040 = vmatprep.subr.mxu0 0.0
    %1041 = vmatpush1.msra.mxu0 0.0
    %1042 = vmatprep.subr.mxu0 0.0
    %1043 = vmatpush1.msra.mxu0 %v431
    %1044 = vmatprep.subr.mxu0 0.0
    %1045 = vmatpush1.msra.mxu0 %v430
    %1046 = vmatprep.subr.mxu0 0.0
    %1047 = vmatpush1.msra.mxu0 %v429
    %1048 = vmatprep.subr.mxu0 0.0
    %1049 = vmatpush1.msra.mxu0 %v428
    %1050 = vmatprep.subr.mxu0 0.0
    %1051 = vmatpush2.msra.mxu0 0.0
    %1052 = vmatprep.subr.mxu0 0.0
    %1053 = vmatpush2.msra.mxu0 0.0
    %1054 = vmatprep.subr.mxu0 0.0
    %1055 = vmatpush2.msra.mxu0 0.0
    %1056 = vmatprep.subr.mxu0 0.0
    %1057 = vmatpush2.msra.mxu0 0.0
    %1058 = vmatprep.subr.mxu0 0.0
    %1059 = vmatpush2.msra.mxu0 0.0
    %1060 = vmatprep.subr.mxu0 0.0
    %1061 = vmatpush2.msra.mxu0 0.0
    %1062 = vmatprep.subr.mxu0 0.0
    %1063 = vmatpush2.msra.mxu0 0.0
    %1064 = vmatprep.subr.mxu0 0.0
    %1065 = vmatpush2.msra.mxu0 0.0
    %1066 = vmatprep.subr.mxu0 0.0
    %1067 = vmatpush2.msra.mxu0 0.0
    %1068 = vmatprep.subr.mxu0 0.0
    %1069 = vmatpush2.msra.mxu0 0.0
    %1070 = vmatprep.subr.mxu0 0.0
    %1071 = vmatpush2.msra.mxu0 0.0
    %1072 = vmatprep.subr.mxu0 0.0
    %1073 = vmatpush2.msra.mxu0 0.0
    %1074 = vmatprep.subr.mxu0 0.0
    %1075 = vmatpush2.msra.mxu0 0.0
    %1076 = vmatprep.subr.mxu0 0.0
    %1077 = vmatpush2.msra.mxu0 0.0
    %1078 = vmatprep.subr.mxu0 0.0
    %1079 = vmatpush2.msra.mxu0 0.0
    %1080 = vmatprep.subr.mxu0 0.0
    %1081 = vmatpush2.msra.mxu0 0.0
    %1082 = vmatprep.mubr.f32.mxu0 0.0
    %1083 = vmatmul.mubr.f32.gmra.mxu0 %v935
    %v1084 = vpop.f32.mrf.mxu0
    %v1085 = vadd.f32 0.0, %v1084
    %v1086 = vpop.f32.mrf.mxu0
    %1087 = vdwg.mxu0
    %v1089 = vrot.slane %v1085, 4
    %v1091 = vadd.f32 %v331, %v1089
    %v1092 = vadd.f32 %v1091, %v597
    %v1093 = vxor.u32 %v1092, 2147483648
    %v1094 = vmul.f32 %v1093, 1.442695
    %v1095 = vpow.pop %v1094
    %v1096 = vadd.f32 %v1095, 1.0
    %v1097 = vrcp.pop %v1096
    %v1098 = vmul.f32 1.0, %v1097
    %1099 = vmatprep.subr.mxu0 0.0
    %1100 = vmatpush1.msra.mxu0 0.0
    %1101 = vmatprep.subr.mxu0 0.0
    %1102 = vmatpush1.msra.mxu0 0.0
    %1103 = vmatprep.subr.mxu0 0.0
    %1104 = vmatpush1.msra.mxu0 0.0
    %1105 = vmatprep.subr.mxu0 0.0
    %1106 = vmatpush1.msra.mxu0 0.0
    %1107 = vmatprep.subr.mxu0 0.0
    %1108 = vmatpush1.msra.mxu0 0.0
    %1109 = vmatprep.subr.mxu0 0.0
    %1110 = vmatpush1.msra.mxu0 0.0
    %1111 = vmatprep.subr.mxu0 0.0
    %1112 = vmatpush1.msra.mxu0 0.0
    %1113 = vmatprep.subr.mxu0 0.0
    %1114 = vmatpush1.msra.mxu0 0.0
    %1115 = vmatprep.subr.mxu0 0.0
    %1116 = vmatpush1.msra.mxu0 0.0
    %1117 = vmatprep.subr.mxu0 0.0
    %1118 = vmatpush1.msra.mxu0 0.0
    %1119 = vmatprep.subr.mxu0 0.0
    %1120 = vmatpush1.msra.mxu0 0.0
    %1121 = vmatprep.subr.mxu0 0.0
    %1122 = vmatpush1.msra.mxu0 0.0
    %1123 = vmatprep.subr.mxu0 0.0
    %1124 = vmatpush1.msra.mxu0 %v436
    %1125 = vmatprep.subr.mxu0 0.0
    %1126 = vmatpush1.msra.mxu0 %v435
    %1127 = vmatprep.subr.mxu0 0.0
    %1128 = vmatpush1.msra.mxu0 %v434
    %1129 = vmatprep.subr.mxu0 0.0
    %1130 = vmatpush1.msra.mxu0 %v433
    %1131 = vmatprep.subr.mxu0 0.0
    %1132 = vmatpush2.msra.mxu0 0.0
    %1133 = vmatprep.subr.mxu0 0.0
    %1134 = vmatpush2.msra.mxu0 0.0
    %1135 = vmatprep.subr.mxu0 0.0
    %1136 = vmatpush2.msra.mxu0 0.0
    %1137 = vmatprep.subr.mxu0 0.0
    %1138 = vmatpush2.msra.mxu0 0.0
    %1139 = vmatprep.subr.mxu0 0.0
    %1140 = vmatpush2.msra.mxu0 0.0
    %1141 = vmatprep.subr.mxu0 0.0
    %1142 = vmatpush2.msra.mxu0 0.0
    %1143 = vmatprep.subr.mxu0 0.0
    %1144 = vmatpush2.msra.mxu0 0.0
    %1145 = vmatprep.subr.mxu0 0.0
    %1146 = vmatpush2.msra.mxu0 0.0
    %1147 = vmatprep.subr.mxu0 0.0
    %1148 = vmatpush2.msra.mxu0 0.0
    %1149 = vmatprep.subr.mxu0 0.0
    %1150 = vmatpush2.msra.mxu0 0.0
    %1151 = vmatprep.subr.mxu0 0.0
    %1152 = vmatpush2.msra.mxu0 0.0
    %1153 = vmatprep.subr.mxu0 0.0
    %1154 = vmatpush2.msra.mxu0 0.0
    %1155 = vmatprep.subr.mxu0 0.0
    %1156 = vmatpush2.msra.mxu0 0.0
    %1157 = vmatprep.subr.mxu0 0.0
    %1158 = vmatpush2.msra.mxu0 0.0
    %1159 = vmatprep.subr.mxu0 0.0
    %1160 = vmatpush2.msra.mxu0 0.0
    %1161 = vmatprep.subr.mxu0 0.0
    %1162 = vmatpush2.msra.mxu0 0.0
    %1163 = vmatprep.mubr.f32.mxu0 0.0
    %1164 = vmatmul.mubr.f32.gmra.mxu0 %v935
    %v1165 = vpop.f32.mrf.mxu0
    %v1166 = vadd.f32 %v608, %v1165
    %v1167 = vpop.f32.mrf.mxu0
    %1168 = vdwg.mxu0
    %v1170 = vrot.slane %v1166, 4
    %v1172 = vmul.f32 %v1017, %v1170
    %v1173 = vadd.f32 %v415, %v1172
    %v1174 = vtanh.pop %v1173
    %v1175 = vsub.f32 1.0, %v1098
    %v1176 = vmul.f32 %v1175, %v1174
    %v1177 = vrot.slane %v932, 6
    %v1179 = vmul.f32 %v1098, %v1177
    %v1180 = vadd.f32 %v1176, %v1179
    %v1182 = vrot.slane %v1180, 4
    %v1183 = vsel %vm173, %v1182, 0
    %1185 = vmatprep.subr.mxu0 0.0
    %1186 = vmatpush1.msra.mxu0 0.0
    %1187 = vmatprep.subr.mxu0 0.0
    %1188 = vmatpush1.msra.mxu0 0.0
    %1189 = vmatprep.subr.mxu0 0.0
    %1190 = vmatpush1.msra.mxu0 0.0
    %1191 = vmatprep.subr.mxu0 0.0
    %1192 = vmatpush1.msra.mxu0 0.0
    %1193 = vmatprep.subr.mxu0 0.0
    %1194 = vmatpush1.msra.mxu0 0.0
    %1195 = vmatprep.subr.mxu0 0.0
    %1196 = vmatpush1.msra.mxu0 0.0
    %1197 = vmatprep.subr.mxu0 0.0
    %1198 = vmatpush1.msra.mxu0 0.0
    %1199 = vmatprep.subr.mxu0 0.0
    %1200 = vmatpush1.msra.mxu0 0.0
    %1201 = vmatprep.subr.mxu0 0.0
    %1202 = vmatpush1.msra.mxu0 0.0
    %1203 = vmatprep.subr.mxu0 0.0
    %1204 = vmatpush1.msra.mxu0 0.0
    %1205 = vmatprep.subr.mxu0 0.0
    %1206 = vmatpush1.msra.mxu0 0.0
    %1207 = vmatprep.subr.mxu0 0.0
    %1208 = vmatpush1.msra.mxu0 0.0
    %1209 = vmatprep.subr.mxu0 0.0
    %1210 = vmatpush1.msra.mxu0 %v426
    %1211 = vmatprep.subr.mxu0 0.0
    %1212 = vmatpush1.msra.mxu0 %v425
    %1213 = vmatprep.subr.mxu0 0.0
    %1214 = vmatpush1.msra.mxu0 %v424
    %1215 = vmatprep.subr.mxu0 0.0
    %1216 = vmatpush1.msra.mxu0 %v423
    %1217 = vmatprep.subr.mxu0 0.0
    %1218 = vmatpush2.msra.mxu0 0.0
    %1219 = vmatprep.subr.mxu0 0.0
    %1220 = vmatpush2.msra.mxu0 0.0
    %1221 = vmatprep.subr.mxu0 0.0
    %1222 = vmatpush2.msra.mxu0 0.0
    %1223 = vmatprep.subr.mxu0 0.0
    %1224 = vmatpush2.msra.mxu0 0.0
    %1225 = vmatprep.subr.mxu0 0.0
    %1226 = vmatpush2.msra.mxu0 0.0
    %1227 = vmatprep.subr.mxu0 0.0
    %1228 = vmatpush2.msra.mxu0 0.0
    %1229 = vmatprep.subr.mxu0 0.0
    %1230 = vmatpush2.msra.mxu0 0.0
    %1231 = vmatprep.subr.mxu0 0.0
    %1232 = vmatpush2.msra.mxu0 0.0
    %1233 = vmatprep.subr.mxu0 0.0
    %1234 = vmatpush2.msra.mxu0 0.0
    %1235 = vmatprep.subr.mxu0 0.0
    %1236 = vmatpush2.msra.mxu0 0.0
    %1237 = vmatprep.subr.mxu0 0.0
    %1238 = vmatpush2.msra.mxu0 0.0
    %1239 = vmatprep.subr.mxu0 0.0
    %1240 = vmatpush2.msra.mxu0 0.0
    %1241 = vmatprep.subr.mxu0 0.0
    %1242 = vmatpush2.msra.mxu0 0.0
    %1243 = vmatprep.subr.mxu0 0.0
    %1244 = vmatpush2.msra.mxu0 0.0
    %1245 = vmatprep.subr.mxu0 0.0
    %1246 = vmatpush2.msra.mxu0 0.0
    %1247 = vmatprep.subr.mxu0 0.0
    %1248 = vmatpush2.msra.mxu0 0.0
    %1249 = vmatprep.mubr.f32.mxu0 0.0
    %1250 = vmatmul.mubr.f32.gmra.mxu0 %v1183
    %v1251 = vpop.f32.mrf.mxu0
    %v1252 = vadd.f32 0.0, %v1251
    %v1253 = vpop.f32.mrf.mxu0
    %1254 = vdwg.mxu0
    %v1256 = vrot.slane %v1252, 2
    %v1258 = vadd.f32 %v247, %v1256
    %v1259 = vadd.f32 %v1258, %v515
    %v1260 = vxor.u32 %v1259, 2147483648
    %v1261 = vmul.f32 %v1260, 1.442695
    %v1262 = vpow.pop %v1261
    %v1263 = vadd.f32 %v1262, 1.0
    %v1264 = vrcp.pop %v1263
    %v1265 = vmul.f32 1.0, %v1264
    %1266 = vmatprep.subr.mxu0 0.0
    %1267 = vmatpush1.msra.mxu0 0.0
    %1268 = vmatprep.subr.mxu0 0.0
    %1269 = vmatpush1.msra.mxu0 0.0
    %1270 = vmatprep.subr.mxu0 0.0
    %1271 = vmatpush1.msra.mxu0 0.0
    %1272 = vmatprep.subr.mxu0 0.0
    %1273 = vmatpush1.msra.mxu0 0.0
    %1274 = vmatprep.subr.mxu0 0.0
    %1275 = vmatpush1.msra.mxu0 0.0
    %1276 = vmatprep.subr.mxu0 0.0
    %1277 = vmatpush1.msra.mxu0 0.0
    %1278 = vmatprep.subr.mxu0 0.0
    %1279 = vmatpush1.msra.mxu0 0.0
    %1280 = vmatprep.subr.mxu0 0.0
    %1281 = vmatpush1.msra.mxu0 0.0
    %1282 = vmatprep.subr.mxu0 0.0
    %1283 = vmatpush1.msra.mxu0 0.0
    %1284 = vmatprep.subr.mxu0 0.0
    %1285 = vmatpush1.msra.mxu0 0.0
    %1286 = vmatprep.subr.mxu0 0.0
    %1287 = vmatpush1.msra.mxu0 0.0
    %1288 = vmatprep.subr.mxu0 0.0
    %1289 = vmatpush1.msra.mxu0 0.0
    %1290 = vmatprep.subr.mxu0 0.0
    %1291 = vmatpush1.msra.mxu0 %v431
    %1292 = vmatprep.subr.mxu0 0.0
    %1293 = vmatpush1.msra.mxu0 %v430
    %1294 = vmatprep.subr.mxu0 0.0
    %1295 = vmatpush1.msra.mxu0 %v429
    %1296 = vmatprep.subr.mxu0 0.0
    %1297 = vmatpush1.msra.mxu0 %v428
    %1298 = vmatprep.subr.mxu0 0.0
    %1299 = vmatpush2.msra.mxu0 0.0
    %1300 = vmatprep.subr.mxu0 0.0
    %1301 = vmatpush2.msra.mxu0 0.0
    %1302 = vmatprep.subr.mxu0 0.0
    %1303 = vmatpush2.msra.mxu0 0.0
    %1304 = vmatprep.subr.mxu0 0.0
    %1305 = vmatpush2.msra.mxu0 0.0
    %1306 = vmatprep.subr.mxu0 0.0
    %1307 = vmatpush2.msra.mxu0 0.0
    %1308 = vmatprep.subr.mxu0 0.0
    %1309 = vmatpush2.msra.mxu0 0.0
    %1310 = vmatprep.subr.mxu0 0.0
    %1311 = vmatpush2.msra.mxu0 0.0
    %1312 = vmatprep.subr.mxu0 0.0
    %1313 = vmatpush2.msra.mxu0 0.0
    %1314 = vmatprep.subr.mxu0 0.0
    %1315 = vmatpush2.msra.mxu0 0.0
    %1316 = vmatprep.subr.mxu0 0.0
    %1317 = vmatpush2.msra.mxu0 0.0
    %1318 = vmatprep.subr.mxu0 0.0
    %1319 = vmatpush2.msra.mxu0 0.0
    %1320 = vmatprep.subr.mxu0 0.0
    %1321 = vmatpush2.msra.mxu0 0.0
    %1322 = vmatprep.subr.mxu0 0.0
    %1323 = vmatpush2.msra.mxu0 0.0
    %1324 = vmatprep.subr.mxu0 0.0
    %1325 = vmatpush2.msra.mxu0 0.0
    %1326 = vmatprep.subr.mxu0 0.0
    %1327 = vmatpush2.msra.mxu0 0.0
    %1328 = vmatprep.subr.mxu0 0.0
    %1329 = vmatpush2.msra.mxu0 0.0
    %1330 = vmatprep.mubr.f32.mxu0 0.0
    %1331 = vmatmul.mubr.f32.gmra.mxu0 %v1183
    %v1332 = vpop.f32.mrf.mxu0
    %v1333 = vadd.f32 0.0, %v1332
    %v1334 = vpop.f32.mrf.mxu0
    %1335 = vdwg.mxu0
    %v1337 = vrot.slane %v1333, 2
    %v1339 = vadd.f32 %v331, %v1337
    %v1340 = vadd.f32 %v1339, %v597
    %v1341 = vxor.u32 %v1340, 2147483648
    %v1342 = vmul.f32 %v1341, 1.442695
    %v1343 = vpow.pop %v1342
    %v1344 = vadd.f32 %v1343, 1.0
    %v1345 = vrcp.pop %v1344
    %v1346 = vmul.f32 1.0, %v1345
    %1347 = vmatprep.subr.mxu0 0.0
    %1348 = vmatpush1.msra.mxu0 0.0
    %1349 = vmatprep.subr.mxu0 0.0
    %1350 = vmatpush1.msra.mxu0 0.0
    %1351 = vmatprep.subr.mxu0 0.0
    %1352 = vmatpush1.msra.mxu0 0.0
    %1353 = vmatprep.subr.mxu0 0.0
    %1354 = vmatpush1.msra.mxu0 0.0
    %1355 = vmatprep.subr.mxu0 0.0
    %1356 = vmatpush1.msra.mxu0 0.0
    %1357 = vmatprep.subr.mxu0 0.0
    %1358 = vmatpush1.msra.mxu0 0.0
    %1359 = vmatprep.subr.mxu0 0.0
    %1360 = vmatpush1.msra.mxu0 0.0
    %1361 = vmatprep.subr.mxu0 0.0
    %1362 = vmatpush1.msra.mxu0 0.0
    %1363 = vmatprep.subr.mxu0 0.0
    %1364 = vmatpush1.msra.mxu0 0.0
    %1365 = vmatprep.subr.mxu0 0.0
    %1366 = vmatpush1.msra.mxu0 0.0
    %1367 = vmatprep.subr.mxu0 0.0
    %1368 = vmatpush1.msra.mxu0 0.0
    %1369 = vmatprep.subr.mxu0 0.0
    %1370 = vmatpush1.msra.mxu0 0.0
    %1371 = vmatprep.subr.mxu0 0.0
    %1372 = vmatpush1.msra.mxu0 %v436
    %1373 = vmatprep.subr.mxu0 0.0
    %1374 = vmatpush1.msra.mxu0 %v435
    %1375 = vmatprep.subr.mxu0 0.0
    %1376 = vmatpush1.msra.mxu0 %v434
    %1377 = vmatprep.subr.mxu0 0.0
    %1378 = vmatpush1.msra.mxu0 %v433
    %1379 = vmatprep.subr.mxu0 0.0
    %1380 = vmatpush2.msra.mxu0 0.0
    %1381 = vmatprep.subr.mxu0 0.0
    %1382 = vmatpush2.msra.mxu0 0.0
    %1383 = vmatprep.subr.mxu0 0.0
    %1384 = vmatpush2.msra.mxu0 0.0
    %1385 = vmatprep.subr.mxu0 0.0
    %1386 = vmatpush2.msra.mxu0 0.0
    %1387 = vmatprep.subr.mxu0 0.0
    %1388 = vmatpush2.msra.mxu0 0.0
    %1389 = vmatprep.subr.mxu0 0.0
    %1390 = vmatpush2.msra.mxu0 0.0
    %1391 = vmatprep.subr.mxu0 0.0
    %1392 = vmatpush2.msra.mxu0 0.0
    %1393 = vmatprep.subr.mxu0 0.0
    %1394 = vmatpush2.msra.mxu0 0.0
    %1395 = vmatprep.subr.mxu0 0.0
    %1396 = vmatpush2.msra.mxu0 0.0
    %1397 = vmatprep.subr.mxu0 0.0
    %1398 = vmatpush2.msra.mxu0 0.0
    %1399 = vmatprep.subr.mxu0 0.0
    %1400 = vmatpush2.msra.mxu0 0.0
    %1401 = vmatprep.subr.mxu0 0.0
    %1402 = vmatpush2.msra.mxu0 0.0
    %1403 = vmatprep.subr.mxu0 0.0
    %1404 = vmatpush2.msra.mxu0 0.0
    %1405 = vmatprep.subr.mxu0 0.0
    %1406 = vmatpush2.msra.mxu0 0.0
    %1407 = vmatprep.subr.mxu0 0.0
    %1408 = vmatpush2.msra.mxu0 0.0
    %1409 = vmatprep.subr.mxu0 0.0
    %1410 = vmatpush2.msra.mxu0 0.0
    %1411 = vmatprep.mubr.f32.mxu0 0.0
    %1412 = vmatmul.mubr.f32.gmra.mxu0 %v1183
    %v1413 = vpop.f32.mrf.mxu0
    %v1414 = vadd.f32 %v608, %v1413
    %v1415 = vpop.f32.mrf.mxu0
    %1416 = vdwg.mxu0
    %v1418 = vrot.slane %v1414, 2
    %v1420 = vmul.f32 %v1265, %v1418
    %v1421 = vadd.f32 %v415, %v1420
    %v1422 = vtanh.pop %v1421
    %v1423 = vsub.f32 1.0, %v1346
    %v1424 = vmul.f32 %v1423, %v1422
    %v1425 = vrot.slane %v1180, 6
    %v1427 = vmul.f32 %v1346, %v1425
    %v1428 = vadd.f32 %v1424, %v1427
    %v1430 = vrot.slane %v1428, 6
    %v1431 = vsel %vm173, %v1430, 0
    %1433 = vmatprep.subr.mxu0 0.0
    %1434 = vmatpush1.msra.mxu0 0.0
    %1435 = vmatprep.subr.mxu0 0.0
    %1436 = vmatpush1.msra.mxu0 0.0
    %1437 = vmatprep.subr.mxu0 0.0
    %1438 = vmatpush1.msra.mxu0 0.0
    %1439 = vmatprep.subr.mxu0 0.0
    %1440 = vmatpush1.msra.mxu0 0.0
    %1441 = vmatprep.subr.mxu0 0.0
    %1442 = vmatpush1.msra.mxu0 0.0
    %1443 = vmatprep.subr.mxu0 0.0
    %1444 = vmatpush1.msra.mxu0 0.0
    %1445 = vmatprep.subr.mxu0 0.0
    %1446 = vmatpush1.msra.mxu0 0.0
    %1447 = vmatprep.subr.mxu0 0.0
    %1448 = vmatpush1.msra.mxu0 0.0
    %1449 = vmatprep.subr.mxu0 0.0
    %1450 = vmatpush1.msra.mxu0 0.0
    %1451 = vmatprep.subr.mxu0 0.0
    %1452 = vmatpush1.msra.mxu0 0.0
    %1453 = vmatprep.subr.mxu0 0.0
    %1454 = vmatpush1.msra.mxu0 0.0
    %1455 = vmatprep.subr.mxu0 0.0
    %1456 = vmatpush1.msra.mxu0 0.0
    %1457 = vmatprep.subr.mxu0 0.0
    %1458 = vmatpush1.msra.mxu0 %v426
    %1459 = vmatprep.subr.mxu0 0.0
    %1460 = vmatpush1.msra.mxu0 %v425
    %1461 = vmatprep.subr.mxu0 0.0
    %1462 = vmatpush1.msra.mxu0 %v424
    %1463 = vmatprep.subr.mxu0 0.0
    %1464 = vmatpush1.msra.mxu0 %v423
    %1465 = vmatprep.subr.mxu0 0.0
    %1466 = vmatpush2.msra.mxu0 0.0
    %1467 = vmatprep.subr.mxu0 0.0
    %1468 = vmatpush2.msra.mxu0 0.0
    %1469 = vmatprep.subr.mxu0 0.0
    %1470 = vmatpush2.msra.mxu0 0.0
    %1471 = vmatprep.subr.mxu0 0.0
    %1472 = vmatpush2.msra.mxu0 0.0
    %1473 = vmatprep.subr.mxu0 0.0
    %1474 = vmatpush2.msra.mxu0 0.0
    %1475 = vmatprep.subr.mxu0 0.0
    %1476 = vmatpush2.msra.mxu0 0.0
    %1477 = vmatprep.subr.mxu0 0.0
    %1478 = vmatpush2.msra.mxu0 0.0
    %1479 = vmatprep.subr.mxu0 0.0
    %1480 = vmatpush2.msra.mxu0 0.0
    %1481 = vmatprep.subr.mxu0 0.0
    %1482 = vmatpush2.msra.mxu0 0.0
    %1483 = vmatprep.subr.mxu0 0.0
    %1484 = vmatpush2.msra.mxu0 0.0
    %1485 = vmatprep.subr.mxu0 0.0
    %1486 = vmatpush2.msra.mxu0 0.0
    %1487 = vmatprep.subr.mxu0 0.0
    %1488 = vmatpush2.msra.mxu0 0.0
    %1489 = vmatprep.subr.mxu0 0.0
    %1490 = vmatpush2.msra.mxu0 0.0
    %1491 = vmatprep.subr.mxu0 0.0
    %1492 = vmatpush2.msra.mxu0 0.0
    %1493 = vmatprep.subr.mxu0 0.0
    %1494 = vmatpush2.msra.mxu0 0.0
    %1495 = vmatprep.subr.mxu0 0.0
    %1496 = vmatpush2.msra.mxu0 0.0
    %1497 = vmatprep.mubr.f32.mxu0 0.0
    %1498 = vmatmul.mubr.f32.gmra.mxu0 %v1431
    %v1499 = vpop.f32.mrf.mxu0
    %v1500 = vadd.f32 0.0, %v1499
    %v1501 = vpop.f32.mrf.mxu0
    %1502 = vdwg.mxu0
    %v1503 = vadd.f32 %v252, %v1500
    %v1504 = vadd.f32 %v1503, %v515
    %v1505 = vxor.u32 %v1504, 2147483648
    %v1506 = vmul.f32 %v1505, 1.442695
    %v1507 = vpow.pop %v1506
    %v1508 = vadd.f32 %v1507, 1.0
    %v1509 = vrcp.pop %v1508
    %v1510 = vmul.f32 1.0, %v1509
    %1511 = vmatprep.subr.mxu0 0.0
    %1512 = vmatpush1.msra.mxu0 0.0
    %1513 = vmatprep.subr.mxu0 0.0
    %1514 = vmatpush1.msra.mxu0 0.0
    %1515 = vmatprep.subr.mxu0 0.0
    %1516 = vmatpush1.msra.mxu0 0.0
    %1517 = vmatprep.subr.mxu0 0.0
    %1518 = vmatpush1.msra.mxu0 0.0
    %1519 = vmatprep.subr.mxu0 0.0
    %1520 = vmatpush1.msra.mxu0 0.0
    %1521 = vmatprep.subr.mxu0 0.0
    %1522 = vmatpush1.msra.mxu0 0.0
    %1523 = vmatprep.subr.mxu0 0.0
    %1524 = vmatpush1.msra.mxu0 0.0
    %1525 = vmatprep.subr.mxu0 0.0
    %1526 = vmatpush1.msra.mxu0 0.0
    %1527 = vmatprep.subr.mxu0 0.0
    %1528 = vmatpush1.msra.mxu0 0.0
    %1529 = vmatprep.subr.mxu0 0.0
    %1530 = vmatpush1.msra.mxu0 0.0
    %1531 = vmatprep.subr.mxu0 0.0
    %1532 = vmatpush1.msra.mxu0 0.0
    %1533 = vmatprep.subr.mxu0 0.0
    %1534 = vmatpush1.msra.mxu0 0.0
    %1535 = vmatprep.subr.mxu0 0.0
    %1536 = vmatpush1.msra.mxu0 %v431
    %1537 = vmatprep.subr.mxu0 0.0
    %1538 = vmatpush1.msra.mxu0 %v430
    %1539 = vmatprep.subr.mxu0 0.0
    %1540 = vmatpush1.msra.mxu0 %v429
    %1541 = vmatprep.subr.mxu0 0.0
    %1542 = vmatpush1.msra.mxu0 %v428
    %1543 = vmatprep.subr.mxu0 0.0
    %1544 = vmatpush2.msra.mxu0 0.0
    %1545 = vmatprep.subr.mxu0 0.0
    %1546 = vmatpush2.msra.mxu0 0.0
    %1547 = vmatprep.subr.mxu0 0.0
    %1548 = vmatpush2.msra.mxu0 0.0
    %1549 = vmatprep.subr.mxu0 0.0
    %1550 = vmatpush2.msra.mxu0 0.0
    %1551 = vmatprep.subr.mxu0 0.0
    %1552 = vmatpush2.msra.mxu0 0.0
    %1553 = vmatprep.subr.mxu0 0.0
    %1554 = vmatpush2.msra.mxu0 0.0
    %1555 = vmatprep.subr.mxu0 0.0
    %1556 = vmatpush2.msra.mxu0 0.0
    %1557 = vmatprep.subr.mxu0 0.0
    %1558 = vmatpush2.msra.mxu0 0.0
    %1559 = vmatprep.subr.mxu0 0.0
    %1560 = vmatpush2.msra.mxu0 0.0
    %1561 = vmatprep.subr.mxu0 0.0
    %1562 = vmatpush2.msra.mxu0 0.0
    %1563 = vmatprep.subr.mxu0 0.0
    %1564 = vmatpush2.msra.mxu0 0.0
    %1565 = vmatprep.subr.mxu0 0.0
    %1566 = vmatpush2.msra.mxu0 0.0
    %1567 = vmatprep.subr.mxu0 0.0
    %1568 = vmatpush2.msra.mxu0 0.0
    %1569 = vmatprep.subr.mxu0 0.0
    %1570 = vmatpush2.msra.mxu0 0.0
    %1571 = vmatprep.subr.mxu0 0.0
    %1572 = vmatpush2.msra.mxu0 0.0
    %1573 = vmatprep.subr.mxu0 0.0
    %1574 = vmatpush2.msra.mxu0 0.0
    %1575 = vmatprep.mubr.f32.mxu0 0.0
    %1576 = vmatmul.mubr.f32.gmra.mxu0 %v1431
    %v1577 = vpop.f32.mrf.mxu0
    %v1578 = vadd.f32 0.0, %v1577
    %v1579 = vpop.f32.mrf.mxu0
    %1580 = vdwg.mxu0
    %v1581 = vadd.f32 %v336, %v1578
    %v1582 = vadd.f32 %v1581, %v597
    %v1583 = vxor.u32 %v1582, 2147483648
    %v1584 = vmul.f32 %v1583, 1.442695
    %v1585 = vpow.pop %v1584
    %v1586 = vadd.f32 %v1585, 1.0
    %v1587 = vrcp.pop %v1586
    %v1588 = vmul.f32 1.0, %v1587
    %1589 = vmatprep.subr.mxu0 0.0
    %1590 = vmatpush1.msra.mxu0 0.0
    %1591 = vmatprep.subr.mxu0 0.0
    %1592 = vmatpush1.msra.mxu0 0.0
    %1593 = vmatprep.subr.mxu0 0.0
    %1594 = vmatpush1.msra.mxu0 0.0
    %1595 = vmatprep.subr.mxu0 0.0
    %1596 = vmatpush1.msra.mxu0 0.0
    %1597 = vmatprep.subr.mxu0 0.0
    %1598 = vmatpush1.msra.mxu0 0.0
    %1599 = vmatprep.subr.mxu0 0.0
    %1600 = vmatpush1.msra.mxu0 0.0
    %1601 = vmatprep.subr.mxu0 0.0
    %1602 = vmatpush1.msra.mxu0 0.0
    %1603 = vmatprep.subr.mxu0 0.0
    %1604 = vmatpush1.msra.mxu0 0.0
    %1605 = vmatprep.subr.mxu0 0.0
    %1606 = vmatpush1.msra.mxu0 0.0
    %1607 = vmatprep.subr.mxu0 0.0
    %1608 = vmatpush1.msra.mxu0 0.0
    %1609 = vmatprep.subr.mxu0 0.0
    %1610 = vmatpush1.msra.mxu0 0.0
    %1611 = vmatprep.subr.mxu0 0.0
    %1612 = vmatpush1.msra.mxu0 0.0
    %1613 = vmatprep.subr.mxu0 0.0
    %1614 = vmatpush1.msra.mxu0 %v436
    %1615 = vmatprep.subr.mxu0 0.0
    %1616 = vmatpush1.msra.mxu0 %v435
    %1617 = vmatprep.subr.mxu0 0.0
    %1618 = vmatpush1.msra.mxu0 %v434
    %1619 = vmatprep.subr.mxu0 0.0
    %1620 = vmatpush1.msra.mxu0 %v433
    %1621 = vmatprep.subr.mxu0 0.0
    %1622 = vmatpush2.msra.mxu0 0.0
    %1623 = vmatprep.subr.mxu0 0.0
    %1624 = vmatpush2.msra.mxu0 0.0
    %1625 = vmatprep.subr.mxu0 0.0
    %1626 = vmatpush2.msra.mxu0 0.0
    %1627 = vmatprep.subr.mxu0 0.0
    %1628 = vmatpush2.msra.mxu0 0.0
    %1629 = vmatprep.subr.mxu0 0.0
    %1630 = vmatpush2.msra.mxu0 0.0
    %1631 = vmatprep.subr.mxu0 0.0
    %1632 = vmatpush2.msra.mxu0 0.0
    %1633 = vmatprep.subr.mxu0 0.0
    %1634 = vmatpush2.msra.mxu0 0.0
    %1635 = vmatprep.subr.mxu0 0.0
    %1636 = vmatpush2.msra.mxu0 0.0
    %1637 = vmatprep.subr.mxu0 0.0
    %1638 = vmatpush2.msra.mxu0 0.0
    %1639 = vmatprep.subr.mxu0 0.0
    %1640 = vmatpush2.msra.mxu0 0.0
    %1641 = vmatprep.subr.mxu0 0.0
    %1642 = vmatpush2.msra.mxu0 0.0
    %1643 = vmatprep.subr.mxu0 0.0
    %1644 = vmatpush2.msra.mxu0 0.0
    %1645 = vmatprep.subr.mxu0 0.0
    %1646 = vmatpush2.msra.mxu0 0.0
    %1647 = vmatprep.subr.mxu0 0.0
    %1648 = vmatpush2.msra.mxu0 0.0
    %1649 = vmatprep.subr.mxu0 0.0
    %1650 = vmatpush2.msra.mxu0 0.0
    %1651 = vmatprep.subr.mxu0 0.0
    %1652 = vmatpush2.msra.mxu0 0.0
    %1653 = vmatprep.mubr.f32.mxu0 0.0
    %1654 = vmatmul.mubr.f32.gmra.mxu0 %v1431
    %v1655 = vpop.f32.mrf.mxu0
    %v1656 = vadd.f32 %v608, %v1655
    %v1657 = vpop.f32.mrf.mxu0
    %1658 = vdwg.mxu0
    %v1659 = vmul.f32 %v1510, %v1656
    %v1660 = vadd.f32 %v420, %v1659
    %v1661 = vtanh.pop %v1660
    %v1662 = vsub.f32 1.0, %v1588
    %v1663 = vmul.f32 %v1662, %v1661
    %v1665 = vmul.f32 %v1588, %v1430
    %v1666 = vadd.f32 %v1663, %v1665
    %v1668 = vsel %vm173, %v1666, 0
    %1670 = vmatprep.subr.mxu0 0.0
    %1671 = vmatpush1.msra.mxu0 0.0
    %1672 = vmatprep.subr.mxu0 0.0
    %1673 = vmatpush1.msra.mxu0 0.0
    %1674 = vmatprep.subr.mxu0 0.0
    %1675 = vmatpush1.msra.mxu0 0.0
    %1676 = vmatprep.subr.mxu0 0.0
    %1677 = vmatpush1.msra.mxu0 0.0
    %1678 = vmatprep.subr.mxu0 0.0
    %1679 = vmatpush1.msra.mxu0 0.0
    %1680 = vmatprep.subr.mxu0 0.0
    %1681 = vmatpush1.msra.mxu0 0.0
    %1682 = vmatprep.subr.mxu0 0.0
    %1683 = vmatpush1.msra.mxu0 0.0
    %1684 = vmatprep.subr.mxu0 0.0
    %1685 = vmatpush1.msra.mxu0 0.0
    %1686 = vmatprep.subr.mxu0 0.0
    %1687 = vmatpush1.msra.mxu0 0.0
    %1688 = vmatprep.subr.mxu0 0.0
    %1689 = vmatpush1.msra.mxu0 0.0
    %1690 = vmatprep.subr.mxu0 0.0
    %1691 = vmatpush1.msra.mxu0 0.0
    %1692 = vmatprep.subr.mxu0 0.0
    %1693 = vmatpush1.msra.mxu0 0.0
    %1694 = vmatprep.subr.mxu0 0.0
    %1695 = vmatpush1.msra.mxu0 %v426
    %1696 = vmatprep.subr.mxu0 0.0
    %1697 = vmatpush1.msra.mxu0 %v425
    %1698 = vmatprep.subr.mxu0 0.0
    %1699 = vmatpush1.msra.mxu0 %v424
    %1700 = vmatprep.subr.mxu0 0.0
    %1701 = vmatpush1.msra.mxu0 %v423
    %1702 = vmatprep.subr.mxu0 0.0
    %1703 = vmatpush2.msra.mxu0 0.0
    %1704 = vmatprep.subr.mxu0 0.0
    %1705 = vmatpush2.msra.mxu0 0.0
    %1706 = vmatprep.subr.mxu0 0.0
    %1707 = vmatpush2.msra.mxu0 0.0
    %1708 = vmatprep.subr.mxu0 0.0
    %1709 = vmatpush2.msra.mxu0 0.0
    %1710 = vmatprep.subr.mxu0 0.0
    %1711 = vmatpush2.msra.mxu0 0.0
    %1712 = vmatprep.subr.mxu0 0.0
    %1713 = vmatpush2.msra.mxu0 0.0
    %1714 = vmatprep.subr.mxu0 0.0
    %1715 = vmatpush2.msra.mxu0 0.0
    %1716 = vmatprep.subr.mxu0 0.0
    %1717 = vmatpush2.msra.mxu0 0.0
    %1718 = vmatprep.subr.mxu0 0.0
    %1719 = vmatpush2.msra.mxu0 0.0
    %1720 = vmatprep.subr.mxu0 0.0
    %1721 = vmatpush2.msra.mxu0 0.0
    %1722 = vmatprep.subr.mxu0 0.0
    %1723 = vmatpush2.msra.mxu0 0.0
    %1724 = vmatprep.subr.mxu0 0.0
    %1725 = vmatpush2.msra.mxu0 0.0
    %1726 = vmatprep.subr.mxu0 0.0
    %1727 = vmatpush2.msra.mxu0 0.0
    %1728 = vmatprep.subr.mxu0 0.0
    %1729 = vmatpush2.msra.mxu0 0.0
    %1730 = vmatprep.subr.mxu0 0.0
    %1731 = vmatpush2.msra.mxu0 0.0
    %1732 = vmatprep.subr.mxu0 0.0
    %1733 = vmatpush2.msra.mxu0 0.0
    %1734 = vmatprep.mubr.f32.mxu0 0.0
    %1735 = vmatmul.mubr.f32.gmra.mxu0 %v1668
    %v1736 = vpop.f32.mrf.mxu0
    %v1737 = vadd.f32 0.0, %v1736
    %v1738 = vpop.f32.mrf.mxu0
    %1739 = vdwg.mxu0
    %v1741 = vrot.slane %v1737, 6
    %v1743 = vadd.f32 %v252, %v1741
    %v1744 = vadd.f32 %v1743, %v515
    %v1745 = vxor.u32 %v1744, 2147483648
    %v1746 = vmul.f32 %v1745, 1.442695
    %v1747 = vpow.pop %v1746
    %v1748 = vadd.f32 %v1747, 1.0
    %v1749 = vrcp.pop %v1748
    %v1750 = vmul.f32 1.0, %v1749
    %1751 = vmatprep.subr.mxu0 0.0
    %1752 = vmatpush1.msra.mxu0 0.0
    %1753 = vmatprep.subr.mxu0 0.0
    %1754 = vmatpush1.msra.mxu0 0.0
    %1755 = vmatprep.subr.mxu0 0.0
    %1756 = vmatpush1.msra.mxu0 0.0
    %1757 = vmatprep.subr.mxu0 0.0
    %1758 = vmatpush1.msra.mxu0 0.0
    %1759 = vmatprep.subr.mxu0 0.0
    %1760 = vmatpush1.msra.mxu0 0.0
    %1761 = vmatprep.subr.mxu0 0.0
    %1762 = vmatpush1.msra.mxu0 0.0
    %1763 = vmatprep.subr.mxu0 0.0
    %1764 = vmatpush1.msra.mxu0 0.0
    %1765 = vmatprep.subr.mxu0 0.0
    %1766 = vmatpush1.msra.mxu0 0.0
    %1767 = vmatprep.subr.mxu0 0.0
    %1768 = vmatpush1.msra.mxu0 0.0
    %1769 = vmatprep.subr.mxu0 0.0
    %1770 = vmatpush1.msra.mxu0 0.0
    %1771 = vmatprep.subr.mxu0 0.0
    %1772 = vmatpush1.msra.mxu0 0.0
    %1773 = vmatprep.subr.mxu0 0.0
    %1774 = vmatpush1.msra.mxu0 0.0
    %1775 = vmatprep.subr.mxu0 0.0
    %1776 = vmatpush1.msra.mxu0 %v431
    %1777 = vmatprep.subr.mxu0 0.0
    %1778 = vmatpush1.msra.mxu0 %v430
    %1779 = vmatprep.subr.mxu0 0.0
    %1780 = vmatpush1.msra.mxu0 %v429
    %1781 = vmatprep.subr.mxu0 0.0
    %1782 = vmatpush1.msra.mxu0 %v428
    %1783 = vmatprep.subr.mxu0 0.0
    %1784 = vmatpush2.msra.mxu0 0.0
    %1785 = vmatprep.subr.mxu0 0.0
    %1786 = vmatpush2.msra.mxu0 0.0
    %1787 = vmatprep.subr.mxu0 0.0
    %1788 = vmatpush2.msra.mxu0 0.0
    %1789 = vmatprep.subr.mxu0 0.0
    %1790 = vmatpush2.msra.mxu0 0.0
    %1791 = vmatprep.subr.mxu0 0.0
    %1792 = vmatpush2.msra.mxu0 0.0
    %1793 = vmatprep.subr.mxu0 0.0
    %1794 = vmatpush2.msra.mxu0 0.0
    %1795 = vmatprep.subr.mxu0 0.0
    %1796 = vmatpush2.msra.mxu0 0.0
    %1797 = vmatprep.subr.mxu0 0.0
    %1798 = vmatpush2.msra.mxu0 0.0
    %1799 = vmatprep.subr.mxu0 0.0
    %1800 = vmatpush2.msra.mxu0 0.0
    %1801 = vmatprep.subr.mxu0 0.0
    %1802 = vmatpush2.msra.mxu0 0.0
    %1803 = vmatprep.subr.mxu0 0.0
    %1804 = vmatpush2.msra.mxu0 0.0
    %1805 = vmatprep.subr.mxu0 0.0
    %1806 = vmatpush2.msra.mxu0 0.0
    %1807 = vmatprep.subr.mxu0 0.0
    %1808 = vmatpush2.msra.mxu0 0.0
    %1809 = vmatprep.subr.mxu0 0.0
    %1810 = vmatpush2.msra.mxu0 0.0
    %1811 = vmatprep.subr.mxu0 0.0
    %1812 = vmatpush2.msra.mxu0 0.0
    %1813 = vmatprep.subr.mxu0 0.0
    %1814 = vmatpush2.msra.mxu0 0.0
    %1815 = vmatprep.mubr.f32.mxu0 0.0
    %1816 = vmatmul.mubr.f32.gmra.mxu0 %v1668
    %v1817 = vpop.f32.mrf.mxu0
    %v1818 = vadd.f32 0.0, %v1817
    %v1819 = vpop.f32.mrf.mxu0
    %1820 = vdwg.mxu0
    %v1822 = vrot.slane %v1818, 6
    %v1824 = vadd.f32 %v336, %v1822
    %v1825 = vadd.f32 %v1824, %v597
    %v1826 = vxor.u32 %v1825, 2147483648
    %v1827 = vmul.f32 %v1826, 1.442695
    %v1828 = vpow.pop %v1827
    %v1829 = vadd.f32 %v1828, 1.0
    %v1830 = vrcp.pop %v1829
    %v1831 = vmul.f32 1.0, %v1830
    %1832 = vmatprep.subr.mxu0 0.0
    %1833 = vmatpush1.msra.mxu0 0.0
    %1834 = vmatprep.subr.mxu0 0.0
    %1835 = vmatpush1.msra.mxu0 0.0
    %1836 = vmatprep.subr.mxu0 0.0
    %1837 = vmatpush1.msra.mxu0 0.0
    %1838 = vmatprep.subr.mxu0 0.0
    %1839 = vmatpush1.msra.mxu0 0.0
    %1840 = vmatprep.subr.mxu0 0.0
    %1841 = vmatpush1.msra.mxu0 0.0
    %1842 = vmatprep.subr.mxu0 0.0
    %1843 = vmatpush1.msra.mxu0 0.0
    %1844 = vmatprep.subr.mxu0 0.0
    %1845 = vmatpush1.msra.mxu0 0.0
    %1846 = vmatprep.subr.mxu0 0.0
    %1847 = vmatpush1.msra.mxu0 0.0
    %1848 = vmatprep.subr.mxu0 0.0
    %1849 = vmatpush1.msra.mxu0 0.0
    %1850 = vmatprep.subr.mxu0 0.0
    %1851 = vmatpush1.msra.mxu0 0.0
    %1852 = vmatprep.subr.mxu0 0.0
    %1853 = vmatpush1.msra.mxu0 0.0
    %1854 = vmatprep.subr.mxu0 0.0
    %1855 = vmatpush1.msra.mxu0 0.0
    %1856 = vmatprep.subr.mxu0 0.0
    %1857 = vmatpush1.msra.mxu0 %v436
    %1858 = vmatprep.subr.mxu0 0.0
    %1859 = vmatpush1.msra.mxu0 %v435
    %1860 = vmatprep.subr.mxu0 0.0
    %1861 = vmatpush1.msra.mxu0 %v434
    %1862 = vmatprep.subr.mxu0 0.0
    %1863 = vmatpush1.msra.mxu0 %v433
    %1864 = vmatprep.subr.mxu0 0.0
    %1865 = vmatpush2.msra.mxu0 0.0
    %1866 = vmatprep.subr.mxu0 0.0
    %1867 = vmatpush2.msra.mxu0 0.0
    %1868 = vmatprep.subr.mxu0 0.0
    %1869 = vmatpush2.msra.mxu0 0.0
    %1870 = vmatprep.subr.mxu0 0.0
    %1871 = vmatpush2.msra.mxu0 0.0
    %1872 = vmatprep.subr.mxu0 0.0
    %1873 = vmatpush2.msra.mxu0 0.0
    %1874 = vmatprep.subr.mxu0 0.0
    %1875 = vmatpush2.msra.mxu0 0.0
    %1876 = vmatprep.subr.mxu0 0.0
    %1877 = vmatpush2.msra.mxu0 0.0
    %1878 = vmatprep.subr.mxu0 0.0
    %1879 = vmatpush2.msra.mxu0 0.0
    %1880 = vmatprep.subr.mxu0 0.0
    %1881 = vmatpush2.msra.mxu0 0.0
    %1882 = vmatprep.subr.mxu0 0.0
    %1883 = vmatpush2.msra.mxu0 0.0
    %1884 = vmatprep.subr.mxu0 0.0
    %1885 = vmatpush2.msra.mxu0 0.0
    %1886 = vmatprep.subr.mxu0 0.0
    %1887 = vmatpush2.msra.mxu0 0.0
    %1888 = vmatprep.subr.mxu0 0.0
    %1889 = vmatpush2.msra.mxu0 0.0
    %1890 = vmatprep.subr.mxu0 0.0
    %1891 = vmatpush2.msra.mxu0 0.0
    %1892 = vmatprep.subr.mxu0 0.0
    %1893 = vmatpush2.msra.mxu0 0.0
    %1894 = vmatprep.subr.mxu0 0.0
    %1895 = vmatpush2.msra.mxu0 0.0
    %1896 = vmatprep.mubr.f32.mxu0 0.0
    %1897 = vmatmul.mubr.f32.gmra.mxu0 %v1668
    %v1898 = vpop.f32.mrf.mxu0
    %v1899 = vadd.f32 %v608, %v1898
    %v1900 = vpop.f32.mrf.mxu0
    %1901 = vdwg.mxu0
    %v1903 = vrot.slane %v1899, 6
    %v1905 = vmul.f32 %v1750, %v1903
    %v1906 = vadd.f32 %v420, %v1905
    %v1907 = vtanh.pop %v1906
    %v1908 = vsub.f32 1.0, %v1831
    %v1909 = vmul.f32 %v1908, %v1907
    %v1910 = vrot.slane %v1666, 6
    %v1912 = vmul.f32 %v1831, %v1910
    %v1913 = vadd.f32 %v1909, %v1912
    %v1915 = vrot.slane %v1913, 2
    %v1916 = vsel %vm173, %v1915, 0
    %1918 = vmatprep.subr.mxu0 0.0
    %1919 = vmatpush1.msra.mxu0 0.0
    %1920 = vmatprep.subr.mxu0 0.0
    %1921 = vmatpush1.msra.mxu0 0.0
    %1922 = vmatprep.subr.mxu0 0.0
    %1923 = vmatpush1.msra.mxu0 0.0
    %1924 = vmatprep.subr.mxu0 0.0
    %1925 = vmatpush1.msra.mxu0 0.0
    %1926 = vmatprep.subr.mxu0 0.0
    %1927 = vmatpush1.msra.mxu0 0.0
    %1928 = vmatprep.subr.mxu0 0.0
    %1929 = vmatpush1.msra.mxu0 0.0
    %1930 = vmatprep.subr.mxu0 0.0
    %1931 = vmatpush1.msra.mxu0 0.0
    %1932 = vmatprep.subr.mxu0 0.0
    %1933 = vmatpush1.msra.mxu0 0.0
    %1934 = vmatprep.subr.mxu0 0.0
    %1935 = vmatpush1.msra.mxu0 0.0
    %1936 = vmatprep.subr.mxu0 0.0
    %1937 = vmatpush1.msra.mxu0 0.0
    %1938 = vmatprep.subr.mxu0 0.0
    %1939 = vmatpush1.msra.mxu0 0.0
    %1940 = vmatprep.subr.mxu0 0.0
    %1941 = vmatpush1.msra.mxu0 0.0
    %1942 = vmatprep.subr.mxu0 0.0
    %1943 = vmatpush1.msra.mxu0 %v426
    %1944 = vmatprep.subr.mxu0 0.0
    %1945 = vmatpush1.msra.mxu0 %v425
    %1946 = vmatprep.subr.mxu0 0.0
    %1947 = vmatpush1.msra.mxu0 %v424
    %1948 = vmatprep.subr.mxu0 0.0
    %1949 = vmatpush1.msra.mxu0 %v423
    %1950 = vmatprep.subr.mxu0 0.0
    %1951 = vmatpush2.msra.mxu0 0.0
    %1952 = vmatprep.subr.mxu0 0.0
    %1953 = vmatpush2.msra.mxu0 0.0
    %1954 = vmatprep.subr.mxu0 0.0
    %1955 = vmatpush2.msra.mxu0 0.0
    %1956 = vmatprep.subr.mxu0 0.0
    %1957 = vmatpush2.msra.mxu0 0.0
    %1958 = vmatprep.subr.mxu0 0.0
    %1959 = vmatpush2.msra.mxu0 0.0
    %1960 = vmatprep.subr.mxu0 0.0
    %1961 = vmatpush2.msra.mxu0 0.0
    %1962 = vmatprep.subr.mxu0 0.0
    %1963 = vmatpush2.msra.mxu0 0.0
    %1964 = vmatprep.subr.mxu0 0.0
    %1965 = vmatpush2.msra.mxu0 0.0
    %1966 = vmatprep.subr.mxu0 0.0
    %1967 = vmatpush2.msra.mxu0 0.0
    %1968 = vmatprep.subr.mxu0 0.0
    %1969 = vmatpush2.msra.mxu0 0.0
    %1970 = vmatprep.subr.mxu0 0.0
    %1971 = vmatpush2.msra.mxu0 0.0
    %1972 = vmatprep.subr.mxu0 0.0
    %1973 = vmatpush2.msra.mxu0 0.0
    %1974 = vmatprep.subr.mxu0 0.0
    %1975 = vmatpush2.msra.mxu0 0.0
    %1976 = vmatprep.subr.mxu0 0.0
    %1977 = vmatpush2.msra.mxu0 0.0
    %1978 = vmatprep.subr.mxu0 0.0
    %1979 = vmatpush2.msra.mxu0 0.0
    %1980 = vmatprep.subr.mxu0 0.0
    %1981 = vmatpush2.msra.mxu0 0.0
    %1982 = vmatprep.mubr.f32.mxu0 0.0
    %1983 = vmatmul.mubr.f32.gmra.mxu0 %v1916
    %v1984 = vpop.f32.mrf.mxu0
    %v1985 = vadd.f32 0.0, %v1984
    %v1986 = vpop.f32.mrf.mxu0
    %1987 = vdwg.mxu0
    %v1989 = vrot.slane %v1985, 4
    %v1991 = vadd.f32 %v252, %v1989
    %v1992 = vadd.f32 %v1991, %v515
    %v1993 = vxor.u32 %v1992, 2147483648
    %v1994 = vmul.f32 %v1993, 1.442695
    %v1995 = vpow.pop %v1994
    %v1996 = vadd.f32 %v1995, 1.0
    %v1997 = vrcp.pop %v1996
    %v1998 = vmul.f32 1.0, %v1997
    %1999 = vmatprep.subr.mxu0 0.0
    %2000 = vmatpush1.msra.mxu0 0.0
    %2001 = vmatprep.subr.mxu0 0.0
    %2002 = vmatpush1.msra.mxu0 0.0
    %2003 = vmatprep.subr.mxu0 0.0
    %2004 = vmatpush1.msra.mxu0 0.0
    %2005 = vmatprep.subr.mxu0 0.0
    %2006 = vmatpush1.msra.mxu0 0.0
    %2007 = vmatprep.subr.mxu0 0.0
    %2008 = vmatpush1.msra.mxu0 0.0
    %2009 = vmatprep.subr.mxu0 0.0
    %2010 = vmatpush1.msra.mxu0 0.0
    %2011 = vmatprep.subr.mxu0 0.0
    %2012 = vmatpush1.msra.mxu0 0.0
    %2013 = vmatprep.subr.mxu0 0.0
    %2014 = vmatpush1.msra.mxu0 0.0
    %2015 = vmatprep.subr.mxu0 0.0
    %2016 = vmatpush1.msra.mxu0 0.0
    %2017 = vmatprep.subr.mxu0 0.0
    %2018 = vmatpush1.msra.mxu0 0.0
    %2019 = vmatprep.subr.mxu0 0.0
    %2020 = vmatpush1.msra.mxu0 0.0
    %2021 = vmatprep.subr.mxu0 0.0
    %2022 = vmatpush1.msra.mxu0 0.0
    %2023 = vmatprep.subr.mxu0 0.0
    %2024 = vmatpush1.msra.mxu0 %v431
    %2025 = vmatprep.subr.mxu0 0.0
    %2026 = vmatpush1.msra.mxu0 %v430
    %2027 = vmatprep.subr.mxu0 0.0
    %2028 = vmatpush1.msra.mxu0 %v429
    %2029 = vmatprep.subr.mxu0 0.0
    %2030 = vmatpush1.msra.mxu0 %v428
    %2031 = vmatprep.subr.mxu0 0.0
    %2032 = vmatpush2.msra.mxu0 0.0
    %2033 = vmatprep.subr.mxu0 0.0
    %2034 = vmatpush2.msra.mxu0 0.0
    %2035 = vmatprep.subr.mxu0 0.0
    %2036 = vmatpush2.msra.mxu0 0.0
    %2037 = vmatprep.subr.mxu0 0.0
    %2038 = vmatpush2.msra.mxu0 0.0
    %2039 = vmatprep.subr.mxu0 0.0
    %2040 = vmatpush2.msra.mxu0 0.0
    %2041 = vmatprep.subr.mxu0 0.0
    %2042 = vmatpush2.msra.mxu0 0.0
    %2043 = vmatprep.subr.mxu0 0.0
    %2044 = vmatpush2.msra.mxu0 0.0
    %2045 = vmatprep.subr.mxu0 0.0
    %2046 = vmatpush2.msra.mxu0 0.0
    %2047 = vmatprep.subr.mxu0 0.0
    %2048 = vmatpush2.msra.mxu0 0.0
    %2049 = vmatprep.subr.mxu0 0.0
    %2050 = vmatpush2.msra.mxu0 0.0
    %2051 = vmatprep.subr.mxu0 0.0
    %2052 = vmatpush2.msra.mxu0 0.0
    %2053 = vmatprep.subr.mxu0 0.0
    %2054 = vmatpush2.msra.mxu0 0.0
    %2055 = vmatprep.subr.mxu0 0.0
    %2056 = vmatpush2.msra.mxu0 0.0
    %2057 = vmatprep.subr.mxu0 0.0
    %2058 = vmatpush2.msra.mxu0 0.0
    %2059 = vmatprep.subr.mxu0 0.0
    %2060 = vmatpush2.msra.mxu0 0.0
    %2061 = vmatprep.subr.mxu0 0.0
    %2062 = vmatpush2.msra.mxu0 0.0
    %2063 = vmatprep.mubr.f32.mxu0 0.0
    %2064 = vmatmul.mubr.f32.gmra.mxu0 %v1916
    %v2065 = vpop.f32.mrf.mxu0
    %v2066 = vadd.f32 0.0, %v2065
    %v2067 = vpop.f32.mrf.mxu0
    %2068 = vdwg.mxu0
    %v2070 = vrot.slane %v2066, 4
    %v2072 = vadd.f32 %v336, %v2070
    %v2073 = vadd.f32 %v2072, %v597
    %v2074 = vxor.u32 %v2073, 2147483648
    %v2075 = vmul.f32 %v2074, 1.442695
    %v2076 = vpow.pop %v2075
    %v2077 = vadd.f32 %v2076, 1.0
    %v2078 = vrcp.pop %v2077
    %v2079 = vmul.f32 1.0, %v2078
    %2080 = vmatprep.subr.mxu0 0.0
    %2081 = vmatpush1.msra.mxu0 0.0
    %2082 = vmatprep.subr.mxu0 0.0
    %2083 = vmatpush1.msra.mxu0 0.0
    %2084 = vmatprep.subr.mxu0 0.0
    %2085 = vmatpush1.msra.mxu0 0.0
    %2086 = vmatprep.subr.mxu0 0.0
    %2087 = vmatpush1.msra.mxu0 0.0
    %2088 = vmatprep.subr.mxu0 0.0
    %2089 = vmatpush1.msra.mxu0 0.0
    %2090 = vmatprep.subr.mxu0 0.0
    %2091 = vmatpush1.msra.mxu0 0.0
    %2092 = vmatprep.subr.mxu0 0.0
    %2093 = vmatpush1.msra.mxu0 0.0
    %2094 = vmatprep.subr.mxu0 0.0
    %2095 = vmatpush1.msra.mxu0 0.0
    %2096 = vmatprep.subr.mxu0 0.0
    %2097 = vmatpush1.msra.mxu0 0.0
    %2098 = vmatprep.subr.mxu0 0.0
    %2099 = vmatpush1.msra.mxu0 0.0
    %2100 = vmatprep.subr.mxu0 0.0
    %2101 = vmatpush1.msra.mxu0 0.0
    %2102 = vmatprep.subr.mxu0 0.0
    %2103 = vmatpush1.msra.mxu0 0.0
    %2104 = vmatprep.subr.mxu0 0.0
    %2105 = vmatpush1.msra.mxu0 %v436
    %2106 = vmatprep.subr.mxu0 0.0
    %2107 = vmatpush1.msra.mxu0 %v435
    %2108 = vmatprep.subr.mxu0 0.0
    %2109 = vmatpush1.msra.mxu0 %v434
    %2110 = vmatprep.subr.mxu0 0.0
    %2111 = vmatpush1.msra.mxu0 %v433
    %2112 = vmatprep.subr.mxu0 0.0
    %2113 = vmatpush2.msra.mxu0 0.0
    %2114 = vmatprep.subr.mxu0 0.0
    %2115 = vmatpush2.msra.mxu0 0.0
    %2116 = vmatprep.subr.mxu0 0.0
    %2117 = vmatpush2.msra.mxu0 0.0
    %2118 = vmatprep.subr.mxu0 0.0
    %2119 = vmatpush2.msra.mxu0 0.0
    %2120 = vmatprep.subr.mxu0 0.0
    %2121 = vmatpush2.msra.mxu0 0.0
    %2122 = vmatprep.subr.mxu0 0.0
    %2123 = vmatpush2.msra.mxu0 0.0
    %2124 = vmatprep.subr.mxu0 0.0
    %2125 = vmatpush2.msra.mxu0 0.0
    %2126 = vmatprep.subr.mxu0 0.0
    %2127 = vmatpush2.msra.mxu0 0.0
    %2128 = vmatprep.subr.mxu0 0.0
    %2129 = vmatpush2.msra.mxu0 0.0
    %2130 = vmatprep.subr.mxu0 0.0
    %2131 = vmatpush2.msra.mxu0 0.0
    %2132 = vmatprep.subr.mxu0 0.0
    %2133 = vmatpush2.msra.mxu0 0.0
    %2134 = vmatprep.subr.mxu0 0.0
    %2135 = vmatpush2.msra.mxu0 0.0
    %2136 = vmatprep.subr.mxu0 0.0
    %2137 = vmatpush2.msra.mxu0 0.0
    %2138 = vmatprep.subr.mxu0 0.0
    %2139 = vmatpush2.msra.mxu0 0.0
    %2140 = vmatprep.subr.mxu0 0.0
    %2141 = vmatpush2.msra.mxu0 0.0
    %2142 = vmatprep.subr.mxu0 0.0
    %2143 = vmatpush2.msra.mxu0 0.0
    %2144 = vmatprep.mubr.f32.mxu0 0.0
    %2145 = vmatmul.mubr.f32.gmra.mxu0 %v1916
    %v2146 = vpop.f32.mrf.mxu0
    %v2147 = vadd.f32 %v608, %v2146
    %v2148 = vpop.f32.mrf.mxu0
    %2149 = vdwg.mxu0
    %v2151 = vrot.slane %v2147, 4
    %v2153 = vmul.f32 %v1998, %v2151
    %v2154 = vadd.f32 %v420, %v2153
    %v2155 = vtanh.pop %v2154
    %v2156 = vsub.f32 1.0, %v2079
    %v2157 = vmul.f32 %v2156, %v2155
    %v2158 = vrot.slane %v1913, 6
    %v2160 = vmul.f32 %v2079, %v2158
    %v2161 = vadd.f32 %v2157, %v2160
    %v2163 = vrot.slane %v2161, 4
    %v2164 = vsel %vm173, %v2163, 0
    %2166 = vmatprep.subr.mxu0 0.0
    %2167 = vmatpush1.msra.mxu0 0.0
    %2168 = vmatprep.subr.mxu0 0.0
    %2169 = vmatpush1.msra.mxu0 0.0
    %2170 = vmatprep.subr.mxu0 0.0
    %2171 = vmatpush1.msra.mxu0 0.0
    %2172 = vmatprep.subr.mxu0 0.0
    %2173 = vmatpush1.msra.mxu0 0.0
    %2174 = vmatprep.subr.mxu0 0.0
    %2175 = vmatpush1.msra.mxu0 0.0
    %2176 = vmatprep.subr.mxu0 0.0
    %2177 = vmatpush1.msra.mxu0 0.0
    %2178 = vmatprep.subr.mxu0 0.0
    %2179 = vmatpush1.msra.mxu0 0.0
    %2180 = vmatprep.subr.mxu0 0.0
    %2181 = vmatpush1.msra.mxu0 0.0
    %2182 = vmatprep.subr.mxu0 0.0
    %2183 = vmatpush1.msra.mxu0 0.0
    %2184 = vmatprep.subr.mxu0 0.0
    %2185 = vmatpush1.msra.mxu0 0.0
    %2186 = vmatprep.subr.mxu0 0.0
    %2187 = vmatpush1.msra.mxu0 0.0
    %2188 = vmatprep.subr.mxu0 0.0
    %2189 = vmatpush1.msra.mxu0 0.0
    %2190 = vmatprep.subr.mxu0 0.0
    %2191 = vmatpush1.msra.mxu0 %v426
    %2192 = vmatprep.subr.mxu0 0.0
    %2193 = vmatpush1.msra.mxu0 %v425
    %2194 = vmatprep.subr.mxu0 0.0
    %2195 = vmatpush1.msra.mxu0 %v424
    %2196 = vmatprep.subr.mxu0 0.0
    %2197 = vmatpush1.msra.mxu0 %v423
    %2198 = vmatprep.subr.mxu0 0.0
    %2199 = vmatpush2.msra.mxu0 0.0
    %2200 = vmatprep.subr.mxu0 0.0
    %2201 = vmatpush2.msra.mxu0 0.0
    %2202 = vmatprep.subr.mxu0 0.0
    %2203 = vmatpush2.msra.mxu0 0.0
    %2204 = vmatprep.subr.mxu0 0.0
    %2205 = vmatpush2.msra.mxu0 0.0
    %2206 = vmatprep.subr.mxu0 0.0
    %2207 = vmatpush2.msra.mxu0 0.0
    %2208 = vmatprep.subr.mxu0 0.0
    %2209 = vmatpush2.msra.mxu0 0.0
    %2210 = vmatprep.subr.mxu0 0.0
    %2211 = vmatpush2.msra.mxu0 0.0
    %2212 = vmatprep.subr.mxu0 0.0
    %2213 = vmatpush2.msra.mxu0 0.0
    %2214 = vmatprep.subr.mxu0 0.0
    %2215 = vmatpush2.msra.mxu0 0.0
    %2216 = vmatprep.subr.mxu0 0.0
    %2217 = vmatpush2.msra.mxu0 0.0
    %2218 = vmatprep.subr.mxu0 0.0
    %2219 = vmatpush2.msra.mxu0 0.0
    %2220 = vmatprep.subr.mxu0 0.0
    %2221 = vmatpush2.msra.mxu0 0.0
    %2222 = vmatprep.subr.mxu0 0.0
    %2223 = vmatpush2.msra.mxu0 0.0
    %2224 = vmatprep.subr.mxu0 0.0
    %2225 = vmatpush2.msra.mxu0 0.0
    %2226 = vmatprep.subr.mxu0 0.0
    %2227 = vmatpush2.msra.mxu0 0.0
    %2228 = vmatprep.subr.mxu0 0.0
    %2229 = vmatpush2.msra.mxu0 0.0
    %2230 = vmatprep.mubr.f32.mxu0 0.0
    %2231 = vmatmul.mubr.f32.gmra.mxu0 %v2164
    %v2232 = vpop.f32.mrf.mxu0
    %v2233 = vadd.f32 0.0, %v2232
    %v2234 = vpop.f32.mrf.mxu0
    %2235 = vdwg.mxu0
    %v2237 = vrot.slane %v2233, 2
    %v2239 = vadd.f32 %v252, %v2237
    %v2240 = vadd.f32 %v2239, %v515
    %v2241 = vxor.u32 %v2240, 2147483648
    %v2242 = vmul.f32 %v2241, 1.442695
    %v2243 = vpow.pop %v2242
    %v2244 = vadd.f32 %v2243, 1.0
    %v2245 = vrcp.pop %v2244
    %v2246 = vmul.f32 1.0, %v2245
    %2247 = vmatprep.subr.mxu0 0.0
    %2248 = vmatpush1.msra.mxu0 0.0
    %2249 = vmatprep.subr.mxu0 0.0
    %2250 = vmatpush1.msra.mxu0 0.0
    %2251 = vmatprep.subr.mxu0 0.0
    %2252 = vmatpush1.msra.mxu0 0.0
    %2253 = vmatprep.subr.mxu0 0.0
    %2254 = vmatpush1.msra.mxu0 0.0
    %2255 = vmatprep.subr.mxu0 0.0
    %2256 = vmatpush1.msra.mxu0 0.0
    %2257 = vmatprep.subr.mxu0 0.0
    %2258 = vmatpush1.msra.mxu0 0.0
    %2259 = vmatprep.subr.mxu0 0.0
    %2260 = vmatpush1.msra.mxu0 0.0
    %2261 = vmatprep.subr.mxu0 0.0
    %2262 = vmatpush1.msra.mxu0 0.0
    %2263 = vmatprep.subr.mxu0 0.0
    %2264 = vmatpush1.msra.mxu0 0.0
    %2265 = vmatprep.subr.mxu0 0.0
    %2266 = vmatpush1.msra.mxu0 0.0
    %2267 = vmatprep.subr.mxu0 0.0
    %2268 = vmatpush1.msra.mxu0 0.0
    %2269 = vmatprep.subr.mxu0 0.0
    %2270 = vmatpush1.msra.mxu0 0.0
    %2271 = vmatprep.subr.mxu0 0.0
    %2272 = vmatpush1.msra.mxu0 %v431
    %2273 = vmatprep.subr.mxu0 0.0
    %2274 = vmatpush1.msra.mxu0 %v430
    %2275 = vmatprep.subr.mxu0 0.0
    %2276 = vmatpush1.msra.mxu0 %v429
    %2277 = vmatprep.subr.mxu0 0.0
    %2278 = vmatpush1.msra.mxu0 %v428
    %2279 = vmatprep.subr.mxu0 0.0
    %2280 = vmatpush2.msra.mxu0 0.0
    %2281 = vmatprep.subr.mxu0 0.0
    %2282 = vmatpush2.msra.mxu0 0.0
    %2283 = vmatprep.subr.mxu0 0.0
    %2284 = vmatpush2.msra.mxu0 0.0
    %2285 = vmatprep.subr.mxu0 0.0
    %2286 = vmatpush2.msra.mxu0 0.0
    %2287 = vmatprep.subr.mxu0 0.0
    %2288 = vmatpush2.msra.mxu0 0.0
    %2289 = vmatprep.subr.mxu0 0.0
    %2290 = vmatpush2.msra.mxu0 0.0
    %2291 = vmatprep.subr.mxu0 0.0
    %2292 = vmatpush2.msra.mxu0 0.0
    %2293 = vmatprep.subr.mxu0 0.0
    %2294 = vmatpush2.msra.mxu0 0.0
    %2295 = vmatprep.subr.mxu0 0.0
    %2296 = vmatpush2.msra.mxu0 0.0
    %2297 = vmatprep.subr.mxu0 0.0
    %2298 = vmatpush2.msra.mxu0 0.0
    %2299 = vmatprep.subr.mxu0 0.0
    %2300 = vmatpush2.msra.mxu0 0.0
    %2301 = vmatprep.subr.mxu0 0.0
    %2302 = vmatpush2.msra.mxu0 0.0
    %2303 = vmatprep.subr.mxu0 0.0
    %2304 = vmatpush2.msra.mxu0 0.0
    %2305 = vmatprep.subr.mxu0 0.0
    %2306 = vmatpush2.msra.mxu0 0.0
    %2307 = vmatprep.subr.mxu0 0.0
    %2308 = vmatpush2.msra.mxu0 0.0
    %2309 = vmatprep.subr.mxu0 0.0
    %2310 = vmatpush2.msra.mxu0 0.0
    %2311 = vmatprep.mubr.f32.mxu0 0.0
    %2312 = vmatmul.mubr.f32.gmra.mxu0 %v2164
    %v2313 = vpop.f32.mrf.mxu0
    %v2314 = vadd.f32 0.0, %v2313
    %v2315 = vpop.f32.mrf.mxu0
    %2316 = vdwg.mxu0
    %v2318 = vrot.slane %v2314, 2
    %v2320 = vadd.f32 %v336, %v2318
    %v2321 = vadd.f32 %v2320, %v597
    %v2322 = vxor.u32 %v2321, 2147483648
    %v2323 = vmul.f32 %v2322, 1.442695
    %v2324 = vpow.pop %v2323
    %v2325 = vadd.f32 %v2324, 1.0
    %v2326 = vrcp.pop %v2325
    %v2327 = vmul.f32 1.0, %v2326
    %2328 = vmatprep.subr.mxu0 0.0
    %2329 = vmatpush1.msra.mxu0 0.0
    %2330 = vmatprep.subr.mxu0 0.0
    %2331 = vmatpush1.msra.mxu0 0.0
    %2332 = vmatprep.subr.mxu0 0.0
    %2333 = vmatpush1.msra.mxu0 0.0
    %2334 = vmatprep.subr.mxu0 0.0
    %2335 = vmatpush1.msra.mxu0 0.0
    %2336 = vmatprep.subr.mxu0 0.0
    %2337 = vmatpush1.msra.mxu0 0.0
    %2338 = vmatprep.subr.mxu0 0.0
    %2339 = vmatpush1.msra.mxu0 0.0
    %2340 = vmatprep.subr.mxu0 0.0
    %2341 = vmatpush1.msra.mxu0 0.0
    %2342 = vmatprep.subr.mxu0 0.0
    %2343 = vmatpush1.msra.mxu0 0.0
    %2344 = vmatprep.subr.mxu0 0.0
    %2345 = vmatpush1.msra.mxu0 0.0
    %2346 = vmatprep.subr.mxu0 0.0
    %2347 = vmatpush1.msra.mxu0 0.0
    %2348 = vmatprep.subr.mxu0 0.0
    %2349 = vmatpush1.msra.mxu0 0.0
    %2350 = vmatprep.subr.mxu0 0.0
    %2351 = vmatpush1.msra.mxu0 0.0
    %2352 = vmatprep.subr.mxu0 0.0
    %2353 = vmatpush1.msra.mxu0 %v436
    %2354 = vmatprep.subr.mxu0 0.0
    %2355 = vmatpush1.msra.mxu0 %v435
    %2356 = vmatprep.subr.mxu0 0.0
    %2357 = vmatpush1.msra.mxu0 %v434
    %2358 = vmatprep.subr.mxu0 0.0
    %2359 = vmatpush1.msra.mxu0 %v433
    %2360 = vmatprep.subr.mxu0 0.0
    %2361 = vmatpush2.msra.mxu0 0.0
    %2362 = vmatprep.subr.mxu0 0.0
    %2363 = vmatpush2.msra.mxu0 0.0
    %2364 = vmatprep.subr.mxu0 0.0
    %2365 = vmatpush2.msra.mxu0 0.0
    %2366 = vmatprep.subr.mxu0 0.0
    %2367 = vmatpush2.msra.mxu0 0.0
    %2368 = vmatprep.subr.mxu0 0.0
    %2369 = vmatpush2.msra.mxu0 0.0
    %2370 = vmatprep.subr.mxu0 0.0
    %2371 = vmatpush2.msra.mxu0 0.0
    %2372 = vmatprep.subr.mxu0 0.0
    %2373 = vmatpush2.msra.mxu0 0.0
    %2374 = vmatprep.subr.mxu0 0.0
    %2375 = vmatpush2.msra.mxu0 0.0
    %2376 = vmatprep.subr.mxu0 0.0
    %2377 = vmatpush2.msra.mxu0 0.0
    %2378 = vmatprep.subr.mxu0 0.0
    %2379 = vmatpush2.msra.mxu0 0.0
    %2380 = vmatprep.subr.mxu0 0.0
    %2381 = vmatpush2.msra.mxu0 0.0
    %2382 = vmatprep.subr.mxu0 0.0
    %2383 = vmatpush2.msra.mxu0 0.0
    %2384 = vmatprep.subr.mxu0 0.0
    %2385 = vmatpush2.msra.mxu0 0.0
    %2386 = vmatprep.subr.mxu0 0.0
    %2387 = vmatpush2.msra.mxu0 0.0
    %2388 = vmatprep.subr.mxu0 0.0
    %2389 = vmatpush2.msra.mxu0 0.0
    %2390 = vmatprep.subr.mxu0 0.0
    %2391 = vmatpush2.msra.mxu0 0.0
    %2392 = vmatprep.mubr.f32.mxu0 0.0
    %2393 = vmatmul.mubr.f32.gmra.mxu0 %v2164
    %v2394 = vpop.f32.mrf.mxu0
    %v2395 = vadd.f32 %v608, %v2394
    %v2396 = vpop.f32.mrf.mxu0
    %2397 = vdwg.mxu0
    %v2399 = vrot.slane %v2395, 2
    %v2401 = vmul.f32 %v2246, %v2399
    %v2402 = vadd.f32 %v420, %v2401
    %v2403 = vtanh.pop %v2402
    %v2404 = vsub.f32 1.0, %v2327
    %v2405 = vmul.f32 %v2404, %v2403
    %v2406 = vrot.slane %v2161, 6
    %v2408 = vmul.f32 %v2327, %v2406
    %v2409 = vadd.f32 %v2405, %v2408
    %v2410 = vld [vmem:[%s1] sm:$0x3]
    %v2411 = vld [vmem:[%s13] sm:$0xff]
    %v2412 = vld [vmem:[%s14] sm:$0x1]
    %v2414 = vlaneseq
    %v2415 = vshrl.u32 %v2414, 7
    %v2416 = vsub.s32 0, %v2415
    %v2417 = vrot.slane %v2412, %v2416
    %vm2419 = vcmask 64512
    %v2421 = vsel %vm2419, %v2410, 0
    %2423 = vmatprep.subr.mxu0 0.0
    %2424 = vmatpush1.msra.mxu0 0.0
    %2425 = vmatprep.subr.mxu0 0.0
    %2426 = vmatpush1.msra.mxu0 0.0
    %2427 = vmatprep.subr.mxu0 0.0
    %2428 = vmatpush1.msra.mxu0 0.0
    %2429 = vmatprep.subr.mxu0 0.0
    %2430 = vmatpush1.msra.mxu0 0.0
    %2431 = vmatprep.subr.mxu0 0.0
    %2432 = vmatpush1.msra.mxu0 0.0
    %2433 = vmatprep.subr.mxu0 0.0
    %2434 = vmatpush1.msra.mxu0 0.0
    %2435 = vmatprep.subr.mxu0 0.0
    %2436 = vmatpush1.msra.mxu0 0.0
    %2437 = vmatprep.subr.mxu0 0.0
    %2438 = vmatpush1.msra.mxu0 0.0
    %2439 = vmatprep.subr.mxu0 0.0
    %2440 = vmatpush1.msra.mxu0 0.0
    %2441 = vmatprep.subr.mxu0 0.0
    %2442 = vmatpush1.msra.mxu0 0.0
    %2443 = vmatprep.subr.mxu0 0.0
    %2444 = vmatpush1.msra.mxu0 0.0
    %2445 = vmatprep.subr.mxu0 0.0
    %2446 = vmatpush1.msra.mxu0 0.0
    %2447 = vmatprep.subr.mxu0 0.0
    %2448 = vmatpush1.msra.mxu0 0.0
    %2449 = vmatprep.subr.mxu0 0.0
    %2450 = vmatpush1.msra.mxu0 0.0
    %2451 = vmatprep.subr.mxu0 0.0
    %2452 = vmatpush1.msra.mxu0 0.0
    %2453 = vmatprep.subr.mxu0 0.0
    %2454 = vmatpush1.msra.mxu0 %v2411
    %2455 = vmatprep.subr.mxu0 0.0
    %2456 = vmatpush2.msra.mxu0 0.0
    %2457 = vmatprep.subr.mxu0 0.0
    %2458 = vmatpush2.msra.mxu0 0.0
    %2459 = vmatprep.subr.mxu0 0.0
    %2460 = vmatpush2.msra.mxu0 0.0
    %2461 = vmatprep.subr.mxu0 0.0
    %2462 = vmatpush2.msra.mxu0 0.0
    %2463 = vmatprep.subr.mxu0 0.0
    %2464 = vmatpush2.msra.mxu0 0.0
    %2465 = vmatprep.subr.mxu0 0.0
    %2466 = vmatpush2.msra.mxu0 0.0
    %2467 = vmatprep.subr.mxu0 0.0
    %2468 = vmatpush2.msra.mxu0 0.0
    %2469 = vmatprep.subr.mxu0 0.0
    %2470 = vmatpush2.msra.mxu0 0.0
    %2471 = vmatprep.subr.mxu0 0.0
    %2472 = vmatpush2.msra.mxu0 0.0
    %2473 = vmatprep.subr.mxu0 0.0
    %2474 = vmatpush2.msra.mxu0 0.0
    %2475 = vmatprep.subr.mxu0 0.0
    %2476 = vmatpush2.msra.mxu0 0.0
    %2477 = vmatprep.subr.mxu0 0.0
    %2478 = vmatpush2.msra.mxu0 0.0
    %2479 = vmatprep.subr.mxu0 0.0
    %2480 = vmatpush2.msra.mxu0 0.0
    %2481 = vmatprep.subr.mxu0 0.0
    %2482 = vmatpush2.msra.mxu0 0.0
    %2483 = vmatprep.subr.mxu0 0.0
    %2484 = vmatpush2.msra.mxu0 0.0
    %2485 = vmatprep.subr.mxu0 0.0
    %2486 = vmatpush2.msra.mxu0 0.0
    %2487 = vmatprep.mubr.f32.mxu0 0.0
    %2488 = vmatmul.mubr.f32.gmra.mxu0 %v2421
    %v2489 = vpop.f32.mrf.mxu0
    %v2490 = vadd.f32 %v2417, %v2489
    %v2491 = vpop.f32.mrf.mxu0
    %2492 = vdwg.mxu0
    %v2493 = vmax.f32 %v2490, 0.0
    %v2494 = vld [vmem:[%s9] sm:$0xff]
    %v2495 = vld [vmem:[%s10] sm:$0xff]
    %v2496 = vld [vmem:[%s2] sm:$0xff]
    %v2497 = vld [vmem:[%s2 + $0x8] sm:$0xff]
    %v2498 = vld [vmem:[%s2 + $0x10] sm:$0xff]
    %v2499 = vld [vmem:[%s2 + $0x18] sm:$0xff]
    %v2500 = vld [vmem:[%s2 + $0x20] sm:$0xf]
    %2502 = vset.pattern.permute.xlu0 0
    %2503 = vperm.xlu0 %2502, %v2495
    %v2504 = vpop.permute.xlu0 %2503
    %vm2506 = vcmask 293888
    %v2508 = vsel %vm2506, %v2494, 0
    %vm2510 = vcmask 1043456
    %v2512 = vsel %vm2510, %v2500, 0
    %2514 = vmatprep.subr.mxu0 0.0
    %2515 = vmatpush1.msra.mxu0 0.0
    %2516 = vmatprep.subr.mxu0 0.0
    %2517 = vmatpush1.msra.mxu0 0.0
    %2518 = vmatprep.subr.mxu0 0.0
    %2519 = vmatpush1.msra.mxu0 0.0
    %2520 = vmatprep.subr.mxu0 0.0
    %2521 = vmatpush1.msra.mxu0 0.0
    %2522 = vmatprep.subr.mxu0 0.0
    %2523 = vmatpush1.msra.mxu0 0.0
    %2524 = vmatprep.subr.mxu0 0.0
    %2525 = vmatpush1.msra.mxu0 0.0
    %2526 = vmatprep.subr.mxu0 0.0
    %2527 = vmatpush1.msra.mxu0 0.0
    %2528 = vmatprep.subr.mxu0 0.0
    %2529 = vmatpush1.msra.mxu0 0.0
    %2530 = vmatprep.subr.mxu0 0.0
    %2531 = vmatpush1.msra.mxu0 0.0
    %2532 = vmatprep.subr.mxu0 0.0
    %2533 = vmatpush1.msra.mxu0 0.0
    %2534 = vmatprep.subr.mxu0 0.0
    %2535 = vmatpush1.msra.mxu0 0.0
    %2536 = vmatprep.subr.mxu0 0.0
    %2537 = vmatpush1.msra.mxu0 %v2512
    %2538 = vmatprep.subr.mxu0 0.0
    %2539 = vmatpush1.msra.mxu0 %v2499
    %2540 = vmatprep.subr.mxu0 0.0
    %2541 = vmatpush1.msra.mxu0 %v2498
    %2542 = vmatprep.subr.mxu0 0.0
    %2543 = vmatpush1.msra.mxu0 %v2497
    %2544 = vmatprep.subr.mxu0 0.0
    %2545 = vmatpush1.msra.mxu0 %v2496
    %2546 = vmatprep.subr.mxu0 0.0
    %2547 = vmatpush2.msra.mxu0 0.0
    %2548 = vmatprep.subr.mxu0 0.0
    %2549 = vmatpush2.msra.mxu0 0.0
    %2550 = vmatprep.subr.mxu0 0.0
    %2551 = vmatpush2.msra.mxu0 0.0
    %2552 = vmatprep.subr.mxu0 0.0
    %2553 = vmatpush2.msra.mxu0 0.0
    %2554 = vmatprep.subr.mxu0 0.0
    %2555 = vmatpush2.msra.mxu0 0.0
    %2556 = vmatprep.subr.mxu0 0.0
    %2557 = vmatpush2.msra.mxu0 0.0
    %2558 = vmatprep.subr.mxu0 0.0
    %2559 = vmatpush2.msra.mxu0 0.0
    %2560 = vmatprep.subr.mxu0 0.0
    %2561 = vmatpush2.msra.mxu0 0.0
    %2562 = vmatprep.subr.mxu0 0.0
    %2563 = vmatpush2.msra.mxu0 0.0
    %2564 = vmatprep.subr.mxu0 0.0
    %2565 = vmatpush2.msra.mxu0 0.0
    %2566 = vmatprep.subr.mxu0 0.0
    %2567 = vmatpush2.msra.mxu0 0.0
    %2568 = vmatprep.subr.mxu0 0.0
    %2569 = vmatpush2.msra.mxu0 0.0
    %2570 = vmatprep.subr.mxu0 0.0
    %2571 = vmatpush2.msra.mxu0 0.0
    %2572 = vmatprep.subr.mxu0 0.0
    %2573 = vmatpush2.msra.mxu0 0.0
    %2574 = vmatprep.subr.mxu0 0.0
    %2575 = vmatpush2.msra.mxu0 0.0
    %2576 = vmatprep.subr.mxu0 0.0
    %2577 = vmatpush2.msra.mxu0 0.0
    %2578 = vmatprep.mubr.f32.mxu0 0.0
    %2579 = vmatmul.mubr.f32.gmra.mxu0 %v2508
    %v2580 = vpop.f32.mrf.mxu0
    %v2581 = vadd.f32 %v2504, %v2580
    %v2582 = vpop.f32.mrf.mxu0
    %2583 = vdwg.mxu0
    %v2584 = vmax.f32 %v2581, 0.0
    %s2585 = scalar_lea.vmem %s2, 40
    %v2586 = vld [vmem:[%s2585] sm:$0xff]
    %v2587 = vld [vmem:[%s2585 + $0x8] sm:$0xff]
    %v2588 = vld [vmem:[%s2585 + $0x10] sm:$0xff]
    %v2589 = vld [vmem:[%s2585 + $0x18] sm:$0xff]
    %v2590 = vld [vmem:[%s2585 + $0x20] sm:$0xf]
    %v2592 = vsel %vm2510, %v2590, 0
    %2594 = vmatprep.subr.mxu0 0.0
    %2595 = vmatpush1.msra.mxu0 0.0
    %2596 = vmatprep.subr.mxu0 0.0
    %2597 = vmatpush1.msra.mxu0 0.0
    %2598 = vmatprep.subr.mxu0 0.0
    %2599 = vmatpush1.msra.mxu0 0.0
    %2600 = vmatprep.subr.mxu0 0.0
    %2601 = vmatpush1.msra.mxu0 0.0
    %2602 = vmatprep.subr.mxu0 0.0
    %2603 = vmatpush1.msra.mxu0 0.0
    %2604 = vmatprep.subr.mxu0 0.0
    %2605 = vmatpush1.msra.mxu0 0.0
    %2606 = vmatprep.subr.mxu0 0.0
    %2607 = vmatpush1.msra.mxu0 0.0
    %2608 = vmatprep.subr.mxu0 0.0
    %2609 = vmatpush1.msra.mxu0 0.0
    %2610 = vmatprep.subr.mxu0 0.0
    %2611 = vmatpush1.msra.mxu0 0.0
    %2612 = vmatprep.subr.mxu0 0.0
    %2613 = vmatpush1.msra.mxu0 0.0
    %2614 = vmatprep.subr.mxu0 0.0
    %2615 = vmatpush1.msra.mxu0 0.0
    %2616 = vmatprep.subr.mxu0 0.0
    %2617 = vmatpush1.msra.mxu0 %v2592
    %2618 = vmatprep.subr.mxu0 0.0
    %2619 = vmatpush1.msra.mxu0 %v2589
    %2620 = vmatprep.subr.mxu0 0.0
    %2621 = vmatpush1.msra.mxu0 %v2588
    %2622 = vmatprep.subr.mxu0 0.0
    %2623 = vmatpush1.msra.mxu0 %v2587
    %2624 = vmatprep.subr.mxu0 0.0
    %2625 = vmatpush1.msra.mxu0 %v2586
    %2626 = vmatprep.subr.mxu0 0.0
    %2627 = vmatpush2.msra.mxu0 0.0
    %2628 = vmatprep.subr.mxu0 0.0
    %2629 = vmatpush2.msra.mxu0 0.0
    %2630 = vmatprep.subr.mxu0 0.0
    %2631 = vmatpush2.msra.mxu0 0.0
    %2632 = vmatprep.subr.mxu0 0.0
    %2633 = vmatpush2.msra.mxu0 0.0
    %2634 = vmatprep.subr.mxu0 0.0
    %2635 = vmatpush2.msra.mxu0 0.0
    %2636 = vmatprep.subr.mxu0 0.0
    %2637 = vmatpush2.msra.mxu0 0.0
    %2638 = vmatprep.subr.mxu0 0.0
    %2639 = vmatpush2.msra.mxu0 0.0
    %2640 = vmatprep.subr.mxu0 0.0
    %2641 = vmatpush2.msra.mxu0 0.0
    %2642 = vmatprep.subr.mxu0 0.0
    %2643 = vmatpush2.msra.mxu0 0.0
    %2644 = vmatprep.subr.mxu0 0.0
    %2645 = vmatpush2.msra.mxu0 0.0
    %2646 = vmatprep.subr.mxu0 0.0
    %2647 = vmatpush2.msra.mxu0 0.0
    %2648 = vmatprep.subr.mxu0 0.0
    %2649 = vmatpush2.msra.mxu0 0.0
    %2650 = vmatprep.subr.mxu0 0.0
    %2651 = vmatpush2.msra.mxu0 0.0
    %2652 = vmatprep.subr.mxu0 0.0
    %2653 = vmatpush2.msra.mxu0 0.0
    %2654 = vmatprep.subr.mxu0 0.0
    %2655 = vmatpush2.msra.mxu0 0.0
    %2656 = vmatprep.subr.mxu0 0.0
    %2657 = vmatpush2.msra.mxu0 0.0
    %2658 = vmatprep.mubr.f32.mxu0 0.0
    %2659 = vmatmul.mubr.f32.gmra.mxu0 %v2508
    %v2660 = vpop.f32.mrf.mxu0
    %v2661 = vadd.f32 %v2504, %v2660
    %v2662 = vpop.f32.mrf.mxu0
    %2663 = vdwg.mxu0
    %v2664 = vmax.f32 %v2661, 0.0
    %v2666 = vrot.slane %v2664, 7
    %vm2668 = vcmask 1040384
    %v2669 = vsel %vm2668, %v2584, %v2666
    %v2670 = vld [vmem:[%s11] sm:$0xff]
    %v2671 = vld [vmem:[%s11 + $0x8] sm:$0xff]
    %v2672 = vld [vmem:[%s11 + $0x10] sm:$0xff]
    %v2673 = vld [vmem:[%s11 + $0x18] sm:$0xff]
    %v2674 = vld [vmem:[%s11 + $0x20] sm:$0xff]
    %v2675 = vld [vmem:[%s11 + $0x28] sm:$0xff]
    %v2676 = vld [vmem:[%s11 + $0x30] sm:$0xff]
    %v2677 = vld [vmem:[%s11 + $0x38] sm:$0xff]
    %v2678 = vld [vmem:[%s11 + $0x40] sm:$0xff]
    %v2679 = vld [vmem:[%s11 + $0x48] sm:$0xff]
    %v2680 = vld [vmem:[%s11 + $0x50] sm:$0xff]
    %v2681 = vld [vmem:[%s11 + $0x58] sm:$0xff]
    %v2682 = vld [vmem:[%s11 + $0x60] sm:$0xff]
    %v2683 = vld [vmem:[%s11 + $0x68] sm:$0xff]
    %v2684 = vld [vmem:[%s11 + $0x70] sm:$0xff]
    %v2685 = vld [vmem:[%s11 + $0x78] sm:$0xff]
    %v2687 = vrot.slane %v2584, 1
    %v2689 = vsel %vm2668, %v2687, %v2664
    %s2690 = scalar_lea.vmem %s11, 128
    %v2691 = vld [vmem:[%s2690] sm:$0xff]
    %v2692 = vld [vmem:[%s2690 + $0x8] sm:$0xff]
    %v2693 = vld [vmem:[%s2690 + $0x10] sm:$0xff]
    %v2694 = vld [vmem:[%s2690 + $0x18] sm:$0xff]
    %v2695 = vld [vmem:[%s2690 + $0x20] sm:$0xff]
    %v2696 = vld [vmem:[%s2690 + $0x28] sm:$0xff]
    %v2697 = vld [vmem:[%s2690 + $0x30] sm:$0xff]
    %v2698 = vld [vmem:[%s2690 + $0x38] sm:$0xff]
    %v2699 = vld [vmem:[%s2690 + $0x40] sm:$0xff]
    %v2700 = vld [vmem:[%s2690 + $0x48] sm:$0xff]
    %v2701 = vld [vmem:[%s2690 + $0x50] sm:$0xff]
    %v2702 = vld [vmem:[%s2690 + $0x58] sm:$0xff]
    %v2703 = vld [vmem:[%s2690 + $0x60] sm:$0xff]
    %v2704 = vld [vmem:[%s2690 + $0x68] sm:$0xff]
    %v2705 = vld [vmem:[%s2690 + $0x70] sm:$0xff]
    %v2706 = vld [vmem:[%s2690 + $0x78] sm:$0xff]
    %2707 = vmatprep.subr.mxu0 0.0
    %2708 = vmatpush1.msra.mxu0 %v2706
    %2709 = vmatprep.subr.mxu0 0.0
    %2710 = vmatpush1.msra.mxu0 %v2705
    %2711 = vmatprep.subr.mxu0 0.0
    %2712 = vmatpush1.msra.mxu0 %v2704
    %2713 = vmatprep.subr.mxu0 0.0
    %2714 = vmatpush1.msra.mxu0 %v2703
    %2715 = vmatprep.subr.mxu0 0.0
    %2716 = vmatpush1.msra.mxu0 %v2702
    %2717 = vmatprep.subr.mxu0 0.0
    %2718 = vmatpush1.msra.mxu0 %v2701
    %2719 = vmatprep.subr.mxu0 0.0
    %2720 = vmatpush1.msra.mxu0 %v2700
    %2721 = vmatprep.subr.mxu0 0.0
    %2722 = vmatpush1.msra.mxu0 %v2699
    %2723 = vmatprep.subr.mxu0 0.0
    %2724 = vmatpush1.msra.mxu0 %v2698
    %2725 = vmatprep.subr.mxu0 0.0
    %2726 = vmatpush1.msra.mxu0 %v2697
    %2727 = vmatprep.subr.mxu0 0.0
    %2728 = vmatpush1.msra.mxu0 %v2696
    %2729 = vmatprep.subr.mxu0 0.0
    %2730 = vmatpush1.msra.mxu0 %v2695
    %2731 = vmatprep.subr.mxu0 0.0
    %2732 = vmatpush1.msra.mxu0 %v2694
    %2733 = vmatprep.subr.mxu0 0.0
    %2734 = vmatpush1.msra.mxu0 %v2693
    %2735 = vmatprep.subr.mxu0 0.0
    %2736 = vmatpush1.msra.mxu0 %v2692
    %2737 = vmatprep.subr.mxu0 0.0
    %2738 = vmatpush1.msra.mxu0 %v2691
    %2739 = vmatprep.subr.mxu0 0.0
    %2740 = vmatpush2.msra.mxu0 0.0
    %2741 = vmatprep.subr.mxu0 0.0
    %2742 = vmatpush2.msra.mxu0 0.0
    %2743 = vmatprep.subr.mxu0 0.0
    %2744 = vmatpush2.msra.mxu0 0.0
    %2745 = vmatprep.subr.mxu0 0.0
    %2746 = vmatpush2.msra.mxu0 0.0
    %2747 = vmatprep.subr.mxu0 0.0
    %2748 = vmatpush2.msra.mxu0 0.0
    %2749 = vmatprep.subr.mxu0 0.0
    %2750 = vmatpush2.msra.mxu0 0.0
    %2751 = vmatprep.subr.mxu0 0.0
    %2752 = vmatpush2.msra.mxu0 0.0
    %2753 = vmatprep.subr.mxu0 0.0
    %2754 = vmatpush2.msra.mxu0 0.0
    %2755 = vmatprep.subr.mxu0 0.0
    %2756 = vmatpush2.msra.mxu0 0.0
    %2757 = vmatprep.subr.mxu0 0.0
    %2758 = vmatpush2.msra.mxu0 0.0
    %2759 = vmatprep.subr.mxu0 0.0
    %2760 = vmatpush2.msra.mxu0 0.0
    %2761 = vmatprep.subr.mxu0 0.0
    %2762 = vmatpush2.msra.mxu0 0.0
    %2763 = vmatprep.subr.mxu0 0.0
    %2764 = vmatpush2.msra.mxu0 0.0
    %2765 = vmatprep.subr.mxu0 0.0
    %2766 = vmatpush2.msra.mxu0 0.0
    %2767 = vmatprep.subr.mxu0 0.0
    %2768 = vmatpush2.msra.mxu0 0.0
    %2769 = vmatprep.subr.mxu0 0.0
    %2770 = vmatpush2.msra.mxu0 0.0
    %2771 = vmatprep.mubr.f32.mxu0 0.0
    %2772 = vmatmul.mubr.f32.gmra.mxu0 %v2689
    %v2773 = vpop.f32.mrf.mxu0
    %v2774 = vadd.f32 0.0, %v2773
    %v2775 = vpop.f32.mrf.mxu0
    %2776 = vdwg.mxu0
    %2777 = vmatprep.subr.mxu0 0.0
    %2778 = vmatpush1.msra.mxu0 %v2685
    %2779 = vmatprep.subr.mxu0 0.0
    %2780 = vmatpush1.msra.mxu0 %v2684
    %2781 = vmatprep.subr.mxu0 0.0
    %2782 = vmatpush1.msra.mxu0 %v2683
    %2783 = vmatprep.subr.mxu0 0.0
    %2784 = vmatpush1.msra.mxu0 %v2682
    %2785 = vmatprep.subr.mxu0 0.0
    %2786 = vmatpush1.msra.mxu0 %v2681
    %2787 = vmatprep.subr.mxu0 0.0
    %2788 = vmatpush1.msra.mxu0 %v2680
    %2789 = vmatprep.subr.mxu0 0.0
    %2790 = vmatpush1.msra.mxu0 %v2679
    %2791 = vmatprep.subr.mxu0 0.0
    %2792 = vmatpush1.msra.mxu0 %v2678
    %2793 = vmatprep.subr.mxu0 0.0
    %2794 = vmatpush1.msra.mxu0 %v2677
    %2795 = vmatprep.subr.mxu0 0.0
    %2796 = vmatpush1.msra.mxu0 %v2676
    %2797 = vmatprep.subr.mxu0 0.0
    %2798 = vmatpush1.msra.mxu0 %v2675
    %2799 = vmatprep.subr.mxu0 0.0
    %2800 = vmatpush1.msra.mxu0 %v2674
    %2801 = vmatprep.subr.mxu0 0.0
    %2802 = vmatpush1.msra.mxu0 %v2673
    %2803 = vmatprep.subr.mxu0 0.0
    %2804 = vmatpush1.msra.mxu0 %v2672
    %2805 = vmatprep.subr.mxu0 0.0
    %2806 = vmatpush1.msra.mxu0 %v2671
    %2807 = vmatprep.subr.mxu0 0.0
    %2808 = vmatpush1.msra.mxu0 %v2670
    %2809 = vmatprep.subr.mxu0 0.0
    %2810 = vmatpush2.msra.mxu0 0.0
    %2811 = vmatprep.subr.mxu0 0.0
    %2812 = vmatpush2.msra.mxu0 0.0
    %2813 = vmatprep.subr.mxu0 0.0
    %2814 = vmatpush2.msra.mxu0 0.0
    %2815 = vmatprep.subr.mxu0 0.0
    %2816 = vmatpush2.msra.mxu0 0.0
    %2817 = vmatprep.subr.mxu0 0.0
    %2818 = vmatpush2.msra.mxu0 0.0
    %2819 = vmatprep.subr.mxu0 0.0
    %2820 = vmatpush2.msra.mxu0 0.0
    %2821 = vmatprep.subr.mxu0 0.0
    %2822 = vmatpush2.msra.mxu0 0.0
    %2823 = vmatprep.subr.mxu0 0.0
    %2824 = vmatpush2.msra.mxu0 0.0
    %2825 = vmatprep.subr.mxu0 0.0
    %2826 = vmatpush2.msra.mxu0 0.0
    %2827 = vmatprep.subr.mxu0 0.0
    %2828 = vmatpush2.msra.mxu0 0.0
    %2829 = vmatprep.subr.mxu0 0.0
    %2830 = vmatpush2.msra.mxu0 0.0
    %2831 = vmatprep.subr.mxu0 0.0
    %2832 = vmatpush2.msra.mxu0 0.0
    %2833 = vmatprep.subr.mxu0 0.0
    %2834 = vmatpush2.msra.mxu0 0.0
    %2835 = vmatprep.subr.mxu0 0.0
    %2836 = vmatpush2.msra.mxu0 0.0
    %2837 = vmatprep.subr.mxu0 0.0
    %2838 = vmatpush2.msra.mxu0 0.0
    %2839 = vmatprep.subr.mxu0 0.0
    %2840 = vmatpush2.msra.mxu0 0.0
    %2841 = vmatprep.mubr.f32.mxu0 0.0
    %2842 = vmatmul.mubr.f32.gmra.mxu0 %v2669
    %v2843 = vpop.f32.mrf.mxu0
    %v2844 = vadd.f32 %v2774, %v2843
    %v2845 = vpop.f32.mrf.mxu0
    %2846 = vdwg.mxu0
    %v2847 = vrot.slane %v2584, 2
    %v2849 = vrot.slane %v2664, 1
    %v2851 = vsel %vm2668, %v2847, %v2849
    %s2852 = scalar_lea.vmem %s11, 256
    %v2853 = vld [vmem:[%s2852] sm:$0xff]
    %v2854 = vld [vmem:[%s2852 + $0x8] sm:$0xff]
    %v2855 = vld [vmem:[%s2852 + $0x10] sm:$0xff]
    %v2856 = vld [vmem:[%s2852 + $0x18] sm:$0xff]
    %v2857 = vld [vmem:[%s2852 + $0x20] sm:$0xff]
    %v2858 = vld [vmem:[%s2852 + $0x28] sm:$0xff]
    %v2859 = vld [vmem:[%s2852 + $0x30] sm:$0xff]
    %v2860 = vld [vmem:[%s2852 + $0x38] sm:$0xff]
    %v2861 = vld [vmem:[%s2852 + $0x40] sm:$0xff]
    %v2862 = vld [vmem:[%s2852 + $0x48] sm:$0xff]
    %v2863 = vld [vmem:[%s2852 + $0x50] sm:$0xff]
    %v2864 = vld [vmem:[%s2852 + $0x58] sm:$0xff]
    %v2865 = vld [vmem:[%s2852 + $0x60] sm:$0xff]
    %v2866 = vld [vmem:[%s2852 + $0x68] sm:$0xff]
    %v2867 = vld [vmem:[%s2852 + $0x70] sm:$0xff]
    %v2868 = vld [vmem:[%s2852 + $0x78] sm:$0xff]
    %2869 = vmatprep.subr.mxu0 0.0
    %2870 = vmatpush1.msra.mxu0 %v2868
    %2871 = vmatprep.subr.mxu0 0.0
    %2872 = vmatpush1.msra.mxu0 %v2867
    %2873 = vmatprep.subr.mxu0 0.0
    %2874 = vmatpush1.msra.mxu0 %v2866
    %2875 = vmatprep.subr.mxu0 0.0
    %2876 = vmatpush1.msra.mxu0 %v2865
    %2877 = vmatprep.subr.mxu0 0.0
    %2878 = vmatpush1.msra.mxu0 %v2864
    %2879 = vmatprep.subr.mxu0 0.0
    %2880 = vmatpush1.msra.mxu0 %v2863
    %2881 = vmatprep.subr.mxu0 0.0
    %2882 = vmatpush1.msra.mxu0 %v2862
    %2883 = vmatprep.subr.mxu0 0.0
    %2884 = vmatpush1.msra.mxu0 %v2861
    %2885 = vmatprep.subr.mxu0 0.0
    %2886 = vmatpush1.msra.mxu0 %v2860
    %2887 = vmatprep.subr.mxu0 0.0
    %2888 = vmatpush1.msra.mxu0 %v2859
    %2889 = vmatprep.subr.mxu0 0.0
    %2890 = vmatpush1.msra.mxu0 %v2858
    %2891 = vmatprep.subr.mxu0 0.0
    %2892 = vmatpush1.msra.mxu0 %v2857
    %2893 = vmatprep.subr.mxu0 0.0
    %2894 = vmatpush1.msra.mxu0 %v2856
    %2895 = vmatprep.subr.mxu0 0.0
    %2896 = vmatpush1.msra.mxu0 %v2855
    %2897 = vmatprep.subr.mxu0 0.0
    %2898 = vmatpush1.msra.mxu0 %v2854
    %2899 = vmatprep.subr.mxu0 0.0
    %2900 = vmatpush1.msra.mxu0 %v2853
    %2901 = vmatprep.subr.mxu0 0.0
    %2902 = vmatpush2.msra.mxu0 0.0
    %2903 = vmatprep.subr.mxu0 0.0
    %2904 = vmatpush2.msra.mxu0 0.0
    %2905 = vmatprep.subr.mxu0 0.0
    %2906 = vmatpush2.msra.mxu0 0.0
    %2907 = vmatprep.subr.mxu0 0.0
    %2908 = vmatpush2.msra.mxu0 0.0
    %2909 = vmatprep.subr.mxu0 0.0
    %2910 = vmatpush2.msra.mxu0 0.0
    %2911 = vmatprep.subr.mxu0 0.0
    %2912 = vmatpush2.msra.mxu0 0.0
    %2913 = vmatprep.subr.mxu0 0.0
    %2914 = vmatpush2.msra.mxu0 0.0
    %2915 = vmatprep.subr.mxu0 0.0
    %2916 = vmatpush2.msra.mxu0 0.0
    %2917 = vmatprep.subr.mxu0 0.0
    %2918 = vmatpush2.msra.mxu0 0.0
    %2919 = vmatprep.subr.mxu0 0.0
    %2920 = vmatpush2.msra.mxu0 0.0
    %2921 = vmatprep.subr.mxu0 0.0
    %2922 = vmatpush2.msra.mxu0 0.0
    %2923 = vmatprep.subr.mxu0 0.0
    %2924 = vmatpush2.msra.mxu0 0.0
    %2925 = vmatprep.subr.mxu0 0.0
    %2926 = vmatpush2.msra.mxu0 0.0
    %2927 = vmatprep.subr.mxu0 0.0
    %2928 = vmatpush2.msra.mxu0 0.0
    %2929 = vmatprep.subr.mxu0 0.0
    %2930 = vmatpush2.msra.mxu0 0.0
    %2931 = vmatprep.subr.mxu0 0.0
    %2932 = vmatpush2.msra.mxu0 0.0
    %2933 = vmatprep.mubr.f32.mxu0 0.0
    %2934 = vmatmul.mubr.f32.gmra.mxu0 %v2851
    %v2935 = vpop.f32.mrf.mxu0
    %v2936 = vadd.f32 0.0, %v2935
    %v2937 = vpop.f32.mrf.mxu0
    %2938 = vdwg.mxu0
    %v2939 = vadd.f32 %v2844, %v2936
    %v2940 = vrot.slane %v2584, 3
    %v2942 = vrot.slane %v2664, 2
    %v2944 = vsel %vm2668, %v2940, %v2942
    %s2945 = scalar_lea.vmem %s11, 384
    %v2946 = vld [vmem:[%s2945] sm:$0xff]
    %v2947 = vld [vmem:[%s2945 + $0x8] sm:$0xff]
    %v2948 = vld [vmem:[%s2945 + $0x10] sm:$0xff]
    %v2949 = vld [vmem:[%s2945 + $0x18] sm:$0xff]
    %v2950 = vld [vmem:[%s2945 + $0x20] sm:$0xff]
    %v2951 = vld [vmem:[%s2945 + $0x28] sm:$0xff]
    %v2952 = vld [vmem:[%s2945 + $0x30] sm:$0xff]
    %v2953 = vld [vmem:[%s2945 + $0x38] sm:$0xff]
    %v2954 = vld [vmem:[%s2945 + $0x40] sm:$0xff]
    %v2955 = vld [vmem:[%s2945 + $0x48] sm:$0xff]
    %v2956 = vld [vmem:[%s2945 + $0x50] sm:$0xff]
    %v2957 = vld [vmem:[%s2945 + $0x58] sm:$0xff]
    %v2958 = vld [vmem:[%s2945 + $0x60] sm:$0xff]
    %v2959 = vld [vmem:[%s2945 + $0x68] sm:$0xff]
    %v2960 = vld [vmem:[%s2945 + $0x70] sm:$0xff]
    %v2961 = vld [vmem:[%s2945 + $0x78] sm:$0xff]
    %2962 = vmatprep.subr.mxu0 0.0
    %2963 = vmatpush1.msra.mxu0 %v2961
    %2964 = vmatprep.subr.mxu0 0.0
    %2965 = vmatpush1.msra.mxu0 %v2960
    %2966 = vmatprep.subr.mxu0 0.0
    %2967 = vmatpush1.msra.mxu0 %v2959
    %2968 = vmatprep.subr.mxu0 0.0
    %2969 = vmatpush1.msra.mxu0 %v2958
    %2970 = vmatprep.subr.mxu0 0.0
    %2971 = vmatpush1.msra.mxu0 %v2957
    %2972 = vmatprep.subr.mxu0 0.0
    %2973 = vmatpush1.msra.mxu0 %v2956
    %2974 = vmatprep.subr.mxu0 0.0
    %2975 = vmatpush1.msra.mxu0 %v2955
    %2976 = vmatprep.subr.mxu0 0.0
    %2977 = vmatpush1.msra.mxu0 %v2954
    %2978 = vmatprep.subr.mxu0 0.0
    %2979 = vmatpush1.msra.mxu0 %v2953
    %2980 = vmatprep.subr.mxu0 0.0
    %2981 = vmatpush1.msra.mxu0 %v2952
    %2982 = vmatprep.subr.mxu0 0.0
    %2983 = vmatpush1.msra.mxu0 %v2951
    %2984 = vmatprep.subr.mxu0 0.0
    %2985 = vmatpush1.msra.mxu0 %v2950
    %2986 = vmatprep.subr.mxu0 0.0
    %2987 = vmatpush1.msra.mxu0 %v2949
    %2988 = vmatprep.subr.mxu0 0.0
    %2989 = vmatpush1.msra.mxu0 %v2948
    %2990 = vmatprep.subr.mxu0 0.0
    %2991 = vmatpush1.msra.mxu0 %v2947
    %2992 = vmatprep.subr.mxu0 0.0
    %2993 = vmatpush1.msra.mxu0 %v2946
    %2994 = vmatprep.subr.mxu0 0.0
    %2995 = vmatpush2.msra.mxu0 0.0
    %2996 = vmatprep.subr.mxu0 0.0
    %2997 = vmatpush2.msra.mxu0 0.0
    %2998 = vmatprep.subr.mxu0 0.0
    %2999 = vmatpush2.msra.mxu0 0.0
    %3000 = vmatprep.subr.mxu0 0.0
    %3001 = vmatpush2.msra.mxu0 0.0
    %3002 = vmatprep.subr.mxu0 0.0
    %3003 = vmatpush2.msra.mxu0 0.0
    %3004 = vmatprep.subr.mxu0 0.0
    %3005 = vmatpush2.msra.mxu0 0.0
    %3006 = vmatprep.subr.mxu0 0.0
    %3007 = vmatpush2.msra.mxu0 0.0
    %3008 = vmatprep.subr.mxu0 0.0
    %3009 = vmatpush2.msra.mxu0 0.0
    %3010 = vmatprep.subr.mxu0 0.0
    %3011 = vmatpush2.msra.mxu0 0.0
    %3012 = vmatprep.subr.mxu0 0.0
    %3013 = vmatpush2.msra.mxu0 0.0
    %3014 = vmatprep.subr.mxu0 0.0
    %3015 = vmatpush2.msra.mxu0 0.0
    %3016 = vmatprep.subr.mxu0 0.0
    %3017 = vmatpush2.msra.mxu0 0.0
    %3018 = vmatprep.subr.mxu0 0.0
    %3019 = vmatpush2.msra.mxu0 0.0
    %3020 = vmatprep.subr.mxu0 0.0
    %3021 = vmatpush2.msra.mxu0 0.0
    %3022 = vmatprep.subr.mxu0 0.0
    %3023 = vmatpush2.msra.mxu0 0.0
    %3024 = vmatprep.subr.mxu0 0.0
    %3025 = vmatpush2.msra.mxu0 0.0
    %3026 = vmatprep.mubr.f32.mxu0 0.0
    %3027 = vmatmul.mubr.f32.gmra.mxu0 %v2944
    %v3028 = vpop.f32.mrf.mxu0
    %v3029 = vadd.f32 0.0, %v3028
    %v3030 = vpop.f32.mrf.mxu0
    %3031 = vdwg.mxu0
    %v3032 = vadd.f32 %v2939, %v3029
    %v3033 = vrot.slane %v2584, 4
    %v3035 = vrot.slane %v2664, 3
    %v3037 = vsel %vm2668, %v3033, %v3035
    %s3038 = scalar_lea.vmem %s11, 512
    %v3039 = vld [vmem:[%s3038] sm:$0xff]
    %v3040 = vld [vmem:[%s3038 + $0x8] sm:$0xff]
    %v3041 = vld [vmem:[%s3038 + $0x10] sm:$0xff]
    %v3042 = vld [vmem:[%s3038 + $0x18] sm:$0xff]
    %v3043 = vld [vmem:[%s3038 + $0x20] sm:$0xff]
    %v3044 = vld [vmem:[%s3038 + $0x28] sm:$0xff]
    %v3045 = vld [vmem:[%s3038 + $0x30] sm:$0xff]
    %v3046 = vld [vmem:[%s3038 + $0x38] sm:$0xff]
    %v3047 = vld [vmem:[%s3038 + $0x40] sm:$0xff]
    %v3048 = vld [vmem:[%s3038 + $0x48] sm:$0xff]
    %v3049 = vld [vmem:[%s3038 + $0x50] sm:$0xff]
    %v3050 = vld [vmem:[%s3038 + $0x58] sm:$0xff]
    %v3051 = vld [vmem:[%s3038 + $0x60] sm:$0xff]
    %v3052 = vld [vmem:[%s3038 + $0x68] sm:$0xff]
    %v3053 = vld [vmem:[%s3038 + $0x70] sm:$0xff]
    %v3054 = vld [vmem:[%s3038 + $0x78] sm:$0xff]
    %3055 = vmatprep.subr.mxu0 0.0
    %3056 = vmatpush1.msra.mxu0 %v3054
    %3057 = vmatprep.subr.mxu0 0.0
    %3058 = vmatpush1.msra.mxu0 %v3053
    %3059 = vmatprep.subr.mxu0 0.0
    %3060 = vmatpush1.msra.mxu0 %v3052
    %3061 = vmatprep.subr.mxu0 0.0
    %3062 = vmatpush1.msra.mxu0 %v3051
    %3063 = vmatprep.subr.mxu0 0.0
    %3064 = vmatpush1.msra.mxu0 %v3050
    %3065 = vmatprep.subr.mxu0 0.0
    %3066 = vmatpush1.msra.mxu0 %v3049
    %3067 = vmatprep.subr.mxu0 0.0
    %3068 = vmatpush1.msra.mxu0 %v3048
    %3069 = vmatprep.subr.mxu0 0.0
    %3070 = vmatpush1.msra.mxu0 %v3047
    %3071 = vmatprep.subr.mxu0 0.0
    %3072 = vmatpush1.msra.mxu0 %v3046
    %3073 = vmatprep.subr.mxu0 0.0
    %3074 = vmatpush1.msra.mxu0 %v3045
    %3075 = vmatprep.subr.mxu0 0.0
    %3076 = vmatpush1.msra.mxu0 %v3044
    %3077 = vmatprep.subr.mxu0 0.0
    %3078 = vmatpush1.msra.mxu0 %v3043
    %3079 = vmatprep.subr.mxu0 0.0
    %3080 = vmatpush1.msra.mxu0 %v3042
    %3081 = vmatprep.subr.mxu0 0.0
    %3082 = vmatpush1.msra.mxu0 %v3041
    %3083 = vmatprep.subr.mxu0 0.0
    %3084 = vmatpush1.msra.mxu0 %v3040
    %3085 = vmatprep.subr.mxu0 0.0
    %3086 = vmatpush1.msra.mxu0 %v3039
    %3087 = vmatprep.subr.mxu0 0.0
    %3088 = vmatpush2.msra.mxu0 0.0
    %3089 = vmatprep.subr.mxu0 0.0
    %3090 = vmatpush2.msra.mxu0 0.0
    %3091 = vmatprep.subr.mxu0 0.0
    %3092 = vmatpush2.msra.mxu0 0.0
    %3093 = vmatprep.subr.mxu0 0.0
    %3094 = vmatpush2.msra.mxu0 0.0
    %3095 = vmatprep.subr.mxu0 0.0
    %3096 = vmatpush2.msra.mxu0 0.0
    %3097 = vmatprep.subr.mxu0 0.0
    %3098 = vmatpush2.msra.mxu0 0.0
    %3099 = vmatprep.subr.mxu0 0.0
    %3100 = vmatpush2.msra.mxu0 0.0
    %3101 = vmatprep.subr.mxu0 0.0
    %3102 = vmatpush2.msra.mxu0 0.0
    %3103 = vmatprep.subr.mxu0 0.0
    %3104 = vmatpush2.msra.mxu0 0.0
    %3105 = vmatprep.subr.mxu0 0.0
    %3106 = vmatpush2.msra.mxu0 0.0
    %3107 = vmatprep.subr.mxu0 0.0
    %3108 = vmatpush2.msra.mxu0 0.0
    %3109 = vmatprep.subr.mxu0 0.0
    %3110 = vmatpush2.msra.mxu0 0.0
    %3111 = vmatprep.subr.mxu0 0.0
    %3112 = vmatpush2.msra.mxu0 0.0
    %3113 = vmatprep.subr.mxu0 0.0
    %3114 = vmatpush2.msra.mxu0 0.0
    %3115 = vmatprep.subr.mxu0 0.0
    %3116 = vmatpush2.msra.mxu0 0.0
    %3117 = vmatprep.subr.mxu0 0.0
    %3118 = vmatpush2.msra.mxu0 0.0
    %3119 = vmatprep.mubr.f32.mxu0 0.0
    %3120 = vmatmul.mubr.f32.gmra.mxu0 %v3037
    %v3121 = vpop.f32.mrf.mxu0
    %v3122 = vadd.f32 0.0, %v3121
    %v3123 = vpop.f32.mrf.mxu0
    %3124 = vdwg.mxu0
    %v3125 = vadd.f32 %v3032, %v3122
    %v3126 = vrot.slane %v2584, 5
    %v3128 = vrot.slane %v2664, 4
    %v3130 = vsel %vm2668, %v3126, %v3128
    %s3131 = scalar_lea.vmem %s11, 640
    %v3132 = vld [vmem:[%s3131] sm:$0xff]
    %v3133 = vld [vmem:[%s3131 + $0x8] sm:$0xff]
    %v3134 = vld [vmem:[%s3131 + $0x10] sm:$0xff]
    %v3135 = vld [vmem:[%s3131 + $0x18] sm:$0xff]
    %v3136 = vld [vmem:[%s3131 + $0x20] sm:$0xff]
    %v3137 = vld [vmem:[%s3131 + $0x28] sm:$0xff]
    %v3138 = vld [vmem:[%s3131 + $0x30] sm:$0xff]
    %v3139 = vld [vmem:[%s3131 + $0x38] sm:$0xff]
    %v3140 = vld [vmem:[%s3131 + $0x40] sm:$0xff]
    %v3141 = vld [vmem:[%s3131 + $0x48] sm:$0xff]
    %v3142 = vld [vmem:[%s3131 + $0x50] sm:$0xff]
    %v3143 = vld [vmem:[%s3131 + $0x58] sm:$0xff]
    %v3144 = vld [vmem:[%s3131 + $0x60] sm:$0xff]
    %v3145 = vld [vmem:[%s3131 + $0x68] sm:$0xff]
    %v3146 = vld [vmem:[%s3131 + $0x70] sm:$0xff]
    %v3147 = vld [vmem:[%s3131 + $0x78] sm:$0xff]
    %3148 = vmatprep.subr.mxu0 0.0
    %3149 = vmatpush1.msra.mxu0 %v3147
    %3150 = vmatprep.subr.mxu0 0.0
    %3151 = vmatpush1.msra.mxu0 %v3146
    %3152 = vmatprep.subr.mxu0 0.0
    %3153 = vmatpush1.msra.mxu0 %v3145
    %3154 = vmatprep.subr.mxu0 0.0
    %3155 = vmatpush1.msra.mxu0 %v3144
    %3156 = vmatprep.subr.mxu0 0.0
    %3157 = vmatpush1.msra.mxu0 %v3143
    %3158 = vmatprep.subr.mxu0 0.0
    %3159 = vmatpush1.msra.mxu0 %v3142
    %3160 = vmatprep.subr.mxu0 0.0
    %3161 = vmatpush1.msra.mxu0 %v3141
    %3162 = vmatprep.subr.mxu0 0.0
    %3163 = vmatpush1.msra.mxu0 %v3140
    %3164 = vmatprep.subr.mxu0 0.0
    %3165 = vmatpush1.msra.mxu0 %v3139
    %3166 = vmatprep.subr.mxu0 0.0
    %3167 = vmatpush1.msra.mxu0 %v3138
    %3168 = vmatprep.subr.mxu0 0.0
    %3169 = vmatpush1.msra.mxu0 %v3137
    %3170 = vmatprep.subr.mxu0 0.0
    %3171 = vmatpush1.msra.mxu0 %v3136
    %3172 = vmatprep.subr.mxu0 0.0
    %3173 = vmatpush1.msra.mxu0 %v3135
    %3174 = vmatprep.subr.mxu0 0.0
    %3175 = vmatpush1.msra.mxu0 %v3134
    %3176 = vmatprep.subr.mxu0 0.0
    %3177 = vmatpush1.msra.mxu0 %v3133
    %3178 = vmatprep.subr.mxu0 0.0
    %3179 = vmatpush1.msra.mxu0 %v3132
    %3180 = vmatprep.subr.mxu0 0.0
    %3181 = vmatpush2.msra.mxu0 0.0
    %3182 = vmatprep.subr.mxu0 0.0
    %3183 = vmatpush2.msra.mxu0 0.0
    %3184 = vmatprep.subr.mxu0 0.0
    %3185 = vmatpush2.msra.mxu0 0.0
    %3186 = vmatprep.subr.mxu0 0.0
    %3187 = vmatpush2.msra.mxu0 0.0
    %3188 = vmatprep.subr.mxu0 0.0
    %3189 = vmatpush2.msra.mxu0 0.0
    %3190 = vmatprep.subr.mxu0 0.0
    %3191 = vmatpush2.msra.mxu0 0.0
    %3192 = vmatprep.subr.mxu0 0.0
    %3193 = vmatpush2.msra.mxu0 0.0
    %3194 = vmatprep.subr.mxu0 0.0
    %3195 = vmatpush2.msra.mxu0 0.0
    %3196 = vmatprep.subr.mxu0 0.0
    %3197 = vmatpush2.msra.mxu0 0.0
    %3198 = vmatprep.subr.mxu0 0.0
    %3199 = vmatpush2.msra.mxu0 0.0
    %3200 = vmatprep.subr.mxu0 0.0
    %3201 = vmatpush2.msra.mxu0 0.0
    %3202 = vmatprep.subr.mxu0 0.0
    %3203 = vmatpush2.msra.mxu0 0.0
    %3204 = vmatprep.subr.mxu0 0.0
    %3205 = vmatpush2.msra.mxu0 0.0
    %3206 = vmatprep.subr.mxu0 0.0
    %3207 = vmatpush2.msra.mxu0 0.0
    %3208 = vmatprep.subr.mxu0 0.0
    %3209 = vmatpush2.msra.mxu0 0.0
    %3210 = vmatprep.subr.mxu0 0.0
    %3211 = vmatpush2.msra.mxu0 0.0
    %3212 = vmatprep.mubr.f32.mxu0 0.0
    %3213 = vmatmul.mubr.f32.gmra.mxu0 %v3130
    %v3214 = vpop.f32.mrf.mxu0
    %v3215 = vadd.f32 0.0, %v3214
    %v3216 = vpop.f32.mrf.mxu0
    %3217 = vdwg.mxu0
    %v3218 = vadd.f32 %v3125, %v3215
    %v3219 = vrot.slane %v2584, 6
    %v3221 = vrot.slane %v2664, 5
    %v3223 = vsel %vm2668, %v3219, %v3221
    %s3224 = scalar_lea.vmem %s11, 768
    %v3225 = vld [vmem:[%s3224] sm:$0xff]
    %v3226 = vld [vmem:[%s3224 + $0x8] sm:$0xff]
    %v3227 = vld [vmem:[%s3224 + $0x10] sm:$0xff]
    %v3228 = vld [vmem:[%s3224 + $0x18] sm:$0xff]
    %v3229 = vld [vmem:[%s3224 + $0x20] sm:$0xff]
    %v3230 = vld [vmem:[%s3224 + $0x28] sm:$0xff]
    %v3231 = vld [vmem:[%s3224 + $0x30] sm:$0xff]
    %v3232 = vld [vmem:[%s3224 + $0x38] sm:$0xff]
    %v3233 = vld [vmem:[%s3224 + $0x40] sm:$0xff]
    %v3234 = vld [vmem:[%s3224 + $0x48] sm:$0xff]
    %v3235 = vld [vmem:[%s3224 + $0x50] sm:$0xff]
    %v3236 = vld [vmem:[%s3224 + $0x58] sm:$0xff]
    %v3237 = vld [vmem:[%s3224 + $0x60] sm:$0xff]
    %v3238 = vld [vmem:[%s3224 + $0x68] sm:$0xff]
    %v3239 = vld [vmem:[%s3224 + $0x70] sm:$0xff]
    %v3240 = vld [vmem:[%s3224 + $0x78] sm:$0xff]
    %3241 = vmatprep.subr.mxu0 0.0
    %3242 = vmatpush1.msra.mxu0 %v3240
    %3243 = vmatprep.subr.mxu0 0.0
    %3244 = vmatpush1.msra.mxu0 %v3239
    %3245 = vmatprep.subr.mxu0 0.0
    %3246 = vmatpush1.msra.mxu0 %v3238
    %3247 = vmatprep.subr.mxu0 0.0
    %3248 = vmatpush1.msra.mxu0 %v3237
    %3249 = vmatprep.subr.mxu0 0.0
    %3250 = vmatpush1.msra.mxu0 %v3236
    %3251 = vmatprep.subr.mxu0 0.0
    %3252 = vmatpush1.msra.mxu0 %v3235
    %3253 = vmatprep.subr.mxu0 0.0
    %3254 = vmatpush1.msra.mxu0 %v3234
    %3255 = vmatprep.subr.mxu0 0.0
    %3256 = vmatpush1.msra.mxu0 %v3233
    %3257 = vmatprep.subr.mxu0 0.0
    %3258 = vmatpush1.msra.mxu0 %v3232
    %3259 = vmatprep.subr.mxu0 0.0
    %3260 = vmatpush1.msra.mxu0 %v3231
    %3261 = vmatprep.subr.mxu0 0.0
    %3262 = vmatpush1.msra.mxu0 %v3230
    %3263 = vmatprep.subr.mxu0 0.0
    %3264 = vmatpush1.msra.mxu0 %v3229
    %3265 = vmatprep.subr.mxu0 0.0
    %3266 = vmatpush1.msra.mxu0 %v3228
    %3267 = vmatprep.subr.mxu0 0.0
    %3268 = vmatpush1.msra.mxu0 %v3227
    %3269 = vmatprep.subr.mxu0 0.0
    %3270 = vmatpush1.msra.mxu0 %v3226
    %3271 = vmatprep.subr.mxu0 0.0
    %3272 = vmatpush1.msra.mxu0 %v3225
    %3273 = vmatprep.subr.mxu0 0.0
    %3274 = vmatpush2.msra.mxu0 0.0
    %3275 = vmatprep.subr.mxu0 0.0
    %3276 = vmatpush2.msra.mxu0 0.0
    %3277 = vmatprep.subr.mxu0 0.0
    %3278 = vmatpush2.msra.mxu0 0.0
    %3279 = vmatprep.subr.mxu0 0.0
    %3280 = vmatpush2.msra.mxu0 0.0
    %3281 = vmatprep.subr.mxu0 0.0
    %3282 = vmatpush2.msra.mxu0 0.0
    %3283 = vmatprep.subr.mxu0 0.0
    %3284 = vmatpush2.msra.mxu0 0.0
    %3285 = vmatprep.subr.mxu0 0.0
    %3286 = vmatpush2.msra.mxu0 0.0
    %3287 = vmatprep.subr.mxu0 0.0
    %3288 = vmatpush2.msra.mxu0 0.0
    %3289 = vmatprep.subr.mxu0 0.0
    %3290 = vmatpush2.msra.mxu0 0.0
    %3291 = vmatprep.subr.mxu0 0.0
    %3292 = vmatpush2.msra.mxu0 0.0
    %3293 = vmatprep.subr.mxu0 0.0
    %3294 = vmatpush2.msra.mxu0 0.0
    %3295 = vmatprep.subr.mxu0 0.0
    %3296 = vmatpush2.msra.mxu0 0.0
    %3297 = vmatprep.subr.mxu0 0.0
    %3298 = vmatpush2.msra.mxu0 0.0
    %3299 = vmatprep.subr.mxu0 0.0
    %3300 = vmatpush2.msra.mxu0 0.0
    %3301 = vmatprep.subr.mxu0 0.0
    %3302 = vmatpush2.msra.mxu0 0.0
    %3303 = vmatprep.subr.mxu0 0.0
    %3304 = vmatpush2.msra.mxu0 0.0
    %3305 = vmatprep.mubr.f32.mxu0 0.0
    %3306 = vmatmul.mubr.f32.gmra.mxu0 %v3223
    %v3307 = vpop.f32.mrf.mxu0
    %v3308 = vadd.f32 0.0, %v3307
    %v3309 = vpop.f32.mrf.mxu0
    %3310 = vdwg.mxu0
    %v3311 = vadd.f32 %v3218, %v3308
    %v3312 = vrot.slane %v2584, 7
    %v3314 = vrot.slane %v2664, 6
    %v3316 = vsel %vm2668, %v3312, %v3314
    %s3317 = scalar_lea.vmem %s11, 896
    %v3318 = vld [vmem:[%s3317] sm:$0xff]
    %v3319 = vld [vmem:[%s3317 + $0x8] sm:$0xff]
    %v3320 = vld [vmem:[%s3317 + $0x10] sm:$0xff]
    %v3321 = vld [vmem:[%s3317 + $0x18] sm:$0xff]
    %v3322 = vld [vmem:[%s3317 + $0x20] sm:$0xff]
    %v3323 = vld [vmem:[%s3317 + $0x28] sm:$0xff]
    %v3324 = vld [vmem:[%s3317 + $0x30] sm:$0xff]
    %v3325 = vld [vmem:[%s3317 + $0x38] sm:$0xff]
    %v3326 = vld [vmem:[%s3317 + $0x40] sm:$0xff]
    %v3327 = vld [vmem:[%s3317 + $0x48] sm:$0xff]
    %v3328 = vld [vmem:[%s3317 + $0x50] sm:$0xff]
    %v3329 = vld [vmem:[%s3317 + $0x58] sm:$0xff]
    %v3330 = vld [vmem:[%s3317 + $0x60] sm:$0xff]
    %v3331 = vld [vmem:[%s3317 + $0x68] sm:$0xff]
    %v3332 = vld [vmem:[%s3317 + $0x70] sm:$0xff]
    %v3333 = vld [vmem:[%s3317 + $0x78] sm:$0xff]
    %3334 = vmatprep.subr.mxu0 0.0
    %3335 = vmatpush1.msra.mxu0 %v3333
    %3336 = vmatprep.subr.mxu0 0.0
    %3337 = vmatpush1.msra.mxu0 %v3332
    %3338 = vmatprep.subr.mxu0 0.0
    %3339 = vmatpush1.msra.mxu0 %v3331
    %3340 = vmatprep.subr.mxu0 0.0
    %3341 = vmatpush1.msra.mxu0 %v3330
    %3342 = vmatprep.subr.mxu0 0.0
    %3343 = vmatpush1.msra.mxu0 %v3329
    %3344 = vmatprep.subr.mxu0 0.0
    %3345 = vmatpush1.msra.mxu0 %v3328
    %3346 = vmatprep.subr.mxu0 0.0
    %3347 = vmatpush1.msra.mxu0 %v3327
    %3348 = vmatprep.subr.mxu0 0.0
    %3349 = vmatpush1.msra.mxu0 %v3326
    %3350 = vmatprep.subr.mxu0 0.0
    %3351 = vmatpush1.msra.mxu0 %v3325
    %3352 = vmatprep.subr.mxu0 0.0
    %3353 = vmatpush1.msra.mxu0 %v3324
    %3354 = vmatprep.subr.mxu0 0.0
    %3355 = vmatpush1.msra.mxu0 %v3323
    %3356 = vmatprep.subr.mxu0 0.0
    %3357 = vmatpush1.msra.mxu0 %v3322
    %3358 = vmatprep.subr.mxu0 0.0
    %3359 = vmatpush1.msra.mxu0 %v3321
    %3360 = vmatprep.subr.mxu0 0.0
    %3361 = vmatpush1.msra.mxu0 %v3320
    %3362 = vmatprep.subr.mxu0 0.0
    %3363 = vmatpush1.msra.mxu0 %v3319
    %3364 = vmatprep.subr.mxu0 0.0
    %3365 = vmatpush1.msra.mxu0 %v3318
    %3366 = vmatprep.subr.mxu0 0.0
    %3367 = vmatpush2.msra.mxu0 0.0
    %3368 = vmatprep.subr.mxu0 0.0
    %3369 = vmatpush2.msra.mxu0 0.0
    %3370 = vmatprep.subr.mxu0 0.0
    %3371 = vmatpush2.msra.mxu0 0.0
    %3372 = vmatprep.subr.mxu0 0.0
    %3373 = vmatpush2.msra.mxu0 0.0
    %3374 = vmatprep.subr.mxu0 0.0
    %3375 = vmatpush2.msra.mxu0 0.0
    %3376 = vmatprep.subr.mxu0 0.0
    %3377 = vmatpush2.msra.mxu0 0.0
    %3378 = vmatprep.subr.mxu0 0.0
    %3379 = vmatpush2.msra.mxu0 0.0
    %3380 = vmatprep.subr.mxu0 0.0
    %3381 = vmatpush2.msra.mxu0 0.0
    %3382 = vmatprep.subr.mxu0 0.0
    %3383 = vmatpush2.msra.mxu0 0.0
    %3384 = vmatprep.subr.mxu0 0.0
    %3385 = vmatpush2.msra.mxu0 0.0
    %3386 = vmatprep.subr.mxu0 0.0
    %3387 = vmatpush2.msra.mxu0 0.0
    %3388 = vmatprep.subr.mxu0 0.0
    %3389 = vmatpush2.msra.mxu0 0.0
    %3390 = vmatprep.subr.mxu0 0.0
    %3391 = vmatpush2.msra.mxu0 0.0
    %3392 = vmatprep.subr.mxu0 0.0
    %3393 = vmatpush2.msra.mxu0 0.0
    %3394 = vmatprep.subr.mxu0 0.0
    %3395 = vmatpush2.msra.mxu0 0.0
    %3396 = vmatprep.subr.mxu0 0.0
    %3397 = vmatpush2.msra.mxu0 0.0
    %3398 = vmatprep.mubr.f32.mxu0 0.0
    %3399 = vmatmul.mubr.f32.gmra.mxu0 %v3316
    %v3400 = vpop.f32.mrf.mxu0
    %v3401 = vadd.f32 0.0, %v3400
    %v3402 = vpop.f32.mrf.mxu0
    %3403 = vdwg.mxu0
    %v3404 = vadd.f32 %v3311, %v3401
    %v3405 = vld [vmem:[%s12] sm:$0x1]
    %v3407 = vlaneseq
    %v3408 = vshrl.u32 %v3407, 7
    %v3409 = vsub.s32 0, %v3408
    %v3410 = vrot.slane %v3405, %v3409
    %v3412 = vadd.f32 %v3404, %v3410
    %v3413 = vmax.f32 %v3412, 0.0
    %v3414 = vld [vmem:[%s15] sm:$0xff]
    %v3415 = vld [vmem:[%s15 + $0x8] sm:$0xff]
    %v3416 = vld [vmem:[%s15 + $0x10] sm:$0xff]
    %v3417 = vld [vmem:[%s15 + $0x18] sm:$0xff]
    %v3418 = vld [vmem:[%s16] sm:$0xff]
    %v3419 = vld [vmem:[%s16 + $0x8] sm:$0xff]
    %v3420 = vld [vmem:[%s16 + $0x10] sm:$0xff]
    %v3421 = vld [vmem:[%s16 + $0x18] sm:$0xff]
    %v3423 = vsel %vm173, %v3413, 0
    %3425 = vmatprep.subr.mxu0 0.0
    %3426 = vmatpush1.msra.mxu0 0.0
    %3427 = vmatprep.subr.mxu0 0.0
    %3428 = vmatpush1.msra.mxu0 0.0
    %3429 = vmatprep.subr.mxu0 0.0
    %3430 = vmatpush1.msra.mxu0 0.0
    %3431 = vmatprep.subr.mxu0 0.0
    %3432 = vmatpush1.msra.mxu0 0.0
    %3433 = vmatprep.subr.mxu0 0.0
    %3434 = vmatpush1.msra.mxu0 0.0
    %3435 = vmatprep.subr.mxu0 0.0
    %3436 = vmatpush1.msra.mxu0 0.0
    %3437 = vmatprep.subr.mxu0 0.0
    %3438 = vmatpush1.msra.mxu0 0.0
    %3439 = vmatprep.subr.mxu0 0.0
    %3440 = vmatpush1.msra.mxu0 0.0
    %3441 = vmatprep.subr.mxu0 0.0
    %3442 = vmatpush1.msra.mxu0 0.0
    %3443 = vmatprep.subr.mxu0 0.0
    %3444 = vmatpush1.msra.mxu0 0.0
    %3445 = vmatprep.subr.mxu0 0.0
    %3446 = vmatpush1.msra.mxu0 0.0
    %3447 = vmatprep.subr.mxu0 0.0
    %3448 = vmatpush1.msra.mxu0 0.0
    %3449 = vmatprep.subr.mxu0 0.0
    %3450 = vmatpush1.msra.mxu0 %v3421
    %3451 = vmatprep.subr.mxu0 0.0
    %3452 = vmatpush1.msra.mxu0 %v3420
    %3453 = vmatprep.subr.mxu0 0.0
    %3454 = vmatpush1.msra.mxu0 %v3419
    %3455 = vmatprep.subr.mxu0 0.0
    %3456 = vmatpush1.msra.mxu0 %v3418
    %3457 = vmatprep.subr.mxu0 0.0
    %3458 = vmatpush2.msra.mxu0 0.0
    %3459 = vmatprep.subr.mxu0 0.0
    %3460 = vmatpush2.msra.mxu0 0.0
    %3461 = vmatprep.subr.mxu0 0.0
    %3462 = vmatpush2.msra.mxu0 0.0
    %3463 = vmatprep.subr.mxu0 0.0
    %3464 = vmatpush2.msra.mxu0 0.0
    %3465 = vmatprep.subr.mxu0 0.0
    %3466 = vmatpush2.msra.mxu0 0.0
    %3467 = vmatprep.subr.mxu0 0.0
    %3468 = vmatpush2.msra.mxu0 0.0
    %3469 = vmatprep.subr.mxu0 0.0
    %3470 = vmatpush2.msra.mxu0 0.0
    %3471 = vmatprep.subr.mxu0 0.0
    %3472 = vmatpush2.msra.mxu0 0.0
    %3473 = vmatprep.subr.mxu0 0.0
    %3474 = vmatpush2.msra.mxu0 0.0
    %3475 = vmatprep.subr.mxu0 0.0
    %3476 = vmatpush2.msra.mxu0 0.0
    %3477 = vmatprep.subr.mxu0 0.0
    %3478 = vmatpush2.msra.mxu0 0.0
    %3479 = vmatprep.subr.mxu0 0.0
    %3480 = vmatpush2.msra.mxu0 0.0
    %3481 = vmatprep.subr.mxu0 0.0
    %3482 = vmatpush2.msra.mxu0 0.0
    %3483 = vmatprep.subr.mxu0 0.0
    %3484 = vmatpush2.msra.mxu0 0.0
    %3485 = vmatprep.subr.mxu0 0.0
    %3486 = vmatpush2.msra.mxu0 0.0
    %3487 = vmatprep.subr.mxu0 0.0
    %3488 = vmatpush2.msra.mxu0 0.0
    %3489 = vmatprep.mubr.f32.mxu0 0.0
    %3490 = vmatmul.mubr.f32.gmra.mxu0 %v3423
    %v3491 = vpop.f32.mrf.mxu0
    %v3492 = vadd.f32 0.0, %v3491
    %v3493 = vpop.f32.mrf.mxu0
    %3494 = vdwg.mxu0
    %v3496 = vrot.slane %v2409, 6
    %v3497 = vsel %vm173, %v3496, 0
    %3499 = vmatprep.subr.mxu0 0.0
    %3500 = vmatpush1.msra.mxu0 0.0
    %3501 = vmatprep.subr.mxu0 0.0
    %3502 = vmatpush1.msra.mxu0 0.0
    %3503 = vmatprep.subr.mxu0 0.0
    %3504 = vmatpush1.msra.mxu0 0.0
    %3505 = vmatprep.subr.mxu0 0.0
    %3506 = vmatpush1.msra.mxu0 0.0
    %3507 = vmatprep.subr.mxu0 0.0
    %3508 = vmatpush1.msra.mxu0 0.0
    %3509 = vmatprep.subr.mxu0 0.0
    %3510 = vmatpush1.msra.mxu0 0.0
    %3511 = vmatprep.subr.mxu0 0.0
    %3512 = vmatpush1.msra.mxu0 0.0
    %3513 = vmatprep.subr.mxu0 0.0
    %3514 = vmatpush1.msra.mxu0 0.0
    %3515 = vmatprep.subr.mxu0 0.0
    %3516 = vmatpush1.msra.mxu0 0.0
    %3517 = vmatprep.subr.mxu0 0.0
    %3518 = vmatpush1.msra.mxu0 0.0
    %3519 = vmatprep.subr.mxu0 0.0
    %3520 = vmatpush1.msra.mxu0 0.0
    %3521 = vmatprep.subr.mxu0 0.0
    %3522 = vmatpush1.msra.mxu0 0.0
    %3523 = vmatprep.subr.mxu0 0.0
    %3524 = vmatpush1.msra.mxu0 %v3417
    %3525 = vmatprep.subr.mxu0 0.0
    %3526 = vmatpush1.msra.mxu0 %v3416
    %3527 = vmatprep.subr.mxu0 0.0
    %3528 = vmatpush1.msra.mxu0 %v3415
    %3529 = vmatprep.subr.mxu0 0.0
    %3530 = vmatpush1.msra.mxu0 %v3414
    %3531 = vmatprep.subr.mxu0 0.0
    %3532 = vmatpush2.msra.mxu0 0.0
    %3533 = vmatprep.subr.mxu0 0.0
    %3534 = vmatpush2.msra.mxu0 0.0
    %3535 = vmatprep.subr.mxu0 0.0
    %3536 = vmatpush2.msra.mxu0 0.0
    %3537 = vmatprep.subr.mxu0 0.0
    %3538 = vmatpush2.msra.mxu0 0.0
    %3539 = vmatprep.subr.mxu0 0.0
    %3540 = vmatpush2.msra.mxu0 0.0
    %3541 = vmatprep.subr.mxu0 0.0
    %3542 = vmatpush2.msra.mxu0 0.0
    %3543 = vmatprep.subr.mxu0 0.0
    %3544 = vmatpush2.msra.mxu0 0.0
    %3545 = vmatprep.subr.mxu0 0.0
    %3546 = vmatpush2.msra.mxu0 0.0
    %3547 = vmatprep.subr.mxu0 0.0
    %3548 = vmatpush2.msra.mxu0 0.0
    %3549 = vmatprep.subr.mxu0 0.0
    %3550 = vmatpush2.msra.mxu0 0.0
    %3551 = vmatprep.subr.mxu0 0.0
    %3552 = vmatpush2.msra.mxu0 0.0
    %3553 = vmatprep.subr.mxu0 0.0
    %3554 = vmatpush2.msra.mxu0 0.0
    %3555 = vmatprep.subr.mxu0 0.0
    %3556 = vmatpush2.msra.mxu0 0.0
    %3557 = vmatprep.subr.mxu0 0.0
    %3558 = vmatpush2.msra.mxu0 0.0
    %3559 = vmatprep.subr.mxu0 0.0
    %3560 = vmatpush2.msra.mxu0 0.0
    %3561 = vmatprep.subr.mxu0 0.0
    %3562 = vmatpush2.msra.mxu0 0.0
    %3563 = vmatprep.mubr.f32.mxu0 0.0
    %3564 = vmatmul.mubr.f32.gmra.mxu0 %v3497
    %v3565 = vpop.f32.mrf.mxu0
    %v3566 = vadd.f32 %v3492, %v3565
    %v3567 = vpop.f32.mrf.mxu0
    %3568 = vdwg.mxu0
    %v3569 = vld [vmem:[%s17] sm:$0xff]
    %v3571 = vsel %vm2419, %v2493, 0
    %3573 = vmatprep.subr.mxu0 0.0
    %3574 = vmatpush1.msra.mxu0 0.0
    %3575 = vmatprep.subr.mxu0 0.0
    %3576 = vmatpush1.msra.mxu0 0.0
    %3577 = vmatprep.subr.mxu0 0.0
    %3578 = vmatpush1.msra.mxu0 0.0
    %3579 = vmatprep.subr.mxu0 0.0
    %3580 = vmatpush1.msra.mxu0 0.0
    %3581 = vmatprep.subr.mxu0 0.0
    %3582 = vmatpush1.msra.mxu0 0.0
    %3583 = vmatprep.subr.mxu0 0.0
    %3584 = vmatpush1.msra.mxu0 0.0
    %3585 = vmatprep.subr.mxu0 0.0
    %3586 = vmatpush1.msra.mxu0 0.0
    %3587 = vmatprep.subr.mxu0 0.0
    %3588 = vmatpush1.msra.mxu0 0.0
    %3589 = vmatprep.subr.mxu0 0.0
    %3590 = vmatpush1.msra.mxu0 0.0
    %3591 = vmatprep.subr.mxu0 0.0
    %3592 = vmatpush1.msra.mxu0 0.0
    %3593 = vmatprep.subr.mxu0 0.0
    %3594 = vmatpush1.msra.mxu0 0.0
    %3595 = vmatprep.subr.mxu0 0.0
    %3596 = vmatpush1.msra.mxu0 0.0
    %3597 = vmatprep.subr.mxu0 0.0
    %3598 = vmatpush1.msra.mxu0 0.0
    %3599 = vmatprep.subr.mxu0 0.0
    %3600 = vmatpush1.msra.mxu0 0.0
    %3601 = vmatprep.subr.mxu0 0.0
    %3602 = vmatpush1.msra.mxu0 0.0
    %3603 = vmatprep.subr.mxu0 0.0
    %3604 = vmatpush1.msra.mxu0 %v3569
    %3605 = vmatprep.subr.mxu0 0.0
    %3606 = vmatpush2.msra.mxu0 0.0
    %3607 = vmatprep.subr.mxu0 0.0
    %3608 = vmatpush2.msra.mxu0 0.0
    %3609 = vmatprep.subr.mxu0 0.0
    %3610 = vmatpush2.msra.mxu0 0.0
    %3611 = vmatprep.subr.mxu0 0.0
    %3612 = vmatpush2.msra.mxu0 0.0
    %3613 = vmatprep.subr.mxu0 0.0
    %3614 = vmatpush2.msra.mxu0 0.0
    %3615 = vmatprep.subr.mxu0 0.0
    %3616 = vmatpush2.msra.mxu0 0.0
    %3617 = vmatprep.subr.mxu0 0.0
    %3618 = vmatpush2.msra.mxu0 0.0
    %3619 = vmatprep.subr.mxu0 0.0
    %3620 = vmatpush2.msra.mxu0 0.0
    %3621 = vmatprep.subr.mxu0 0.0
    %3622 = vmatpush2.msra.mxu0 0.0
    %3623 = vmatprep.subr.mxu0 0.0
    %3624 = vmatpush2.msra.mxu0 0.0
    %3625 = vmatprep.subr.mxu0 0.0
    %3626 = vmatpush2.msra.mxu0 0.0
    %3627 = vmatprep.subr.mxu0 0.0
    %3628 = vmatpush2.msra.mxu0 0.0
    %3629 = vmatprep.subr.mxu0 0.0
    %3630 = vmatpush2.msra.mxu0 0.0
    %3631 = vmatprep.subr.mxu0 0.0
    %3632 = vmatpush2.msra.mxu0 0.0
    %3633 = vmatprep.subr.mxu0 0.0
    %3634 = vmatpush2.msra.mxu0 0.0
    %3635 = vmatprep.subr.mxu0 0.0
    %3636 = vmatpush2.msra.mxu0 0.0
    %3637 = vmatprep.mubr.f32.mxu0 0.0
    %3638 = vmatmul.mubr.f32.gmra.mxu0 %v3571
    %v3639 = vpop.f32.mrf.mxu0
    %v3640 = vadd.f32 0.0, %v3639
    %v3641 = vpop.f32.mrf.mxu0
    %3642 = vdwg.mxu0
    %v3643 = vadd.f32 %v3566, %v3640
    %v3644 = vld [vmem:[%s18] sm:$0x1]
    %v3646 = vlaneseq
    %v3647 = vshrl.u32 %v3646, 7
    %v3648 = vsub.s32 0, %v3647
    %v3649 = vrot.slane %v3644, %v3648
    %v3651 = vadd.f32 %v3643, %v3649
    %v3652 = vmax.f32 %v3651, 0.0
    %v3653 = vld [vmem:[%s19] sm:$0xff]
    %v3654 = vld [vmem:[%s19 + $0x8] sm:$0xff]
    %v3655 = vld [vmem:[%s19 + $0x10] sm:$0xff]
    %v3656 = vld [vmem:[%s19 + $0x18] sm:$0xff]
    %v3657 = vld [vmem:[%s20] sm:$0x1]
    %v3659 = vlaneseq
    %v3660 = vshrl.u32 %v3659, 7
    %v3661 = vsub.s32 0, %v3660
    %v3662 = vrot.slane %v3657, %v3661
    %v3665 = vsel %vm173, %v3652, 0
    %3667 = vmatprep.subr.mxu0 0.0
    %3668 = vmatpush1.msra.mxu0 0.0
    %3669 = vmatprep.subr.mxu0 0.0
    %3670 = vmatpush1.msra.mxu0 0.0
    %3671 = vmatprep.subr.mxu0 0.0
    %3672 = vmatpush1.msra.mxu0 0.0
    %3673 = vmatprep.subr.mxu0 0.0
    %3674 = vmatpush1.msra.mxu0 0.0
    %3675 = vmatprep.subr.mxu0 0.0
    %3676 = vmatpush1.msra.mxu0 0.0
    %3677 = vmatprep.subr.mxu0 0.0
    %3678 = vmatpush1.msra.mxu0 0.0
    %3679 = vmatprep.subr.mxu0 0.0
    %3680 = vmatpush1.msra.mxu0 0.0
    %3681 = vmatprep.subr.mxu0 0.0
    %3682 = vmatpush1.msra.mxu0 0.0
    %3683 = vmatprep.subr.mxu0 0.0
    %3684 = vmatpush1.msra.mxu0 0.0
    %3685 = vmatprep.subr.mxu0 0.0
    %3686 = vmatpush1.msra.mxu0 0.0
    %3687 = vmatprep.subr.mxu0 0.0
    %3688 = vmatpush1.msra.mxu0 0.0
    %3689 = vmatprep.subr.mxu0 0.0
    %3690 = vmatpush1.msra.mxu0 0.0
    %3691 = vmatprep.subr.mxu0 0.0
    %3692 = vmatpush1.msra.mxu0 %v3656
    %3693 = vmatprep.subr.mxu0 0.0
    %3694 = vmatpush1.msra.mxu0 %v3655
    %3695 = vmatprep.subr.mxu0 0.0
    %3696 = vmatpush1.msra.mxu0 %v3654
    %3697 = vmatprep.subr.mxu0 0.0
    %3698 = vmatpush1.msra.mxu0 %v3653
    %3699 = vmatprep.subr.mxu0 0.0
    %3700 = vmatpush2.msra.mxu0 0.0
    %3701 = vmatprep.subr.mxu0 0.0
    %3702 = vmatpush2.msra.mxu0 0.0
    %3703 = vmatprep.subr.mxu0 0.0
    %3704 = vmatpush2.msra.mxu0 0.0
    %3705 = vmatprep.subr.mxu0 0.0
    %3706 = vmatpush2.msra.mxu0 0.0
    %3707 = vmatprep.subr.mxu0 0.0
    %3708 = vmatpush2.msra.mxu0 0.0
    %3709 = vmatprep.subr.mxu0 0.0
    %3710 = vmatpush2.msra.mxu0 0.0
    %3711 = vmatprep.subr.mxu0 0.0
    %3712 = vmatpush2.msra.mxu0 0.0
    %3713 = vmatprep.subr.mxu0 0.0
    %3714 = vmatpush2.msra.mxu0 0.0
    %3715 = vmatprep.subr.mxu0 0.0
    %3716 = vmatpush2.msra.mxu0 0.0
    %3717 = vmatprep.subr.mxu0 0.0
    %3718 = vmatpush2.msra.mxu0 0.0
    %3719 = vmatprep.subr.mxu0 0.0
    %3720 = vmatpush2.msra.mxu0 0.0
    %3721 = vmatprep.subr.mxu0 0.0
    %3722 = vmatpush2.msra.mxu0 0.0
    %3723 = vmatprep.subr.mxu0 0.0
    %3724 = vmatpush2.msra.mxu0 0.0
    %3725 = vmatprep.subr.mxu0 0.0
    %3726 = vmatpush2.msra.mxu0 0.0
    %3727 = vmatprep.subr.mxu0 0.0
    %3728 = vmatpush2.msra.mxu0 0.0
    %3729 = vmatprep.subr.mxu0 0.0
    %3730 = vmatpush2.msra.mxu0 0.0
    %3731 = vmatprep.mubr.f32.mxu0 0.0
    %3732 = vmatmul.mubr.f32.gmra.mxu0 %v3665
    %v3733 = vpop.f32.mrf.mxu0
    %v3734 = vadd.f32 %v3662, %v3733
    %v3735 = vpop.f32.mrf.mxu0
    %3736 = vdwg.mxu0
    %vm3737 = vcmask 25600
    %3738 = vst.msk [vmem:[#allocation2] sm:$0x3] %vm3737, %v3734
    // Predicated region
    $region86: #{dqn_seq_net_forward.1} parent=1 // pred_check
      _
    $region87: #{dqn_seq_net_forward.1} parent=1 // pred_check_branch
      %3740 = sbr.rel (0) target = $region89
    $region88: #{dqn_seq_net_forward.1} parent=1 // pred_region
      %s3742 = ssub.s32 32, 32
      %3743 = vsyncadd [#allocation3], %s3742
      %s3745 = sshll.u32 [#allocation2], 4
      %s3746 = int_to_ptr.vmem [resolvable:$true] %s3745
      %3748 = dma.vmem_to_hbm [thread:$0]  %s3746, 32, %s21, [#allocation3]
    $region89: #{dqn_seq_net_forward.1} parent=1 // pred_fallthru
      _
    // Predicated region
    $region90: #{dqn_seq_net_forward.1} parent=1 // pred_check
      _
    $region91: #{dqn_seq_net_forward.1} parent=1 // pred_check_branch
      %3750 = sbr.rel (0) target = $region93
    $region92: #{dqn_seq_net_forward.1} parent=1 // pred_region
      %3751 = dma.done [#allocation3], 32
    $region93: #{dqn_seq_net_forward.1} parent=1 // pred_fallthru
      _
    %3752 = vsyncpa [#allocation3], 1

</llo_original>
